<compile_context>
chip_gen: v6e
topology: v6e:2x2x1
jax: 0.10.0
libtpu: 0.0.40
codegen_flags: <defaults>
</compile_context>

<pallas_src>
import functools

import jax
import jax.numpy as jnp
from jax.experimental import pallas as pl
from jax.experimental.pallas import tpu as pltpu

EPS = 1e-5
LANE = 128                      # TPU lane width: channel / contraction axes padded to this
VMEM_LIMIT = 32 * 1024 * 1024   # tight, generation-safe scoped-VMEM cap (v7x has 64 MiB/TC)
ACC_ROWS = 256                  # max rows of a live f32 accumulator at 128 lanes (32 vregs)


def _round_up(n, m):
    return pl.cdiv(n, m) * m


def _cout_tile(coutp):
    # 256-wide output tiles keep the 2x256x256 MXUs on v6e/v7x full; 128 is the only
    # option when CoutP == 128 and already matches v5e's 4x128x128 MXUs.
    return 256 if coutp % 256 == 0 else LANE


# --------------------------------------------------------------------------------------
# Kernel 1: direct KxK conv (tap accumulation in vregs), optional fused input
# bn-affine + ReLU (previous layer's training-mode BN), optional per-program BN partials.
# --------------------------------------------------------------------------------------
def _make_taps_conv_kernel(kh, kw, stride, ho, wo, with_in_affine, with_stats,
                           rows_per_chunk):
    def kernel(*refs):
        it = iter(refs)
        x_ref = next(it)
        w_ref = next(it)
        sc_ref = next(it) if with_in_affine else None
        sh_ref = next(it) if with_in_affine else None
        mask_ref = next(it) if with_in_affine else None
        y_ref = next(it)
        sum_ref = next(it) if with_stats else None
        ssq_ref = next(it) if with_stats else None

        xv = x_ref[0]                                    # (Hp, Wp, CinP)
        cinp = xv.shape[-1]
        if with_in_affine:
            # Fused previous-layer BN-affine + ReLU on the conv input (f32), then re-zero
            # the spatial halo (zero padding must logically happen AFTER bn+relu).
            a = jnp.maximum(xv.astype(jnp.float32) * sc_ref[...] + sh_ref[...], 0.0)
            xv = (a * mask_ref[0]).astype(x_ref.dtype)

        s_tot = None
        ss_tot = None
        for r0 in range(0, ho, rows_per_chunk):          # static output-row chunks
            rc = min(rows_per_chunk, ho - r0)
            acc = None                                   # vreg accumulator (<= 32 vregs)
            for t in range(kh * kw):                     # static unrolled tap loop
                dy, dx = t // kw, t % kw
                h0 = dy + r0 * stride
                # TODO(synk): strided / offset window slices may relayout; align Wp or use
                # pltpu.roll if the bundle dump shows copies dominating the tap matmuls.
                win = xv[h0:h0 + (rc - 1) * stride + 1:stride,
                         dx:dx + (wo - 1) * stride + 1:stride, :]
                contrib = jnp.dot(win.reshape(rc * wo, cinp), w_ref[t],
                                  preferred_element_type=jnp.float32)
                acc = contrib if acc is None else acc + contrib
            if rc == ho:
                y_ref[0] = acc.astype(y_ref.dtype)
            else:
                y_ref[0, r0 * wo:(r0 + rc) * wo, :] = acc.astype(y_ref.dtype)
            if with_stats:
                s = jnp.sum(acc, axis=0, keepdims=True)
                ss = jnp.sum(acc * acc, axis=0, keepdims=True)
                s_tot = s if s_tot is None else s_tot + s
                ss_tot = ss if ss_tot is None else ss_tot + ss
        if with_stats:
            sum_ref[0] = s_tot
            ssq_ref[0] = ss_tot
    return kernel


def conv_taps(x_nhwc, w, *, stride=1, pad=0, in_scale=None, in_shift=None,
              with_stats=False, compute_dtype=jnp.bfloat16, out_dtype=None):
    """Direct KxK conv over a channel-padded NHWC image.
    x: (N,H,W,CinP), w: (kh,kw,CinP,CoutP); CinP, CoutP multiples of 128.
    Optionally fuses relu(in_scale*x + in_shift) (previous training-mode BN) on the input.
    Returns y: (N, Ho*Wo, CoutP) plus per-channel sum / sum-of-squares if with_stats."""
    N, H, W, CinP = x_nhwc.shape
    kh, kw, _, CoutP = w.shape
    out_dtype = compute_dtype if out_dtype is None else out_dtype
    with_aff = in_scale is not None

    if pad:
        x_nhwc = jnp.pad(x_nhwc, ((0, 0), (pad, pad), (pad, pad), (0, 0)))
    Hp, Wp = H + 2 * pad, W + 2 * pad
    Ho = (Hp - kh) // stride + 1
    Wo = (Wp - kw) // stride + 1

    xk = x_nhwc.astype(compute_dtype)
    wk = w.reshape(kh * kw, CinP, CoutP).astype(compute_dtype)
    ct = _cout_tile(CoutP)
    rows_per_chunk = max(1, (ACC_ROWS * LANE // ct) // Wo)
    kernel = _make_taps_conv_kernel(kh, kw, stride, Ho, Wo, with_aff, with_stats,
                                    rows_per_chunk)

    # grid = (Cout tiles, images), images innermost: the weight tile (and sc/sh/mask)
    # stays VMEM-resident across images -> no redundant weight DMA.
    in_specs = [pl.BlockSpec((1, Hp, Wp, CinP), lambda j, n: (n, 0, 0, 0)),
                pl.BlockSpec((kh * kw, CinP, ct), lambda j, n: (0, 0, j))]
    args = [xk, wk]
    if with_aff:
        if pad:
            halo = jnp.zeros((Hp, Wp), jnp.float32).at[pad:Hp - pad, pad:Wp - pad].set(1.0)
        else:
            halo = jnp.ones((Hp, Wp), jnp.float32)
        in_specs += [pl.BlockSpec((1, CinP), lambda j, n: (0, 0)),
                     pl.BlockSpec((1, CinP), lambda j, n: (0, 0)),
                     pl.BlockSpec((1, Hp, Wp, 1), lambda j, n: (0, 0, 0, 0))]
        args += [in_scale.reshape(1, CinP).astype(jnp.float32),
                 in_shift.reshape(1, CinP).astype(jnp.float32),
                 halo.reshape(1, Hp, Wp, 1)]

    out_shape = [jax.ShapeDtypeStruct((N, Ho * Wo, CoutP), out_dtype)]
    out_specs = [pl.BlockSpec((1, Ho * Wo, ct), lambda j, n: (n, 0, j))]
    if with_stats:
        out_shape += [jax.ShapeDtypeStruct((N, 1, CoutP), jnp.float32)] * 2
        out_specs += [pl.BlockSpec((1, 1, ct), lambda j, n: (n, 0, j))] * 2

    res = pl.pallas_call(
        kernel,
        out_shape=tuple(out_shape),
        grid=(CoutP // ct, N),
        in_specs=in_specs,
        out_specs=tuple(out_specs),
        compiler_params=pltpu.CompilerParams(
            dimension_semantics=("parallel", "parallel"),
            vmem_limit_bytes=VMEM_LIMIT),
    )(*args)
    if with_stats:
        y, s, ss = res
        return y, jnp.sum(s, axis=(0, 1)), jnp.sum(ss, axis=(0, 1))
    return res[0]


# --------------------------------------------------------------------------------------
# Kernel 2: conv with taps folded into the contraction dim (single MXU pass per Cout
# tile).  Used when kh*kw*Cin <= 128 (small real channel counts) for conv1.
# --------------------------------------------------------------------------------------
def _make_matmul_conv_kernel(with_stats):
    def kernel(*refs):
        it = iter(refs)
        p_ref, w_ref, y_ref = next(it), next(it), next(it)
        sum_ref = next(it) if with_stats else None
        ssq_ref = next(it) if with_stats else None
        acc = jnp.dot(p_ref[0], w_ref[...], preferred_element_type=jnp.float32)
        y_ref[0] = acc.astype(y_ref.dtype)
        if with_stats:
            sum_ref[0] = jnp.sum(acc, axis=0, keepdims=True)
            ssq_ref[0] = jnp.sum(acc * acc, axis=0, keepdims=True)
    return kernel


def conv_im2col(x_nhwc, w, *, stride=1, pad=0, with_stats=False,
                compute_dtype=jnp.bfloat16, out_dtype=None):
    """KxK conv as one matmul per Cout tile.  x: (N,H,W,Cin) with real (unpadded) Cin;
    w: (kh,kw,Cin,CoutP) with CoutP % 128 == 0.  Intended for kh*kw*Cin <= 128: the
    lane-padded patch tensor is no larger than a 128-channel-padded image."""
    N, H, W, Cin = x_nhwc.shape
    kh, kw, _, CoutP = w.shape
    out_dtype = compute_dtype if out_dtype is None else out_dtype
    if pad:
        x_nhwc = jnp.pad(x_nhwc, ((0, 0), (pad, pad), (pad, pad), (0, 0)))
    Hp, Wp = H + 2 * pad, W + 2 * pad
    Ho = (Hp - kh) // stride + 1
    Wo = (Wp - kw) // stride + 1
    K = kh * kw * Cin
    Kp = _round_up(K, LANE)

    # TODO(synk): move patch construction into the kernel (VMEM im2col) once narrow-lane
    # minor-dim concatenation is verified in Mosaic on all generations.
    taps = [x_nhwc[:, dy:dy + (Ho - 1) * stride + 1:stride,
                   dx:dx + (Wo - 1) * stride + 1:stride, :]
            for dy in range(kh) for dx in range(kw)]
    patches = jnp.concatenate(taps, axis=-1).reshape(N, Ho * Wo, K)
    patches = jnp.pad(patches, ((0, 0), (0, 0), (0, Kp - K))).astype(compute_dtype)
    wk = jnp.pad(w.reshape(K, CoutP), ((0, Kp - K), (0, 0))).astype(compute_dtype)

    ct = _cout_tile(CoutP)
    kernel = _make_matmul_conv_kernel(with_stats)

    in_specs = [pl.BlockSpec((1, Ho * Wo, Kp), lambda j, n: (n, 0, 0)),
                pl.BlockSpec((Kp, ct), lambda j, n: (0, j))]
    out_shape = [jax.ShapeDtypeStruct((N, Ho * Wo, CoutP), out_dtype)]
    out_specs = [pl.BlockSpec((1, Ho * Wo, ct), lambda j, n: (n, 0, j))]
    if with_stats:
        out_shape += [jax.ShapeDtypeStruct((N, 1, CoutP), jnp.float32)] * 2
        out_specs += [pl.BlockSpec((1, 1, ct), lambda j, n: (n, 0, j))] * 2

    res = pl.pallas_call(
        kernel,
        out_shape=tuple(out_shape),
        grid=(CoutP // ct, N),
        in_specs=in_specs,
        out_specs=tuple(out_specs),
        compiler_params=pltpu.CompilerParams(
            dimension_semantics=("parallel", "parallel"),
            vmem_limit_bytes=VMEM_LIMIT),
    )(patches, wk)
    if with_stats:
        y, s, ss = res
        return y, jnp.sum(s, axis=(0, 1)), jnp.sum(ss, axis=(0, 1))
    return res[0]


# --------------------------------------------------------------------------------------
# Kernel 3: fused bn2-affine + (1x1 projection conv | identity) skip + add + ReLU.
# --------------------------------------------------------------------------------------
def _make_output_kernel(projection):
    if projection:
        def kernel(y_ref, sc_ref, sh_ref, xs_ref, w3_ref, b3_ref, o_ref):
            skip = jnp.dot(xs_ref[...], w3_ref[...],
                           preferred_element_type=jnp.float32) + b3_ref[...]
            v = y_ref[...].astype(jnp.float32) * sc_ref[...] + sh_ref[...] + skip
            o_ref[...] = jnp.maximum(v, 0.0).astype(o_ref.dtype)
    else:
        def kernel(y_ref, sc_ref, sh_ref, xs_ref, o_ref):
            v = (y_ref[...].astype(jnp.float32) * sc_ref[...] + sh_ref[...]
                 + xs_ref[...].astype(jnp.float32))
            o_ref[...] = jnp.maximum(v, 0.0).astype(o_ref.dtype)
    return kernel


def _pick_row_tile(rows):
    # Biggest tile (better HBM roofline, fewer per-step overheads) that still leaves
    # >= 2 grid steps so both v7x TensorCores get work.
    for t in (2048, 1024, 512, 256, 128, 64, 32, 16, 8):
        if rows % t == 0 and rows // t >= 2:
            return t
    return rows


def bn_residual_out(y2, scale, shift, skip_x, w3=None, b3=None, out_dtype=jnp.float32):
    """y2: (R, C) conv2 output; scale/shift: (C,) f32; skip_x: (R, Cin') rows of X
    (identity: added directly; projection: multiplied by w3 (Cin',C) plus b3 in-kernel)."""
    R, C = y2.shape
    tile = _pick_row_tile(R)
    projection = w3 is not None
    kernel = _make_output_kernel(projection)
    in_specs = [pl.BlockSpec((tile, C), lambda i: (i, 0)),
                pl.BlockSpec((1, C), lambda i: (0, 0)),
                pl.BlockSpec((1, C), lambda i: (0, 0)),
                pl.BlockSpec((tile, skip_x.shape[1]), lambda i: (i, 0))]
    args = [y2, scale.reshape(1, C), shift.reshape(1, C), skip_x]
    if projection:
        in_specs += [pl.BlockSpec(w3.shape, lambda i: (0, 0)),
                     pl.BlockSpec((1, C), lambda i: (0, 0))]
        args += [w3, b3.reshape(1, C)]
    return pl.pallas_call(
        kernel,
        out_shape=jax.ShapeDtypeStruct((R, C), out_dtype),
        grid=(R // tile,),
        in_specs=in_specs,
        out_specs=pl.BlockSpec((tile, C), lambda i: (i, 0)),
        compiler_params=pltpu.CompilerParams(
            dimension_semantics=("parallel",),
            vmem_limit_bytes=VMEM_LIMIT),
    )(*args)


# --------------------------------------------------------------------------------------
# JAX glue: BN scale/shift from accumulated stats, channel padding, full forward pass.
# --------------------------------------------------------------------------------------
def bn_scale_shift(s, ss, count, gamma, beta, eps=EPS):
    # TODO(synk): one-pass E[y^2]-E[y]^2 can cancel catastrophically for large-mean
    # activations; switch to a centered / Welford reduction for production shapes.
    mean = s / count
    var = ss / count - mean * mean
    scale = gamma.reshape(-1) * jax.lax.rsqrt(var + eps)
    shift = beta.reshape(-1) - mean * scale
    return scale, shift


def residual_forward(x_nchw, params, use_1x1conv, stride, compute_dtype=jnp.bfloat16):
    x = jnp.transpose(x_nchw, (0, 2, 3, 1)).astype(jnp.float32)   # NCHW -> NHWC
    N, H, W, Cin = x.shape
    Cout = params["w1"].shape[-1]
    CinP = _round_up(Cin, LANE)
    CoutP = _round_up(Cout, LANE)

    if not use_1x1conv:
        if Cin != Cout:
            raise ValueError("identity skip requires in_channels == out_channels")
        if stride != 1:
            raise ValueError("identity skip requires stride == 1 (PyTorch would fail at Y + X)")

    # Lane-dense parameter padding; padded channels stay exactly zero end-to-end because
    # their weights, gamma and beta are zero-padded too.
    w1p = jnp.pad(params["w1"], ((0, 0), (0, 0), (0, 0), (0, CoutP - Cout)))  # real Cin kept
    w2p = jnp.pad(params["w2"], ((0, 0), (0, 0), (0, CoutP - Cout), (0, CoutP - Cout)))
    g1p = jnp.pad(params["g1"].reshape(-1), (0, CoutP - Cout))
    be1p = jnp.pad(params["be1"].reshape(-1), (0, CoutP - Cout))
    g2p = jnp.pad(params["g2"].reshape(-1), (0, CoutP - Cout))
    be2p = jnp.pad(params["be2"].reshape(-1), (0, CoutP - Cout))

    Ho = (H + 2 - 3) // stride + 1
    Wo = (W + 2 - 3) // stride + 1
    R = N * Ho * Wo

    # --- conv1 (3x3, pad 1, stride) + BN batch-stat partials ---------------------------
    if 9 * Cin <= LANE:
        # Small-Cin: all 9 taps folded into one K=128 contraction (single MXU pass/tile).
        y1, s1, ss1 = conv_im2col(x, w1p, stride=stride, pad=1, with_stats=True,
                                  compute_dtype=compute_dtype)
    else:
        x_cp = jnp.pad(x, ((0, 0), (0, 0), (0, 0), (0, CinP - Cin)))
        w1pp = jnp.pad(w1p, ((0, 0), (0, 0), (0, CinP - Cin), (0, 0)))
        y1, s1, ss1 = conv_taps(x_cp, w1pp, stride=stride, pad=1, with_stats=True,
                                compute_dtype=compute_dtype)
    sc1, sh1 = bn_scale_shift(s1, ss1, R, g1p, be1p)

    # --- conv2 (3x3, pad 1, stride 1) with bn1-affine + ReLU fused on its input --------
    # a1 = relu(bn1(y1)) never materializes in HBM.
    y2, s2, ss2 = conv_taps(y1.reshape(N, Ho, Wo, CoutP), w2p, stride=1, pad=1,
                            in_scale=sc1, in_shift=sh1, with_stats=True,
                            compute_dtype=compute_dtype)
    sc2, sh2 = bn_scale_shift(s2, ss2, R, g2p, be2p)

    # --- fused bn2-affine + skip (1x1 conv or identity) + add + ReLU -------------------
    if use_1x1conv:
        xs = x[:, ::stride, ::stride, :]                              # (N, Ho, Wo, Cin)
        xs = jnp.pad(xs, ((0, 0), (0, 0), (0, 0), (0, CinP - Cin)))
        xs = xs.reshape(R, CinP).astype(compute_dtype)
        w3p = jnp.pad(params["w3"][0, 0], ((0, CinP - Cin), (0, CoutP - Cout)))
        b3p = jnp.pad(params["b3"].reshape(-1), (0, CoutP - Cout))
        out = bn_residual_out(y2.reshape(R, CoutP), sc2, sh2, xs,
                              w3=w3p.astype(compute_dtype), b3=b3p)
    else:
        xs = jnp.pad(x, ((0, 0), (0, 0), (0, 0), (0, CoutP - Cout))).reshape(R, CoutP)
        out = bn_residual_out(y2.reshape(R, CoutP), sc2, sh2, xs)

    out = out.reshape(N, Ho, Wo, CoutP)[:, :, :, :Cout]
    return jnp.transpose(out, (0, 3, 1, 2))              # NHWC -> NCHW


# --------------------------------------------------------------------------------------
# Pure-JAX reference (PyTorch semantics, f32) and parameter init.
# --------------------------------------------------------------------------------------
def ref_forward(x_nchw, params, use_1x1conv, stride, eps=EPS):
    x = jnp.transpose(x_nchw, (0, 2, 3, 1)).astype(jnp.float32)

    def conv(xi, w, b, st, pad):
        y = jax.lax.conv_general_dilated(
            xi, w, (st, st), [(pad, pad), (pad, pad)],
            dimension_numbers=("NHWC", "HWIO", "NHWC"))
        return y + b.reshape(1, 1, 1, -1)

    def bn(y, g, be):
        m = jnp.mean(y, axis=(0, 1, 2))
        v = jnp.mean((y - m) ** 2, axis=(0, 1, 2))
        return (y - m) * jax.lax.rsqrt(v + eps) * g.reshape(-1) + be.reshape(-1)

    y = jax.nn.relu(bn(conv(x, params["w1"], params["b1"], stride, 1), params["g1"], params["be1"]))
    y = bn(conv(y, params["w2"], params["b2"], 1, 1), params["g2"], params["be2"])
    xs = conv(x, params["w3"], params["b3"], stride, 0) if use_1x1conv else x
    out = jax.nn.relu(y + xs)
    return jnp.transpose(out, (0, 3, 1, 2))


def init_params(key, cin, cout, use_1x1conv):
    ks = jax.random.split(key, 6)
    params = {
        "w1": 0.1 * jax.random.normal(ks[0], (3, 3, cin, cout), jnp.float32),
        "b1": 0.1 * jax.random.normal(ks[1], (1, cout), jnp.float32),
        "w2": 0.1 * jax.random.normal(ks[2], (3, 3, cout, cout), jnp.float32),
        "b2": 0.1 * jax.random.normal(ks[3], (1, cout), jnp.float32),
        "g1": jnp.ones((1, cout), jnp.float32),
        "be1": jnp.zeros((1, cout), jnp.float32),
        "g2": jnp.ones((1, cout), jnp.float32),
        "be2": jnp.zeros((1, cout), jnp.float32),
    }
    if use_1x1conv:
        params["w3"] = 0.1 * jax.random.normal(ks[4], (1, 1, cin, cout), jnp.float32)
        params["b3"] = 0.1 * jax.random.normal(ks[5], (1, cout), jnp.float32)
    return params


if __name__ == "__main__":
    key = jax.random.PRNGKey(0)
    k_x, k_p1, k_p2 = jax.random.split(key, 3)

    # Config 1: projection skip (use_1x1conv=True), 4 -> 8 channels, stride 1.
    x = jax.random.normal(k_x, (2, 4, 16, 16), jnp.float32)       # NCHW like PyTorch
    params = init_params(k_p1, 4, 8, use_1x1conv=True)
    ref = ref_forward(x, params, use_1x1conv=True, stride=1)

    # (a) f32 MXU operands: validates the fused kernel structure exactly vs the reference.
    fwd_f32 = jax.jit(functools.partial(residual_forward, use_1x1conv=True, stride=1,
                                        compute_dtype=jnp.float32))
    out_f32 = fwd_f32(x, params)
    jax.block_until_ready(out_f32)
    assert out_f32.shape == (2, 8, 16, 16)
    assert jnp.allclose(out_f32, ref, atol=1e-3, rtol=1e-3), "mismatch vs reference (f32 path)"

    # (b) bf16 MXU operands (default / fast path): looser tolerance for bf16 operand and
    #     intermediate rounding propagated through two convolutions.
    fwd_bf16 = jax.jit(functools.partial(residual_forward, use_1x1conv=True, stride=1))
    out_bf16 = fwd_bf16(x, params)
    jax.block_until_ready(out_bf16)
    assert jnp.allclose(out_bf16, ref, atol=3e-2, rtol=3e-2), "mismatch vs reference (bf16 path)"

    # Config 2: identity skip (use_1x1conv=False), 4 -> 4 channels, stride 1 (bf16 path).
    params2 = init_params(k_p2, 4, 4, use_1x1conv=False)
    fwd2 = jax.jit(functools.partial(residual_forward, use_1x1conv=False, stride=1))
    out2 = fwd2(x, params2)
    jax.block_until_ready(out2)
    ref2 = ref_forward(x, params2, use_1x1conv=False, stride=1)
    assert out2.shape == (2, 4, 16, 16)
    assert jnp.allclose(out2, ref2, atol=3e-2, rtol=3e-2), "mismatch vs reference (identity path)"

    # Config 3: projection skip with stride 2 (downsampling block), bf16 path.
    fwd3 = jax.jit(functools.partial(residual_forward, use_1x1conv=True, stride=2))
    out3 = fwd3(x, params)
    jax.block_until_ready(out3)
    ref3 = ref_forward(x, params, use_1x1conv=True, stride=2)
    assert out3.shape == (2, 8, 8, 8)
    assert jnp.allclose(out3, ref3, atol=3e-2, rtol=3e-2), "mismatch vs reference (stride-2 path)"

    print("KERNEL_OK")
</pallas_src>

<mosaic_0001>
module attributes {stable_mosaic.version = 11 : i64} {
  func.func @kernel(%arg0: i32, %arg1: i32, %arg2: memref<1x256x128xf32, #tpu.memory_space<vmem>>, %arg3: memref<128x128xf32, #tpu.memory_space<vmem>>, %arg4: memref<1x256x128xf32, #tpu.memory_space<vmem>>, %arg5: memref<1x1x128xf32, #tpu.memory_space<vmem>>, %arg6: memref<1x1x128xf32, #tpu.memory_space<vmem>>) attributes {dimension_semantics = [#tpu.dimension_semantics<parallel>, #tpu.dimension_semantics<parallel>], iteration_bounds = array<i64: 1, 2>, scalar_prefetch = 0 : i64, scratch_operands = 0 : i64, tpu.core_type = #tpu.core_type<tc>, window_params = [{transform_indices = @transform_0, window_bounds = array<i64: 1, 256, 128>}, {transform_indices = @transform_1, window_bounds = array<i64: 128, 128>}, {transform_indices = @transform_2, window_bounds = array<i64: 1, 256, 128>}, {transform_indices = @transform_3, window_bounds = array<i64: 1, 1, 128>}, {transform_indices = @transform_4, window_bounds = array<i64: 1, 1, 128>}]} {
    %c0 = arith.constant 0 : index
    %c0_0 = arith.constant 0 : index
    %c0_1 = arith.constant 0 : index
    %0 = vector.load %arg2[%c0, %c0_0, %c0_1] : memref<1x256x128xf32, #tpu.memory_space<vmem>>, vector<1x256x128xf32>
    %1 = vector.shape_cast %0 : vector<1x256x128xf32> to vector<256x128xf32>
    %c0_2 = arith.constant 0 : index
    %c0_3 = arith.constant 0 : index
    %2 = vector.load %arg3[%c0_2, %c0_3] : memref<128x128xf32, #tpu.memory_space<vmem>>, vector<128x128xf32>
    %cst = arith.constant dense<0.000000e+00> : vector<256x128xf32>
    %3 = tpu.matmul %1, %2, %cst {dimension_numbers = #tpu.dot_dimension_numbers<[1], [0], [0], [1], [0, 0, 1, 1], [], []>} : vector<256x128xf32>, vector<128x128xf32>, vector<256x128xf32> -> vector<256x128xf32>
    %c0_4 = arith.constant 0 : index
    %c0_5 = arith.constant 0 : index
    %c0_6 = arith.constant 0 : index
    %4 = vector.load %arg4[%c0_4, %c0_5, %c0_6] : memref<1x256x128xf32, #tpu.memory_space<vmem>>, vector<1x256x128xf32>
    %5 = vector.shape_cast %4 : vector<1x256x128xf32> to vector<256x128xf32>
    %6 = vector.shape_cast %3 : vector<256x128xf32> to vector<1x256x128xf32>
    tpu.vector_store %arg4[%c0_4, %c0_5, %c0_6], %6 {strides = array<i32>} : memref<1x256x128xf32, #tpu.memory_space<vmem>>, vector<1x256x128xf32>,
    %cst_7 = arith.constant dense<0.000000e+00> : vector<128xf32>
    %7 = vector.multi_reduction <add>, %3, %cst_7 [0] : vector<256x128xf32> to vector<128xf32>
    %8 = vector.shape_cast %7 : vector<128xf32> to vector<1x128xf32>
    %c0_8 = arith.constant 0 : index
    %c0_9 = arith.constant 0 : index
    %c0_10 = arith.constant 0 : index
    %9 = vector.load %arg5[%c0_8, %c0_9, %c0_10] : memref<1x1x128xf32, #tpu.memory_space<vmem>>, vector<1x1x128xf32>
    %10 = vector.shape_cast %9 : vector<1x1x128xf32> to vector<1x128xf32>
    %11 = vector.shape_cast %8 : vector<1x128xf32> to vector<1x1x128xf32>
    tpu.vector_store %arg5[%c0_8, %c0_9, %c0_10], %11 {strides = array<i32>} : memref<1x1x128xf32, #tpu.memory_space<vmem>>, vector<1x1x128xf32>,
    %12 = arith.mulf %3, %3 : vector<256x128xf32>
    %cst_11 = arith.constant dense<0.000000e+00> : vector<128xf32>
    %13 = vector.multi_reduction <add>, %12, %cst_11 [0] : vector<256x128xf32> to vector<128xf32>
    %14 = vector.shape_cast %13 : vector<128xf32> to vector<1x128xf32>
    %c0_12 = arith.constant 0 : index
    %c0_13 = arith.constant 0 : index
    %c0_14 = arith.constant 0 : index
    %15 = vector.load %arg6[%c0_12, %c0_13, %c0_14] : memref<1x1x128xf32, #tpu.memory_space<vmem>>, vector<1x1x128xf32>
    %16 = vector.shape_cast %15 : vector<1x1x128xf32> to vector<1x128xf32>
    %17 = vector.shape_cast %14 : vector<1x128xf32> to vector<1x1x128xf32>
    tpu.vector_store %arg6[%c0_12, %c0_13, %c0_14], %17 {strides = array<i32>} : memref<1x1x128xf32, #tpu.memory_space<vmem>>, vector<1x1x128xf32>,
    return
  }
  func.func @transform_0(%arg0: i32, %arg1: i32) -> (i32, i32, i32) {
    %c0_i32 = arith.constant 0 : i32
    %c0_i32_0 = arith.constant 0 : i32
    %c0_i32_1 = arith.constant 0 : i32
    return %arg1, %c0_i32, %c0_i32_0 : i32, i32, i32
  }
  func.func @transform_1(%arg0: i32, %arg1: i32) -> (i32, i32) {
    %c0_i32 = arith.constant 0 : i32
    %c0_i32_0 = arith.constant 0 : i32
    return %c0_i32, %arg0 : i32, i32
  }
  func.func @transform_2(%arg0: i32, %arg1: i32) -> (i32, i32, i32) {
    %c0_i32 = arith.constant 0 : i32
    %c0_i32_0 = arith.constant 0 : i32
    return %arg1, %c0_i32, %arg0 : i32, i32, i32
  }
  func.func @transform_3(%arg0: i32, %arg1: i32) -> (i32, i32, i32) {
    %c0_i32 = arith.constant 0 : i32
    %c0_i32_0 = arith.constant 0 : i32
    return %arg1, %c0_i32, %arg0 : i32, i32, i32
  }
  func.func @transform_4(%arg0: i32, %arg1: i32) -> (i32, i32, i32) {
    %c0_i32 = arith.constant 0 : i32
    %c0_i32_0 = arith.constant 0 : i32
    return %arg1, %c0_i32, %arg0 : i32, i32, i32
  }
}

module attributes {stable_mosaic.version = 11 : i64} {
  func.func @kernel(%arg0: i32, %arg1: i32, %arg2: memref<1x18x18x128xf32, #tpu.memory_space<vmem>>, %arg3: memref<9x128x128xf32, #tpu.memory_space<vmem>>, %arg4: memref<1x128xf32, #tpu.memory_space<vmem>>, %arg5: memref<1x128xf32, #tpu.memory_space<vmem>>, %arg6: memref<1x18x18x1xf32, #tpu.memory_space<vmem>>, %arg7: memref<1x256x128xf32, #tpu.memory_space<vmem>>, %arg8: memref<1x1x128xf32, #tpu.memory_space<vmem>>, %arg9: memref<1x1x128xf32, #tpu.memory_space<vmem>>) attributes {dimension_semantics = [#tpu.dimension_semantics<parallel>, #tpu.dimension_semantics<parallel>], iteration_bounds = array<i64: 1, 2>, scalar_prefetch = 0 : i64, scratch_operands = 0 : i64, tpu.core_type = #tpu.core_type<tc>, window_params = [{transform_indices = @transform_0, window_bounds = array<i64: 1, 18, 18, 128>}, {transform_indices = @transform_1, window_bounds = array<i64: 9, 128, 128>}, {pipeline_mode = #tpu.pipeline_mode<synchronous>, transform_indices = @transform_2, window_bounds = array<i64: 1, 128>}, {pipeline_mode = #tpu.pipeline_mode<synchronous>, transform_indices = @transform_3, window_bounds = array<i64: 1, 128>}, {pipeline_mode = #tpu.pipeline_mode<synchronous>, transform_indices = @transform_4, window_bounds = array<i64: 1, 18, 18, 1>}, {transform_indices = @transform_5, window_bounds = array<i64: 1, 256, 128>}, {transform_indices = @transform_6, window_bounds = array<i64: 1, 1, 128>}, {transform_indices = @transform_7, window_bounds = array<i64: 1, 1, 128>}]} {
    %c0 = arith.constant 0 : index
    %c0_0 = arith.constant 0 : index
    %c0_1 = arith.constant 0 : index
    %c0_2 = arith.constant 0 : index
    %0 = vector.load %arg2[%c0, %c0_0, %c0_1, %c0_2] : memref<1x18x18x128xf32, #tpu.memory_space<vmem>>, vector<1x18x18x128xf32>
    %1 = vector.shape_cast %0 : vector<1x18x18x128xf32> to vector<18x18x128xf32>
    %c0_3 = arith.constant 0 : index
    %c0_4 = arith.constant 0 : index
    %2 = vector.load %arg4[%c0_3, %c0_4] : memref<1x128xf32, #tpu.memory_space<vmem>>, vector<1x128xf32>
    %3 = vector.shape_cast %2 : vector<1x128xf32> to vector<1x1x128xf32>
    %4 = vector.broadcast %3 : vector<1x1x128xf32> to vector<18x18x128xf32>
    %5 = arith.mulf %1, %4 : vector<18x18x128xf32>
    %c0_5 = arith.constant 0 : index
    %c0_6 = arith.constant 0 : index
    %6 = vector.load %arg5[%c0_5, %c0_6] : memref<1x128xf32, #tpu.memory_space<vmem>>, vector<1x128xf32>
    %7 = vector.shape_cast %6 : vector<1x128xf32> to vector<1x1x128xf32>
    %8 = vector.broadcast %7 : vector<1x1x128xf32> to vector<18x18x128xf32>
    %9 = arith.addf %5, %8 : vector<18x18x128xf32>
    %cst = arith.constant 0.000000e+00 : f32
    %10 = vector.broadcast %cst : f32 to vector<18x18x128xf32>
    %11 = arith.maximumf %9, %10 : vector<18x18x128xf32>
    %c0_7 = arith.constant 0 : index
    %c0_8 = arith.constant 0 : index
    %c0_9 = arith.constant 0 : index
    %c0_10 = arith.constant 0 : index
    %12 = vector.load %arg6[%c0_7, %c0_8, %c0_9, %c0_10] : memref<1x18x18x1xf32, #tpu.memory_space<vmem>>, vector<1x18x18x1xf32>
    %13 = vector.shape_cast %12 : vector<1x18x18x1xf32> to vector<18x18x1xf32>
    %14 = vector.broadcast %13 : vector<18x18x1xf32> to vector<18x18x128xf32>
    %15 = arith.mulf %11, %14 : vector<18x18x128xf32>
    %16 = vector.extract_strided_slice %15 {offsets = [0, 0, 0], sizes = [16, 16, 128], strides = [1, 1, 1]} : vector<18x18x128xf32> to vector<16x16x128xf32>
    %17 = vector.shape_cast %16 : vector<16x16x128xf32> to vector<256x128xf32>
    %c0_11 = arith.constant 0 : index
    %c0_12 = arith.constant 0 : index
    %c0_13 = arith.constant 0 : index
    %18 = vector.load %arg3[%c0_11, %c0_12, %c0_13] : memref<9x128x128xf32, #tpu.memory_space<vmem>>, vector<1x128x128xf32>
    %19 = vector.shape_cast %18 : vector<1x128x128xf32> to vector<128x128xf32>
    %cst_14 = arith.constant dense<0.000000e+00> : vector<256x128xf32>
    %20 = tpu.matmul %17, %19, %cst_14 {dimension_numbers = #tpu.dot_dimension_numbers<[1], [0], [0], [1], [0, 0, 1, 1], [], []>} : vector<256x128xf32>, vector<128x128xf32>, vector<256x128xf32> -> vector<256x128xf32>
    %21 = vector.extract_strided_slice %15 {offsets = [0, 1, 0], sizes = [16, 16, 128], strides = [1, 1, 1]} : vector<18x18x128xf32> to vector<16x16x128xf32>
    %22 = vector.shape_cast %21 : vector<16x16x128xf32> to vector<256x128xf32>
    %c1 = arith.constant 1 : index
    %c0_15 = arith.constant 0 : index
    %c0_16 = arith.constant 0 : index
    %23 = vector.load %arg3[%c1, %c0_15, %c0_16] : memref<9x128x128xf32, #tpu.memory_space<vmem>>, vector<1x128x128xf32>
    %24 = vector.shape_cast %23 : vector<1x128x128xf32> to vector<128x128xf32>
    %cst_17 = arith.constant dense<0.000000e+00> : vector<256x128xf32>
    %25 = tpu.matmul %22, %24, %cst_17 {dimension_numbers = #tpu.dot_dimension_numbers<[1], [0], [0], [1], [0, 0, 1, 1], [], []>} : vector<256x128xf32>, vector<128x128xf32>, vector<256x128xf32> -> vector<256x128xf32>
    %26 = arith.addf %20, %25 : vector<256x128xf32>
    %27 = vector.extract_strided_slice %15 {offsets = [0, 2, 0], sizes = [16, 16, 128], strides = [1, 1, 1]} : vector<18x18x128xf32> to vector<16x16x128xf32>
    %28 = vector.shape_cast %27 : vector<16x16x128xf32> to vector<256x128xf32>
    %c2 = arith.constant 2 : index
    %c0_18 = arith.constant 0 : index
    %c0_19 = arith.constant 0 : index
    %29 = vector.load %arg3[%c2, %c0_18, %c0_19] : memref<9x128x128xf32, #tpu.memory_space<vmem>>, vector<1x128x128xf32>
    %30 = vector.shape_cast %29 : vector<1x128x128xf32> to vector<128x128xf32>
    %cst_20 = arith.constant dense<0.000000e+00> : vector<256x128xf32>
    %31 = tpu.matmul %28, %30, %cst_20 {dimension_numbers = #tpu.dot_dimension_numbers<[1], [0], [0], [1], [0, 0, 1, 1], [], []>} : vector<256x128xf32>, vector<128x128xf32>, vector<256x128xf32> -> vector<256x128xf32>
    %32 = arith.addf %26, %31 : vector<256x128xf32>
    %33 = vector.extract_strided_slice %15 {offsets = [1, 0, 0], sizes = [16, 16, 128], strides = [1, 1, 1]} : vector<18x18x128xf32> to vector<16x16x128xf32>
    %34 = vector.shape_cast %33 : vector<16x16x128xf32> to vector<256x128xf32>
    %c3 = arith.constant 3 : index
    %c0_21 = arith.constant 0 : index
    %c0_22 = arith.constant 0 : index
    %35 = vector.load %arg3[%c3, %c0_21, %c0_22] : memref<9x128x128xf32, #tpu.memory_space<vmem>>, vector<1x128x128xf32>
    %36 = vector.shape_cast %35 : vector<1x128x128xf32> to vector<128x128xf32>
    %cst_23 = arith.constant dense<0.000000e+00> : vector<256x128xf32>
    %37 = tpu.matmul %34, %36, %cst_23 {dimension_numbers = #tpu.dot_dimension_numbers<[1], [0], [0], [1], [0, 0, 1, 1], [], []>} : vector<256x128xf32>, vector<128x128xf32>, vector<256x128xf32> -> vector<256x128xf32>
    %38 = arith.addf %32, %37 : vector<256x128xf32>
    %39 = vector.extract_strided_slice %15 {offsets = [1, 1, 0], sizes = [16, 16, 128], strides = [1, 1, 1]} : vector<18x18x128xf32> to vector<16x16x128xf32>
    %40 = vector.shape_cast %39 : vector<16x16x128xf32> to vector<256x128xf32>
    %c4 = arith.constant 4 : index
    %c0_24 = arith.constant 0 : index
    %c0_25 = arith.constant 0 : index
    %41 = vector.load %arg3[%c4, %c0_24, %c0_25] : memref<9x128x128xf32, #tpu.memory_space<vmem>>, vector<1x128x128xf32>
    %42 = vector.shape_cast %41 : vector<1x128x128xf32> to vector<128x128xf32>
    %cst_26 = arith.constant dense<0.000000e+00> : vector<256x128xf32>
    %43 = tpu.matmul %40, %42, %cst_26 {dimension_numbers = #tpu.dot_dimension_numbers<[1], [0], [0], [1], [0, 0, 1, 1], [], []>} : vector<256x128xf32>, vector<128x128xf32>, vector<256x128xf32> -> vector<256x128xf32>
    %44 = arith.addf %38, %43 : vector<256x128xf32>
    %45 = vector.extract_strided_slice %15 {offsets = [1, 2, 0], sizes = [16, 16, 128], strides = [1, 1, 1]} : vector<18x18x128xf32> to vector<16x16x128xf32>
    %46 = vector.shape_cast %45 : vector<16x16x128xf32> to vector<256x128xf32>
    %c5 = arith.constant 5 : index
    %c0_27 = arith.constant 0 : index
    %c0_28 = arith.constant 0 : index
    %47 = vector.load %arg3[%c5, %c0_27, %c0_28] : memref<9x128x128xf32, #tpu.memory_space<vmem>>, vector<1x128x128xf32>
    %48 = vector.shape_cast %47 : vector<1x128x128xf32> to vector<128x128xf32>
    %cst_29 = arith.constant dense<0.000000e+00> : vector<256x128xf32>
    %49 = tpu.matmul %46, %48, %cst_29 {dimension_numbers = #tpu.dot_dimension_numbers<[1], [0], [0], [1], [0, 0, 1, 1], [], []>} : vector<256x128xf32>, vector<128x128xf32>, vector<256x128xf32> -> vector<256x128xf32>
    %50 = arith.addf %44, %49 : vector<256x128xf32>
    %51 = vector.extract_strided_slice %15 {offsets = [2, 0, 0], sizes = [16, 16, 128], strides = [1, 1, 1]} : vector<18x18x128xf32> to vector<16x16x128xf32>
    %52 = vector.shape_cast %51 : vector<16x16x128xf32> to vector<256x128xf32>
    %c6 = arith.constant 6 : index
    %c0_30 = arith.constant 0 : index
    %c0_31 = arith.constant 0 : index
    %53 = vector.load %arg3[%c6, %c0_30, %c0_31] : memref<9x128x128xf32, #tpu.memory_space<vmem>>, vector<1x128x128xf32>
    %54 = vector.shape_cast %53 : vector<1x128x128xf32> to vector<128x128xf32>
    %cst_32 = arith.constant dense<0.000000e+00> : vector<256x128xf32>
    %55 = tpu.matmul %52, %54, %cst_32 {dimension_numbers = #tpu.dot_dimension_numbers<[1], [0], [0], [1], [0, 0, 1, 1], [], []>} : vector<256x128xf32>, vector<128x128xf32>, vector<256x128xf32> -> vector<256x128xf32>
    %56 = arith.addf %50, %55 : vector<256x128xf32>
    %57 = vector.extract_strided_slice %15 {offsets = [2, 1, 0], sizes = [16, 16, 128], strides = [1, 1, 1]} : vector<18x18x128xf32> to vector<16x16x128xf32>
    %58 = vector.shape_cast %57 : vector<16x16x128xf32> to vector<256x128xf32>
    %c7 = arith.constant 7 : index
    %c0_33 = arith.constant 0 : index
    %c0_34 = arith.constant 0 : index
    %59 = vector.load %arg3[%c7, %c0_33, %c0_34] : memref<9x128x128xf32, #tpu.memory_space<vmem>>, vector<1x128x128xf32>
    %60 = vector.shape_cast %59 : vector<1x128x128xf32> to vector<128x128xf32>
    %cst_35 = arith.constant dense<0.000000e+00> : vector<256x128xf32>
    %61 = tpu.matmul %58, %60, %cst_35 {dimension_numbers = #tpu.dot_dimension_numbers<[1], [0], [0], [1], [0, 0, 1, 1], [], []>} : vector<256x128xf32>, vector<128x128xf32>, vector<256x128xf32> -> vector<256x128xf32>
    %62 = arith.addf %56, %61 : vector<256x128xf32>
    %63 = vector.extract_strided_slice %15 {offsets = [2, 2, 0], sizes = [16, 16, 128], strides = [1, 1, 1]} : vector<18x18x128xf32> to vector<16x16x128xf32>
    %64 = vector.shape_cast %63 : vector<16x16x128xf32> to vector<256x128xf32>
    %c8 = arith.constant 8 : index
    %c0_36 = arith.constant 0 : index
    %c0_37 = arith.constant 0 : index
    %65 = vector.load %arg3[%c8, %c0_36, %c0_37] : memref<9x128x128xf32, #tpu.memory_space<vmem>>, vector<1x128x128xf32>
    %66 = vector.shape_cast %65 : vector<1x128x128xf32> to vector<128x128xf32>
    %cst_38 = arith.constant dense<0.000000e+00> : vector<256x128xf32>
    %67 = tpu.matmul %64, %66, %cst_38 {dimension_numbers = #tpu.dot_dimension_numbers<[1], [0], [0], [1], [0, 0, 1, 1], [], []>} : vector<256x128xf32>, vector<128x128xf32>, vector<256x128xf32> -> vector<256x128xf32>
    %68 = arith.addf %62, %67 : vector<256x128xf32>
    %c0_39 = arith.constant 0 : index
    %c0_40 = arith.constant 0 : index
    %c0_41 = arith.constant 0 : index
    %69 = vector.load %arg7[%c0_39, %c0_40, %c0_41] : memref<1x256x128xf32, #tpu.memory_space<vmem>>, vector<1x256x128xf32>
    %70 = vector.shape_cast %69 : vector<1x256x128xf32> to vector<256x128xf32>
    %71 = vector.shape_cast %68 : vector<256x128xf32> to vector<1x256x128xf32>
    tpu.vector_store %arg7[%c0_39, %c0_40, %c0_41], %71 {strides = array<i32>} : memref<1x256x128xf32, #tpu.memory_space<vmem>>, vector<1x256x128xf32>,
    %cst_42 = arith.constant dense<0.000000e+00> : vector<128xf32>
    %72 = vector.multi_reduction <add>, %68, %cst_42 [0] : vector<256x128xf32> to vector<128xf32>
    %73 = vector.shape_cast %72 : vector<128xf32> to vector<1x128xf32>
    %74 = arith.mulf %68, %68 : vector<256x128xf32>
    %cst_43 = arith.constant dense<0.000000e+00> : vector<128xf32>
    %75 = vector.multi_reduction <add>, %74, %cst_43 [0] : vector<256x128xf32> to vector<128xf32>
    %76 = vector.shape_cast %75 : vector<128xf32> to vector<1x128xf32>
    %c0_44 = arith.constant 0 : index
    %c0_45 = arith.constant 0 : index
    %c0_46 = arith.constant 0 : index
    %77 = vector.load %arg8[%c0_44, %c0_45, %c0_46] : memref<1x1x128xf32, #tpu.memory_space<vmem>>, vector<1x1x128xf32>
    %78 = vector.shape_cast %77 : vector<1x1x128xf32> to vector<1x128xf32>
    %79 = vector.shape_cast %73 : vector<1x128xf32> to vector<1x1x128xf32>
    tpu.vector_store %arg8[%c0_44, %c0_45, %c0_46], %79 {strides = array<i32>} : memref<1x1x128xf32, #tpu.memory_space<vmem>>, vector<1x1x128xf32>,
    %c0_47 = arith.constant 0 : index
    %c0_48 = arith.constant 0 : index
    %c0_49 = arith.constant 0 : index
    %80 = vector.load %arg9[%c0_47, %c0_48, %c0_49] : memref<1x1x128xf32, #tpu.memory_space<vmem>>, vector<1x1x128xf32>
    %81 = vector.shape_cast %80 : vector<1x1x128xf32> to vector<1x128xf32>
    %82 = vector.shape_cast %76 : vector<1x128xf32> to vector<1x1x128xf32>
    tpu.vector_store %arg9[%c0_47, %c0_48, %c0_49], %82 {strides = array<i32>} : memref<1x1x128xf32, #tpu.memory_space<vmem>>, vector<1x1x128xf32>,
    return
  }
  func.func @transform_0(%arg0: i32, %arg1: i32) -> (i32, i32, i32, i32) {
    %c0_i32 = arith.constant 0 : i32
    %c0_i32_0 = arith.constant 0 : i32
    %c0_i32_1 = arith.constant 0 : i32
    %c0_i32_2 = arith.constant 0 : i32
    return %arg1, %c0_i32, %c0_i32_0, %c0_i32_1 : i32, i32, i32, i32
  }
  func.func @transform_1(%arg0: i32, %arg1: i32) -> (i32, i32, i32) {
    %c0_i32 = arith.constant 0 : i32
    %c0_i32_0 = arith.constant 0 : i32
    %c0_i32_1 = arith.constant 0 : i32
    return %c0_i32, %c0_i32_0, %arg0 : i32, i32, i32
  }
  func.func @transform_2(%arg0: i32, %arg1: i32) -> (i32, i32) {
    %c0_i32 = arith.constant 0 : i32
    %c0_i32_0 = arith.constant 0 : i32
    %c0_i32_1 = arith.constant 0 : i32
    return %c0_i32, %c0_i32_0 : i32, i32
  }
  func.func @transform_3(%arg0: i32, %arg1: i32) -> (i32, i32) {
    %c0_i32 = arith.constant 0 : i32
    %c0_i32_0 = arith.constant 0 : i32
    %c0_i32_1 = arith.constant 0 : i32
    return %c0_i32, %c0_i32_0 : i32, i32
  }
  func.func @transform_4(%arg0: i32, %arg1: i32) -> (i32, i32, i32, i32) {
    %c0_i32 = arith.constant 0 : i32
    %c0_i32_0 = arith.constant 0 : i32
    %c0_i32_1 = arith.constant 0 : i32
    %c0_i32_2 = arith.constant 0 : i32
    %c0_i32_3 = arith.constant 0 : i32
    return %c0_i32, %c0_i32_0, %c0_i32_1, %c0_i32_2 : i32, i32, i32, i32
  }
  func.func @transform_5(%arg0: i32, %arg1: i32) -> (i32, i32, i32) {
    %c0_i32 = arith.constant 0 : i32
    %c0_i32_0 = arith.constant 0 : i32
    return %arg1, %c0_i32, %arg0 : i32, i32, i32
  }
  func.func @transform_6(%arg0: i32, %arg1: i32) -> (i32, i32, i32) {
    %c0_i32 = arith.constant 0 : i32
    %c0_i32_0 = arith.constant 0 : i32
    return %arg1, %c0_i32, %arg0 : i32, i32, i32
  }
  func.func @transform_7(%arg0: i32, %arg1: i32) -> (i32, i32, i32) {
    %c0_i32 = arith.constant 0 : i32
    %c0_i32_0 = arith.constant 0 : i32
    return %arg1, %c0_i32, %arg0 : i32, i32, i32
  }
}

module attributes {stable_mosaic.version = 11 : i64} {
  func.func @kernel(%arg0: i32, %arg1: memref<256x128xf32, #tpu.memory_space<vmem>>, %arg2: memref<1x128xf32, #tpu.memory_space<vmem>>, %arg3: memref<1x128xf32, #tpu.memory_space<vmem>>, %arg4: memref<256x128xf32, #tpu.memory_space<vmem>>, %arg5: memref<128x128xf32, #tpu.memory_space<vmem>>, %arg6: memref<1x128xf32, #tpu.memory_space<vmem>>, %arg7: memref<256x128xf32, #tpu.memory_space<vmem>>) attributes {dimension_semantics = [#tpu.dimension_semantics<parallel>], iteration_bounds = array<i64: 2>, scalar_prefetch = 0 : i64, scratch_operands = 0 : i64, tpu.core_type = #tpu.core_type<tc>, window_params = [{transform_indices = @transform_0, window_bounds = array<i64: 256, 128>}, {pipeline_mode = #tpu.pipeline_mode<synchronous>, transform_indices = @transform_1, window_bounds = array<i64: 1, 128>}, {pipeline_mode = #tpu.pipeline_mode<synchronous>, transform_indices = @transform_2, window_bounds = array<i64: 1, 128>}, {transform_indices = @transform_3, window_bounds = array<i64: 256, 128>}, {pipeline_mode = #tpu.pipeline_mode<synchronous>, transform_indices = @transform_4, window_bounds = array<i64: 128, 128>}, {pipeline_mode = #tpu.pipeline_mode<synchronous>, transform_indices = @transform_5, window_bounds = array<i64: 1, 128>}, {transform_indices = @transform_6, window_bounds = array<i64: 256, 128>}]} {
    %c0 = arith.constant 0 : index
    %c0_0 = arith.constant 0 : index
    %0 = vector.load %arg4[%c0, %c0_0] : memref<256x128xf32, #tpu.memory_space<vmem>>, vector<256x128xf32>
    %c0_1 = arith.constant 0 : index
    %c0_2 = arith.constant 0 : index
    %1 = vector.load %arg5[%c0_1, %c0_2] : memref<128x128xf32, #tpu.memory_space<vmem>>, vector<128x128xf32>
    %cst = arith.constant dense<0.000000e+00> : vector<256x128xf32>
    %2 = tpu.matmul %0, %1, %cst {dimension_numbers = #tpu.dot_dimension_numbers<[1], [0], [0], [1], [0, 0, 1, 1], [], []>} : vector<256x128xf32>, vector<128x128xf32>, vector<256x128xf32> -> vector<256x128xf32>
    %c0_3 = arith.constant 0 : index
    %c0_4 = arith.constant 0 : index
    %3 = vector.load %arg6[%c0_3, %c0_4] : memref<1x128xf32, #tpu.memory_space<vmem>>, vector<1x128xf32>
    %4 = vector.broadcast %3 : vector<1x128xf32> to vector<256x128xf32>
    %5 = arith.addf %2, %4 : vector<256x128xf32>
    %c0_5 = arith.constant 0 : index
    %c0_6 = arith.constant 0 : index
    %6 = vector.load %arg1[%c0_5, %c0_6] : memref<256x128xf32, #tpu.memory_space<vmem>>, vector<256x128xf32>
    %c0_7 = arith.constant 0 : index
    %c0_8 = arith.constant 0 : index
    %7 = vector.load %arg2[%c0_7, %c0_8] : memref<1x128xf32, #tpu.memory_space<vmem>>, vector<1x128xf32>
    %8 = vector.broadcast %7 : vector<1x128xf32> to vector<256x128xf32>
    %9 = arith.mulf %6, %8 : vector<256x128xf32>
    %c0_9 = arith.constant 0 : index
    %c0_10 = arith.constant 0 : index
    %10 = vector.load %arg3[%c0_9, %c0_10] : memref<1x128xf32, #tpu.memory_space<vmem>>, vector<1x128xf32>
    %11 = vector.broadcast %10 : vector<1x128xf32> to vector<256x128xf32>
    %12 = arith.addf %9, %11 : vector<256x128xf32>
    %13 = arith.addf %12, %5 : vector<256x128xf32>
    %cst_11 = arith.constant 0.000000e+00 : f32
    %14 = vector.broadcast %cst_11 : f32 to vector<256x128xf32>
    %15 = arith.maximumf %13, %14 : vector<256x128xf32>
    %c0_12 = arith.constant 0 : index
    %c0_13 = arith.constant 0 : index
    %16 = vector.load %arg7[%c0_12, %c0_13] : memref<256x128xf32, #tpu.memory_space<vmem>>, vector<256x128xf32>
    tpu.vector_store %arg7[%c0_12, %c0_13], %15 {strides = array<i32>} : memref<256x128xf32, #tpu.memory_space<vmem>>, vector<256x128xf32>,
    return
  }
  func.func @transform_0(%arg0: i32) -> (i32, i32) {
    %c0_i32 = arith.constant 0 : i32
    %c0_i32_0 = arith.constant 0 : i32
    return %arg0, %c0_i32 : i32, i32
  }
  func.func @transform_1(%arg0: i32) -> (i32, i32) {
    %c0_i32 = arith.constant 0 : i32
    %c0_i32_0 = arith.constant 0 : i32
    %c0_i32_1 = arith.constant 0 : i32
    return %c0_i32, %c0_i32_0 : i32, i32
  }
  func.func @transform_2(%arg0: i32) -> (i32, i32) {
    %c0_i32 = arith.constant 0 : i32
    %c0_i32_0 = arith.constant 0 : i32
    %c0_i32_1 = arith.constant 0 : i32
    return %c0_i32, %c0_i32_0 : i32, i32
  }
  func.func @transform_3(%arg0: i32) -> (i32, i32) {
    %c0_i32 = arith.constant 0 : i32
    %c0_i32_0 = arith.constant 0 : i32
    return %arg0, %c0_i32 : i32, i32
  }
  func.func @transform_4(%arg0: i32) -> (i32, i32) {
    %c0_i32 = arith.constant 0 : i32
    %c0_i32_0 = arith.constant 0 : i32
    %c0_i32_1 = arith.constant 0 : i32
    return %c0_i32, %c0_i32_0 : i32, i32
  }
  func.func @transform_5(%arg0: i32) -> (i32, i32) {
    %c0_i32 = arith.constant 0 : i32
    %c0_i32_0 = arith.constant 0 : i32
    %c0_i32_1 = arith.constant 0 : i32
    return %c0_i32, %c0_i32_0 : i32, i32
  }
  func.func @transform_6(%arg0: i32) -> (i32, i32) {
    %c0_i32 = arith.constant 0 : i32
    %c0_i32_0 = arith.constant 0 : i32
    return %arg0, %c0_i32 : i32, i32
  }
}

</mosaic_0001>

<llo_original>
// kernel: residual_forward.3
$region0: #{residual_forward.3}
  #allocation0 [shape = 'u32[]', space=smem, size = 0x4, offset = 0x4, fixed_abs, tag = 'smem constant byte address 0x4 - core index']
  #allocation1 [shape = 'u32[144,128]{1,0:T(1,128)}', space=vmem, size = 0x12000, scoped, tag = 'internal scratch']
  %s0 = inlined_call_operand.vmem [shape: f32[2,256,128], index: 0, kind: input, shape index: {}]
  %s1 = inlined_call_operand.vmem [shape: f32[128,128], index: 1, kind: input, shape index: {}]
  %s2 = inlined_call_operand.vmem [shape: f32[2,256,128], index: 2, kind: output, shape index: {0}]
  %s3 = inlined_call_operand.vmem [shape: f32[2,1,128], index: 3, kind: output, shape index: {1}]
  %s4 = inlined_call_operand.vmem [shape: f32[2,1,128], index: 4, kind: output, shape index: {2}]
  %5 = xla_tuple %s2, %s3, %s4
  %s6 = sld [smem:[#allocation0]]
  $region57: #{residual_forward.3} parent=0
    _
  %s8 = ssub.s32 1, %s6
  %s9 = scalar_select 0, %s8, %s6
  loop: start=0, step=1, limit=4
  $region2: #{residual_forward.3} parent=0 // loop_pre_header
    _
  $region3: #{residual_forward.3} parent=0 // loop_header
    %s11 = sphi 0, %s15
    %p12 = scmp.ge.s32.totalorder %s11, 4
    %s18 = sphi 0, %s30
    %s19 = sphi 0, %s26
    %s20 = sphi 0, %s18
    %s21 = sphi 0, %s19
    %s22 = sphi 0, %s20
    %s23 = sphi 0, %s21
    %s33 = sphi 0, %s35
    %s36 = sphi 0, %s33
    %s37 = sphi 0, %s36
    %s53 = sphi 0, %s37
    %s59 = sphi 0, %s61
    %s62 = sphi 0, %s59
    %s63 = sphi 0, %s62
    %s79 = sphi 0, %s63
    %s87 = sphi 0, %s89
    %s90 = sphi 0, %s87
    %s91 = sphi 0, %s90
    %s107 = sphi 0, %s91
    %s115 = sphi 0, %s117
    %s118 = sphi 0, %s115
    %s119 = sphi 0, %s118
    %s135 = sphi 0, %s119
    %s143 = sphi 0, %s145
    %s146 = sphi 0, %s143
    %s147 = sphi 0, %s146
    %s163 = sphi 0, %s147
  $region4: #{residual_forward.3} parent=0 // loop_header_branch
    %14 = sbr.rel (%p12) target = $region8
  $region5: #{residual_forward.3} parent=0 // loop_body
    %s16 = ssub.s32 %s11, 1
    %s17 = ssub.s32 %s11, 2
    %s24 = sadd.s32 1, %s19
    %p25 = scmp.ge.s32.totalorder %s24, 2
    %s26 = scalar_select %p25, 0, %s24
    %s27 = sadd.s32 1, %s18
    %s28 = scalar_select %p25, %s27, %s18
    %p29 = scmp.ge.s32.totalorder %s28, 1
    %s30 = scalar_select %p29, 0, %s28
    %s31 = ssub.s32 %s19, %s26
    %p32 = scmp.eq.s32.totalorder %s31, 0
    %s34 = sadd.s32 %s33, 1
    %s35 = scalar_select %p32, %s33, %s34
    %p38 = pneg %p32
    %p39 = scmp.eq.s32.totalorder %s11, 1
    %p40 = por %p38, %p39
    %p41 = scmp.ne.s32.totalorder %s33, %s36
    %p42 = scmp.eq.s32.totalorder %s11, 0
    %p43 = por %p41, %p42
    %p44 = scmp.ne.s32.totalorder %s33, %s36
    %p45 = scmp.eq.s32.totalorder %s16, 1
    %p46 = por %p44, %p45
    %p47 = scmp.ne.s32.totalorder %s36, %s37
    %p48 = scmp.eq.s32.totalorder %s16, 0
    %p49 = por %p47, %p48
    %p50 = scmp.ne.s32.totalorder %s36, %s37
    %p51 = scmp.eq.s32.totalorder %s17, 1
    %p52 = por %p50, %p51
    %p54 = scmp.ne.s32.totalorder %s37, %s53
    %p55 = scmp.eq.s32.totalorder %s17, 0
    %p56 = por %p54, %p55
    %s57 = ssub.s32 %s18, %s30
    %p58 = scmp.eq.s32.totalorder %s57, 0
    %s60 = sadd.s32 %s59, 1
    %s61 = scalar_select %p58, %s59, %s60
    %p64 = pneg %p58
    %p65 = scmp.eq.s32.totalorder %s11, 1
    %p66 = por %p64, %p65
    %p67 = scmp.ne.s32.totalorder %s59, %s62
    %p68 = scmp.eq.s32.totalorder %s11, 0
    %p69 = por %p67, %p68
    %p70 = scmp.ne.s32.totalorder %s59, %s62
    %p71 = scmp.eq.s32.totalorder %s16, 1
    %p72 = por %p70, %p71
    %p73 = scmp.ne.s32.totalorder %s62, %s63
    %p74 = scmp.eq.s32.totalorder %s16, 0
    %p75 = por %p73, %p74
    %p76 = scmp.ne.s32.totalorder %s62, %s63
    %p77 = scmp.eq.s32.totalorder %s17, 1
    %p78 = por %p76, %p77
    %p80 = scmp.ne.s32.totalorder %s63, %s79
    %p81 = scmp.eq.s32.totalorder %s17, 0
    %p82 = por %p80, %p81
    %s83 = ssub.s32 %s19, %s26
    %s84 = ssub.s32 %s18, %s30
    %s85 = sor.u32 %s83, %s84
    %p86 = scmp.eq.s32.totalorder %s85, 0
    %s88 = sadd.s32 %s87, 1
    %s89 = scalar_select %p86, %s87, %s88
    %p92 = pneg %p86
    %p93 = scmp.eq.s32.totalorder %s11, 1
    %p94 = por %p92, %p93
    %p95 = scmp.ne.s32.totalorder %s87, %s90
    %p96 = scmp.eq.s32.totalorder %s11, 0
    %p97 = por %p95, %p96
    %p98 = scmp.ne.s32.totalorder %s87, %s90
    %p99 = scmp.eq.s32.totalorder %s16, 1
    %p100 = por %p98, %p99
    %p101 = scmp.ne.s32.totalorder %s90, %s91
    %p102 = scmp.eq.s32.totalorder %s16, 0
    %p103 = por %p101, %p102
    %p104 = scmp.ne.s32.totalorder %s90, %s91
    %p105 = scmp.eq.s32.totalorder %s17, 1
    %p106 = por %p104, %p105
    %p108 = scmp.ne.s32.totalorder %s91, %s107
    %p109 = scmp.eq.s32.totalorder %s17, 0
    %p110 = por %p108, %p109
    %s111 = ssub.s32 %s19, %s26
    %s112 = ssub.s32 %s18, %s30
    %s113 = sor.u32 %s111, %s112
    %p114 = scmp.eq.s32.totalorder %s113, 0
    %s116 = sadd.s32 %s115, 1
    %s117 = scalar_select %p114, %s115, %s116
    %p120 = pneg %p114
    %p121 = scmp.eq.s32.totalorder %s11, 1
    %p122 = por %p120, %p121
    %p123 = scmp.ne.s32.totalorder %s115, %s118
    %p124 = scmp.eq.s32.totalorder %s11, 0
    %p125 = por %p123, %p124
    %p126 = scmp.ne.s32.totalorder %s115, %s118
    %p127 = scmp.eq.s32.totalorder %s16, 1
    %p128 = por %p126, %p127
    %p129 = scmp.ne.s32.totalorder %s118, %s119
    %p130 = scmp.eq.s32.totalorder %s16, 0
    %p131 = por %p129, %p130
    %p132 = scmp.ne.s32.totalorder %s118, %s119
    %p133 = scmp.eq.s32.totalorder %s17, 1
    %p134 = por %p132, %p133
    %p136 = scmp.ne.s32.totalorder %s119, %s135
    %p137 = scmp.eq.s32.totalorder %s17, 0
    %p138 = por %p136, %p137
    %s139 = ssub.s32 %s19, %s26
    %s140 = ssub.s32 %s18, %s30
    %s141 = sor.u32 %s139, %s140
    %p142 = scmp.eq.s32.totalorder %s141, 0
    %s144 = sadd.s32 %s143, 1
    %s145 = scalar_select %p142, %s143, %s144
    %p148 = pneg %p142
    %p149 = scmp.eq.s32.totalorder %s11, 1
    %p150 = por %p148, %p149
    %p151 = scmp.ne.s32.totalorder %s143, %s146
    %p152 = scmp.eq.s32.totalorder %s11, 0
    %p153 = por %p151, %p152
    %p154 = scmp.ne.s32.totalorder %s143, %s146
    %p155 = scmp.eq.s32.totalorder %s16, 1
    %p156 = por %p154, %p155
    %p157 = scmp.ne.s32.totalorder %s146, %s147
    %p158 = scmp.eq.s32.totalorder %s16, 0
    %p159 = por %p157, %p158
    %p160 = scmp.ne.s32.totalorder %s146, %s147
    %p161 = scmp.eq.s32.totalorder %s17, 1
    %p162 = por %p160, %p161
    %p164 = scmp.ne.s32.totalorder %s147, %s163
    %p165 = scmp.eq.s32.totalorder %s17, 0
    %p166 = por %p164, %p165
    %p167 = scmp.le.s32.totalorder 1, %s11
    %p168 = scmp.lt.s32.totalorder %s11, 3
    %p169 = pnand %p167, %p168
    %p170 = pneg %p169
    // Predicated region
    $region9: #{residual_forward.3} parent=5 // pred_check
      _
    $region10: #{residual_forward.3} parent=5 // pred_check_branch
      %172 = sbr.rel (%p169) target = $region12
    $region11: #{residual_forward.3} parent=5 // pred_region
      %s173 = ssub.s32 %s11, 1
      // Predicated region
      $region13: #{residual_forward.3} parent=11 // pred_check
        %p174 = pneg %p75
      $region14: #{residual_forward.3} parent=11 // pred_check_branch
        %176 = sbr.rel (%p174) target = $region16
      $region15: #{residual_forward.3} parent=11 // pred_region
        %p177 = scmp.lt.s32.totalorder %s20, 0
        %s178 = scalar_select %p177, %s20, 0
        %s179 = smul.addr %s178, 8
        %s180 = scalar_lea.vmem %s1, %s179
      $region16: #{residual_forward.3} parent=11 // pred_fallthru
        _
    $region12: #{residual_forward.3} parent=5 // pred_fallthru
      _
    %p181 = scmp.lt.s32.totalorder %s11, 2
    // Predicated region
    $region17: #{residual_forward.3} parent=5 // pred_check
      %p182 = pneg %p181
    $region18: #{residual_forward.3} parent=5 // pred_check_branch
      %184 = sbr.rel (%p182) target = $region20
    $region19: #{residual_forward.3} parent=5 // pred_region
      // Predicated region
      $region21: #{residual_forward.3} parent=19 // pred_check
        %p185 = pneg %p43
      $region22: #{residual_forward.3} parent=19 // pred_check_branch
        %187 = sbr.rel (%p185) target = $region24
      $region23: #{residual_forward.3} parent=19 // pred_region
        %p188 = scmp.lt.s32.totalorder %s19, 1
        %s189 = scalar_select %p188, %s19, 1
        %s190 = smul.addr %s189, 32
        %s191 = smul.addr %s190, 8
        %s192 = scalar_lea.vmem %s0, %s191
      $region24: #{residual_forward.3} parent=19 // pred_fallthru
        _
    $region20: #{residual_forward.3} parent=5 // pred_fallthru
      _
    %p193 = scmp.le.s32.totalorder 1, %s11
    %p194 = scmp.lt.s32.totalorder %s11, 3
    %p195 = pnand %p193, %p194
    %p196 = pneg %p195
    // Predicated region
    $region25: #{residual_forward.3} parent=5 // pred_check
      _
    $region26: #{residual_forward.3} parent=5 // pred_check_branch
      %198 = sbr.rel (%p195) target = $region28
    $region27: #{residual_forward.3} parent=5 // pred_region
      %s199 = ssub.s32 %s11, 1
      %p200 = scmp.lt.s32.totalorder %s21, 1
      %s201 = scalar_select %p200, %s21, 1
      %s202 = smul.addr %s201, 32
      %s203 = smul.addr %s202, 8
      %s204 = scalar_lea.vmem %s0, %s203
      %p205 = pneg %p49
      %p206 = pneg %p46
      %p207 = scmp.lt.s32.totalorder %s20, 0
      %s208 = scalar_select %p207, %s20, 0
      %s209 = smul.addr %s208, 8
      %s210 = scalar_lea.vmem %s1, %s209
      %p211 = pneg %p75
      %p212 = pneg %p72
      %p213 = pneg %p103
      %p214 = pneg %p100
      %p215 = scmp.lt.s32.totalorder %s21, 1
      %s216 = scalar_select %p215, %s21, 1
      %p217 = scmp.lt.s32.totalorder %s20, 0
      %s218 = scalar_select %p217, %s20, 0
      %s219 = smul.addr %s216, 32
      %s220 = sadd.s32 %s218, %s219
      %s221 = smul.addr %s220, 8
      %s222 = scalar_lea.vmem %s2, %s221
      %p223 = pneg %p131
      %p224 = pneg %p128
      %p225 = scmp.lt.s32.totalorder %s21, 1
      %s226 = scalar_select %p225, %s21, 1
      %p227 = scmp.lt.s32.totalorder %s20, 0
      %s228 = scalar_select %p227, %s20, 0
      %s229 = sadd.s32 %s228, %s226
      %s230 = scalar_lea.vmem %s3, %s229
      %p231 = pneg %p159
      %p232 = pneg %p156
      %p233 = scmp.lt.s32.totalorder %s21, 1
      %s234 = scalar_select %p233, %s21, 1
      %p235 = scmp.lt.s32.totalorder %s20, 0
      %s236 = scalar_select %p235, %s20, 0
      %s237 = sadd.s32 %s236, %s234
      %s238 = scalar_lea.vmem %s4, %s237
      %p239 = scmp.lt.s32.totalorder %s21, 1
      %s240 = scalar_select %p239, %s21, 1
      %s241 = smul.addr %s240, 32
      %s242 = smul.addr %s241, 8
      %s243 = scalar_lea.vmem %s0, %s242
      %p244 = scmp.lt.s32.totalorder %s20, 0
      %s245 = scalar_select %p244, %s20, 0
      %s246 = smul.addr %s245, 8
      %s247 = scalar_lea.vmem %s1, %s246
      %p248 = scmp.lt.s32.totalorder %s21, 1
      %s249 = scalar_select %p248, %s21, 1
      %p250 = scmp.lt.s32.totalorder %s20, 0
      %s251 = scalar_select %p250, %s20, 0
      %s252 = smul.addr %s249, 32
      %s253 = sadd.s32 %s251, %s252
      %s254 = smul.addr %s253, 8
      %s255 = scalar_lea.vmem %s2, %s254
      %p256 = scmp.lt.s32.totalorder %s21, 1
      %s257 = scalar_select %p256, %s21, 1
      %p258 = scmp.lt.s32.totalorder %s20, 0
      %s259 = scalar_select %p258, %s20, 0
      %s260 = sadd.s32 %s259, %s257
      %s261 = scalar_lea.vmem %s3, %s260
      %p262 = scmp.lt.s32.totalorder %s21, 1
      %s263 = scalar_select %p262, %s21, 1
      %p264 = scmp.lt.s32.totalorder %s20, 0
      %s265 = scalar_select %p264, %s20, 0
      %s266 = sadd.s32 %s265, %s263
      %s267 = scalar_lea.vmem %s4, %s266
      %v268 = vld [vmem:[%s243] sm:$0xff]
      %v269 = vld [vmem:[%s243 + $0x8] sm:$0xff]
      %v270 = vld [vmem:[%s243 + $0x10] sm:$0xff]
      %v271 = vld [vmem:[%s243 + $0x18] sm:$0xff]
      %v272 = vld [vmem:[%s243 + $0x20] sm:$0xff]
      %v273 = vld [vmem:[%s243 + $0x28] sm:$0xff]
      %v274 = vld [vmem:[%s243 + $0x30] sm:$0xff]
      %v275 = vld [vmem:[%s243 + $0x38] sm:$0xff]
      %v276 = vld [vmem:[%s243 + $0x40] sm:$0xff]
      %v277 = vld [vmem:[%s243 + $0x48] sm:$0xff]
      %v278 = vld [vmem:[%s243 + $0x50] sm:$0xff]
      %v279 = vld [vmem:[%s243 + $0x58] sm:$0xff]
      %v280 = vld [vmem:[%s243 + $0x60] sm:$0xff]
      %v281 = vld [vmem:[%s243 + $0x68] sm:$0xff]
      %v282 = vld [vmem:[%s243 + $0x70] sm:$0xff]
      %v283 = vld [vmem:[%s243 + $0x78] sm:$0xff]
      %v284 = vld [vmem:[%s243 + $0x80] sm:$0xff]
      %v285 = vld [vmem:[%s243 + $0x88] sm:$0xff]
      %v286 = vld [vmem:[%s243 + $0x90] sm:$0xff]
      %v287 = vld [vmem:[%s243 + $0x98] sm:$0xff]
      %v288 = vld [vmem:[%s243 + $0xa0] sm:$0xff]
      %v289 = vld [vmem:[%s243 + $0xa8] sm:$0xff]
      %v290 = vld [vmem:[%s243 + $0xb0] sm:$0xff]
      %v291 = vld [vmem:[%s243 + $0xb8] sm:$0xff]
      %v292 = vld [vmem:[%s243 + $0xc0] sm:$0xff]
      %v293 = vld [vmem:[%s243 + $0xc8] sm:$0xff]
      %v294 = vld [vmem:[%s243 + $0xd0] sm:$0xff]
      %v295 = vld [vmem:[%s243 + $0xd8] sm:$0xff]
      %v296 = vld [vmem:[%s243 + $0xe0] sm:$0xff]
      %v297 = vld [vmem:[%s243 + $0xe8] sm:$0xff]
      %v298 = vld [vmem:[%s243 + $0xf0] sm:$0xff]
      %v299 = vld [vmem:[%s243 + $0xf8] sm:$0xff]
      %v300 = vld [vmem:[%s247] sm:$0xff]
      %v301 = vld [vmem:[%s247 + $0x8] sm:$0xff]
      %v302 = vld [vmem:[%s247 + $0x10] sm:$0xff]
      %v303 = vld [vmem:[%s247 + $0x18] sm:$0xff]
      %v304 = vld [vmem:[%s247 + $0x20] sm:$0xff]
      %v305 = vld [vmem:[%s247 + $0x28] sm:$0xff]
      %v306 = vld [vmem:[%s247 + $0x30] sm:$0xff]
      %v307 = vld [vmem:[%s247 + $0x38] sm:$0xff]
      %v308 = vld [vmem:[%s247 + $0x40] sm:$0xff]
      %v309 = vld [vmem:[%s247 + $0x48] sm:$0xff]
      %v310 = vld [vmem:[%s247 + $0x50] sm:$0xff]
      %v311 = vld [vmem:[%s247 + $0x58] sm:$0xff]
      %v312 = vld [vmem:[%s247 + $0x60] sm:$0xff]
      %v313 = vld [vmem:[%s247 + $0x68] sm:$0xff]
      %v314 = vld [vmem:[%s247 + $0x70] sm:$0xff]
      %v315 = vld [vmem:[%s247 + $0x78] sm:$0xff]
      %316 = vmatprep.subr.mxu0 0.0
      %317 = vmatpush1.msra.mxu0 %v315
      %318 = vmatprep.subr.mxu0 0.0
      %319 = vmatpush1.msra.mxu0 %v314
      %320 = vmatprep.subr.mxu0 0.0
      %321 = vmatpush1.msra.mxu0 %v313
      %322 = vmatprep.subr.mxu0 0.0
      %323 = vmatpush1.msra.mxu0 %v312
      %324 = vmatprep.subr.mxu0 0.0
      %325 = vmatpush1.msra.mxu0 %v311
      %326 = vmatprep.subr.mxu0 0.0
      %327 = vmatpush1.msra.mxu0 %v310
      %328 = vmatprep.subr.mxu0 0.0
      %329 = vmatpush1.msra.mxu0 %v309
      %330 = vmatprep.subr.mxu0 0.0
      %331 = vmatpush1.msra.mxu0 %v308
      %332 = vmatprep.subr.mxu0 0.0
      %333 = vmatpush1.msra.mxu0 %v307
      %334 = vmatprep.subr.mxu0 0.0
      %335 = vmatpush1.msra.mxu0 %v306
      %336 = vmatprep.subr.mxu0 0.0
      %337 = vmatpush1.msra.mxu0 %v305
      %338 = vmatprep.subr.mxu0 0.0
      %339 = vmatpush1.msra.mxu0 %v304
      %340 = vmatprep.subr.mxu0 0.0
      %341 = vmatpush1.msra.mxu0 %v303
      %342 = vmatprep.subr.mxu0 0.0
      %343 = vmatpush1.msra.mxu0 %v302
      %344 = vmatprep.subr.mxu0 0.0
      %345 = vmatpush1.msra.mxu0 %v301
      %346 = vmatprep.subr.mxu0 0.0
      %347 = vmatpush1.msra.mxu0 %v300
      %348 = vmatprep.subr.mxu0 0.0
      %349 = vmatpush2.msra.mxu0 0.0
      %350 = vmatprep.subr.mxu0 0.0
      %351 = vmatpush2.msra.mxu0 0.0
      %352 = vmatprep.subr.mxu0 0.0
      %353 = vmatpush2.msra.mxu0 0.0
      %354 = vmatprep.subr.mxu0 0.0
      %355 = vmatpush2.msra.mxu0 0.0
      %356 = vmatprep.subr.mxu0 0.0
      %357 = vmatpush2.msra.mxu0 0.0
      %358 = vmatprep.subr.mxu0 0.0
      %359 = vmatpush2.msra.mxu0 0.0
      %360 = vmatprep.subr.mxu0 0.0
      %361 = vmatpush2.msra.mxu0 0.0
      %362 = vmatprep.subr.mxu0 0.0
      %363 = vmatpush2.msra.mxu0 0.0
      %364 = vmatprep.subr.mxu0 0.0
      %365 = vmatpush2.msra.mxu0 0.0
      %366 = vmatprep.subr.mxu0 0.0
      %367 = vmatpush2.msra.mxu0 0.0
      %368 = vmatprep.subr.mxu0 0.0
      %369 = vmatpush2.msra.mxu0 0.0
      %370 = vmatprep.subr.mxu0 0.0
      %371 = vmatpush2.msra.mxu0 0.0
      %372 = vmatprep.subr.mxu0 0.0
      %373 = vmatpush2.msra.mxu0 0.0
      %374 = vmatprep.subr.mxu0 0.0
      %375 = vmatpush2.msra.mxu0 0.0
      %376 = vmatprep.subr.mxu0 0.0
      %377 = vmatpush2.msra.mxu0 0.0
      %378 = vmatprep.subr.mxu0 0.0
      %379 = vmatpush2.msra.mxu0 0.0
      %380 = vmatprep.mubr.f32.mxu0 0.0
      %381 = vmatmul.mubr.f32.gmra.mxu0 %v268
      %v382 = vpop.f32.mrf.mxu0
      %v383 = vadd.f32 0.0, %v382
      %v384 = vpop.f32.mrf.mxu0
      %385 = vmatprep.mubr.f32.mxu0 0.0
      %386 = vmatmul.mubr.f32.gmra.mxu0 %v269
      %v387 = vpop.f32.mrf.mxu0
      %v388 = vadd.f32 0.0, %v387
      %v389 = vpop.f32.mrf.mxu0
      %390 = vmatprep.mubr.f32.mxu0 0.0
      %391 = vmatmul.mubr.f32.gmra.mxu0 %v270
      %v392 = vpop.f32.mrf.mxu0
      %v393 = vadd.f32 0.0, %v392
      %v394 = vpop.f32.mrf.mxu0
      %395 = vmatprep.mubr.f32.mxu0 0.0
      %396 = vmatmul.mubr.f32.gmra.mxu0 %v271
      %v397 = vpop.f32.mrf.mxu0
      %v398 = vadd.f32 0.0, %v397
      %v399 = vpop.f32.mrf.mxu0
      %400 = vmatprep.mubr.f32.mxu0 0.0
      %401 = vmatmul.mubr.f32.gmra.mxu0 %v272
      %v402 = vpop.f32.mrf.mxu0
      %v403 = vadd.f32 0.0, %v402
      %v404 = vpop.f32.mrf.mxu0
      %405 = vmatprep.mubr.f32.mxu0 0.0
      %406 = vmatmul.mubr.f32.gmra.mxu0 %v273
      %v407 = vpop.f32.mrf.mxu0
      %v408 = vadd.f32 0.0, %v407
      %v409 = vpop.f32.mrf.mxu0
      %410 = vmatprep.mubr.f32.mxu0 0.0
      %411 = vmatmul.mubr.f32.gmra.mxu0 %v274
      %v412 = vpop.f32.mrf.mxu0
      %v413 = vadd.f32 0.0, %v412
      %v414 = vpop.f32.mrf.mxu0
      %415 = vmatprep.mubr.f32.mxu0 0.0
      %416 = vmatmul.mubr.f32.gmra.mxu0 %v275
      %v417 = vpop.f32.mrf.mxu0
      %v418 = vadd.f32 0.0, %v417
      %v419 = vpop.f32.mrf.mxu0
      %420 = vmatprep.mubr.f32.mxu0 0.0
      %421 = vmatmul.mubr.f32.gmra.mxu0 %v276
      %v422 = vpop.f32.mrf.mxu0
      %v423 = vadd.f32 0.0, %v422
      %v424 = vpop.f32.mrf.mxu0
      %425 = vmatprep.mubr.f32.mxu0 0.0
      %426 = vmatmul.mubr.f32.gmra.mxu0 %v277
      %v427 = vpop.f32.mrf.mxu0
      %v428 = vadd.f32 0.0, %v427
      %v429 = vpop.f32.mrf.mxu0
      %430 = vmatprep.mubr.f32.mxu0 0.0
      %431 = vmatmul.mubr.f32.gmra.mxu0 %v278
      %v432 = vpop.f32.mrf.mxu0
      %v433 = vadd.f32 0.0, %v432
      %v434 = vpop.f32.mrf.mxu0
      %435 = vmatprep.mubr.f32.mxu0 0.0
      %436 = vmatmul.mubr.f32.gmra.mxu0 %v279
      %v437 = vpop.f32.mrf.mxu0
      %v438 = vadd.f32 0.0, %v437
      %v439 = vpop.f32.mrf.mxu0
      %440 = vmatprep.mubr.f32.mxu0 0.0
      %441 = vmatmul.mubr.f32.gmra.mxu0 %v280
      %v442 = vpop.f32.mrf.mxu0
      %v443 = vadd.f32 0.0, %v442
      %v444 = vpop.f32.mrf.mxu0
      %445 = vmatprep.mubr.f32.mxu0 0.0
      %446 = vmatmul.mubr.f32.gmra.mxu0 %v281
      %v447 = vpop.f32.mrf.mxu0
      %v448 = vadd.f32 0.0, %v447
      %v449 = vpop.f32.mrf.mxu0
      %450 = vmatprep.mubr.f32.mxu0 0.0
      %451 = vmatmul.mubr.f32.gmra.mxu0 %v282
      %v452 = vpop.f32.mrf.mxu0
      %v453 = vadd.f32 0.0, %v452
      %v454 = vpop.f32.mrf.mxu0
      %455 = vmatprep.mubr.f32.mxu0 0.0
      %456 = vmatmul.mubr.f32.gmra.mxu0 %v283
      %v457 = vpop.f32.mrf.mxu0
      %v458 = vadd.f32 0.0, %v457
      %v459 = vpop.f32.mrf.mxu0
      %460 = vmatprep.mubr.f32.mxu0 0.0
      %461 = vmatmul.mubr.f32.gmra.mxu0 %v284
      %v462 = vpop.f32.mrf.mxu0
      %v463 = vadd.f32 0.0, %v462
      %v464 = vpop.f32.mrf.mxu0
      %465 = vmatprep.mubr.f32.mxu0 0.0
      %466 = vmatmul.mubr.f32.gmra.mxu0 %v285
      %v467 = vpop.f32.mrf.mxu0
      %v468 = vadd.f32 0.0, %v467
      %v469 = vpop.f32.mrf.mxu0
      %470 = vmatprep.mubr.f32.mxu0 0.0
      %471 = vmatmul.mubr.f32.gmra.mxu0 %v286
      %v472 = vpop.f32.mrf.mxu0
      %v473 = vadd.f32 0.0, %v472
      %v474 = vpop.f32.mrf.mxu0
      %475 = vmatprep.mubr.f32.mxu0 0.0
      %476 = vmatmul.mubr.f32.gmra.mxu0 %v287
      %v477 = vpop.f32.mrf.mxu0
      %v478 = vadd.f32 0.0, %v477
      %v479 = vpop.f32.mrf.mxu0
      %480 = vmatprep.mubr.f32.mxu0 0.0
      %481 = vmatmul.mubr.f32.gmra.mxu0 %v288
      %v482 = vpop.f32.mrf.mxu0
      %v483 = vadd.f32 0.0, %v482
      %v484 = vpop.f32.mrf.mxu0
      %485 = vmatprep.mubr.f32.mxu0 0.0
      %486 = vmatmul.mubr.f32.gmra.mxu0 %v289
      %v487 = vpop.f32.mrf.mxu0
      %v488 = vadd.f32 0.0, %v487
      %v489 = vpop.f32.mrf.mxu0
      %490 = vmatprep.mubr.f32.mxu0 0.0
      %491 = vmatmul.mubr.f32.gmra.mxu0 %v290
      %v492 = vpop.f32.mrf.mxu0
      %v493 = vadd.f32 0.0, %v492
      %v494 = vpop.f32.mrf.mxu0
      %495 = vmatprep.mubr.f32.mxu0 0.0
      %496 = vmatmul.mubr.f32.gmra.mxu0 %v291
      %v497 = vpop.f32.mrf.mxu0
      %v498 = vadd.f32 0.0, %v497
      %v499 = vpop.f32.mrf.mxu0
      %500 = vmatprep.mubr.f32.mxu0 0.0
      %501 = vmatmul.mubr.f32.gmra.mxu0 %v292
      %v502 = vpop.f32.mrf.mxu0
      %v503 = vadd.f32 0.0, %v502
      %v504 = vpop.f32.mrf.mxu0
      %505 = vmatprep.mubr.f32.mxu0 0.0
      %506 = vmatmul.mubr.f32.gmra.mxu0 %v293
      %v507 = vpop.f32.mrf.mxu0
      %v508 = vadd.f32 0.0, %v507
      %v509 = vpop.f32.mrf.mxu0
      %510 = vmatprep.mubr.f32.mxu0 0.0
      %511 = vmatmul.mubr.f32.gmra.mxu0 %v294
      %v512 = vpop.f32.mrf.mxu0
      %v513 = vadd.f32 0.0, %v512
      %v514 = vpop.f32.mrf.mxu0
      %515 = vmatprep.mubr.f32.mxu0 0.0
      %516 = vmatmul.mubr.f32.gmra.mxu0 %v295
      %v517 = vpop.f32.mrf.mxu0
      %v518 = vadd.f32 0.0, %v517
      %v519 = vpop.f32.mrf.mxu0
      %520 = vmatprep.mubr.f32.mxu0 0.0
      %521 = vmatmul.mubr.f32.gmra.mxu0 %v296
      %v522 = vpop.f32.mrf.mxu0
      %v523 = vadd.f32 0.0, %v522
      %v524 = vpop.f32.mrf.mxu0
      %525 = vmatprep.mubr.f32.mxu0 0.0
      %526 = vmatmul.mubr.f32.gmra.mxu0 %v297
      %v527 = vpop.f32.mrf.mxu0
      %v528 = vadd.f32 0.0, %v527
      %v529 = vpop.f32.mrf.mxu0
      %530 = vmatprep.mubr.f32.mxu0 0.0
      %531 = vmatmul.mubr.f32.gmra.mxu0 %v298
      %v532 = vpop.f32.mrf.mxu0
      %v533 = vadd.f32 0.0, %v532
      %v534 = vpop.f32.mrf.mxu0
      %535 = vmatprep.mubr.f32.mxu0 0.0
      %536 = vmatmul.mubr.f32.gmra.mxu0 %v299
      %v537 = vpop.f32.mrf.mxu0
      %v538 = vadd.f32 0.0, %v537
      %v539 = vpop.f32.mrf.mxu0
      %540 = vdwg.mxu0
      %541 = vst [vmem:[%s255] sm:$0xff] %v383
      %542 = vst [vmem:[%s255 + $0x8] sm:$0xff] %v388
      %543 = vst [vmem:[%s255 + $0x10] sm:$0xff] %v393
      %544 = vst [vmem:[%s255 + $0x18] sm:$0xff] %v398
      %545 = vst [vmem:[%s255 + $0x20] sm:$0xff] %v403
      %546 = vst [vmem:[%s255 + $0x28] sm:$0xff] %v408
      %547 = vst [vmem:[%s255 + $0x30] sm:$0xff] %v413
      %548 = vst [vmem:[%s255 + $0x38] sm:$0xff] %v418
      %549 = vst [vmem:[%s255 + $0x40] sm:$0xff] %v423
      %550 = vst [vmem:[%s255 + $0x48] sm:$0xff] %v428
      %551 = vst [vmem:[%s255 + $0x50] sm:$0xff] %v433
      %552 = vst [vmem:[%s255 + $0x58] sm:$0xff] %v438
      %553 = vst [vmem:[%s255 + $0x60] sm:$0xff] %v443
      %554 = vst [vmem:[%s255 + $0x68] sm:$0xff] %v448
      %555 = vst [vmem:[%s255 + $0x70] sm:$0xff] %v453
      %556 = vst [vmem:[%s255 + $0x78] sm:$0xff] %v458
      %557 = vst [vmem:[%s255 + $0x80] sm:$0xff] %v463
      %558 = vst [vmem:[%s255 + $0x88] sm:$0xff] %v468
      %559 = vst [vmem:[%s255 + $0x90] sm:$0xff] %v473
      %560 = vst [vmem:[%s255 + $0x98] sm:$0xff] %v478
      %561 = vst [vmem:[%s255 + $0xa0] sm:$0xff] %v483
      %562 = vst [vmem:[%s255 + $0xa8] sm:$0xff] %v488
      %563 = vst [vmem:[%s255 + $0xb0] sm:$0xff] %v493
      %564 = vst [vmem:[%s255 + $0xb8] sm:$0xff] %v498
      %565 = vst [vmem:[%s255 + $0xc0] sm:$0xff] %v503
      %566 = vst [vmem:[%s255 + $0xc8] sm:$0xff] %v508
      %567 = vst [vmem:[%s255 + $0xd0] sm:$0xff] %v513
      %568 = vst [vmem:[%s255 + $0xd8] sm:$0xff] %v518
      %569 = vst [vmem:[%s255 + $0xe0] sm:$0xff] %v523
      %570 = vst [vmem:[%s255 + $0xe8] sm:$0xff] %v528
      %571 = vst [vmem:[%s255 + $0xf0] sm:$0xff] %v533
      %572 = vst [vmem:[%s255 + $0xf8] sm:$0xff] %v538
      %v573 = vadd.f32 %v383, %v388
      %v574 = vadd.f32 %v573, %v393
      %v575 = vadd.f32 %v574, %v398
      %v576 = vadd.f32 %v575, %v403
      %v577 = vadd.f32 %v576, %v408
      %v578 = vadd.f32 %v577, %v413
      %v579 = vadd.f32 %v578, %v418
      %v580 = vadd.f32 %v579, %v423
      %v581 = vadd.f32 %v580, %v428
      %v582 = vadd.f32 %v581, %v433
      %v583 = vadd.f32 %v582, %v438
      %v584 = vadd.f32 %v583, %v443
      %v585 = vadd.f32 %v584, %v448
      %v586 = vadd.f32 %v585, %v453
      %v587 = vadd.f32 %v586, %v458
      %v588 = vadd.f32 %v587, %v463
      %v589 = vadd.f32 %v588, %v468
      %v590 = vadd.f32 %v589, %v473
      %v591 = vadd.f32 %v590, %v478
      %v592 = vadd.f32 %v591, %v483
      %v593 = vadd.f32 %v592, %v488
      %v594 = vadd.f32 %v593, %v493
      %v595 = vadd.f32 %v594, %v498
      %v596 = vadd.f32 %v595, %v503
      %v597 = vadd.f32 %v596, %v508
      %v598 = vadd.f32 %v597, %v513
      %v599 = vadd.f32 %v598, %v518
      %v600 = vadd.f32 %v599, %v523
      %v601 = vadd.f32 %v600, %v528
      %v602 = vadd.f32 %v601, %v533
      %v603 = vadd.f32 %v602, %v538
      %v604 = vrot.slane %v603, 4
      %v605 = vadd.f32 %v603, %v604
      %v606 = vrot.slane %v605, 2
      %v607 = vadd.f32 %v605, %v606
      %v608 = vrot.slane %v607, 1
      %v609 = vadd.f32 %v607, %v608
      %610 = vst [vmem:[%s261] sm:$0x1] %v609
      %v611 = vmul.f32 %v383, %v383
      %v612 = vmul.f32 %v388, %v388
      %v613 = vmul.f32 %v393, %v393
      %v614 = vmul.f32 %v398, %v398
      %v615 = vmul.f32 %v403, %v403
      %v616 = vmul.f32 %v408, %v408
      %v617 = vmul.f32 %v413, %v413
      %v618 = vmul.f32 %v418, %v418
      %v619 = vmul.f32 %v423, %v423
      %v620 = vmul.f32 %v428, %v428
      %v621 = vmul.f32 %v433, %v433
      %v622 = vmul.f32 %v438, %v438
      %v623 = vmul.f32 %v443, %v443
      %v624 = vmul.f32 %v448, %v448
      %v625 = vmul.f32 %v453, %v453
      %v626 = vmul.f32 %v458, %v458
      %v627 = vmul.f32 %v463, %v463
      %v628 = vmul.f32 %v468, %v468
      %v629 = vmul.f32 %v473, %v473
      %v630 = vmul.f32 %v478, %v478
      %v631 = vmul.f32 %v483, %v483
      %v632 = vmul.f32 %v488, %v488
      %v633 = vmul.f32 %v493, %v493
      %v634 = vmul.f32 %v498, %v498
      %v635 = vmul.f32 %v503, %v503
      %v636 = vmul.f32 %v508, %v508
      %v637 = vmul.f32 %v513, %v513
      %v638 = vmul.f32 %v518, %v518
      %v639 = vmul.f32 %v523, %v523
      %v640 = vmul.f32 %v528, %v528
      %v641 = vmul.f32 %v533, %v533
      %v642 = vmul.f32 %v538, %v538
      %v643 = vadd.f32 %v611, %v612
      %v644 = vadd.f32 %v643, %v613
      %v645 = vadd.f32 %v644, %v614
      %v646 = vadd.f32 %v645, %v615
      %v647 = vadd.f32 %v646, %v616
      %v648 = vadd.f32 %v647, %v617
      %v649 = vadd.f32 %v648, %v618
      %v650 = vadd.f32 %v649, %v619
      %v651 = vadd.f32 %v650, %v620
      %v652 = vadd.f32 %v651, %v621
      %v653 = vadd.f32 %v652, %v622
      %v654 = vadd.f32 %v653, %v623
      %v655 = vadd.f32 %v654, %v624
      %v656 = vadd.f32 %v655, %v625
      %v657 = vadd.f32 %v656, %v626
      %v658 = vadd.f32 %v657, %v627
      %v659 = vadd.f32 %v658, %v628
      %v660 = vadd.f32 %v659, %v629
      %v661 = vadd.f32 %v660, %v630
      %v662 = vadd.f32 %v661, %v631
      %v663 = vadd.f32 %v662, %v632
      %v664 = vadd.f32 %v663, %v633
      %v665 = vadd.f32 %v664, %v634
      %v666 = vadd.f32 %v665, %v635
      %v667 = vadd.f32 %v666, %v636
      %v668 = vadd.f32 %v667, %v637
      %v669 = vadd.f32 %v668, %v638
      %v670 = vadd.f32 %v669, %v639
      %v671 = vadd.f32 %v670, %v640
      %v672 = vadd.f32 %v671, %v641
      %v673 = vadd.f32 %v672, %v642
      %v674 = vrot.slane %v673, 4
      %v675 = vadd.f32 %v673, %v674
      %v676 = vrot.slane %v675, 2
      %v677 = vadd.f32 %v675, %v676
      %v678 = vrot.slane %v677, 1
      %v679 = vadd.f32 %v677, %v678
      %680 = vst [vmem:[%s267] sm:$0x1] %v679
      %p681 = scmp.lt.s32.totalorder %s21, 1
      %s682 = scalar_select %p681, %s21, 1
      %p683 = scmp.lt.s32.totalorder %s20, 0
      %s684 = scalar_select %p683, %s20, 0
      %s685 = smul.addr %s682, 32
      %s686 = sadd.s32 %s684, %s685
      %s687 = smul.addr %s686, 8
      %s688 = scalar_lea.vmem %s2, %s687
      %p689 = scmp.lt.s32.totalorder %s21, 1
      %s690 = scalar_select %p689, %s21, 1
      %p691 = scmp.lt.s32.totalorder %s20, 0
      %s692 = scalar_select %p691, %s20, 0
      %s693 = sadd.s32 %s692, %s690
      %s694 = scalar_lea.vmem %s3, %s693
      %p695 = scmp.lt.s32.totalorder %s21, 1
      %s696 = scalar_select %p695, %s21, 1
      %p697 = scmp.lt.s32.totalorder %s20, 0
      %s698 = scalar_select %p697, %s20, 0
      %s699 = sadd.s32 %s698, %s696
      %s700 = scalar_lea.vmem %s4, %s699
      // Predicated region
      $region29: #{residual_forward.3} parent=27 // pred_check
        %p701 = pneg %p100
      $region30: #{residual_forward.3} parent=27 // pred_check_branch
        %703 = sbr.rel (%p701) target = $region32
      $region31: #{residual_forward.3} parent=27 // pred_region
        _
      $region32: #{residual_forward.3} parent=27 // pred_fallthru
        _
      // Predicated region
      $region33: #{residual_forward.3} parent=27 // pred_check
        %p704 = pneg %p128
      $region34: #{residual_forward.3} parent=27 // pred_check_branch
        %706 = sbr.rel (%p704) target = $region36
      $region35: #{residual_forward.3} parent=27 // pred_region
        _
      $region36: #{residual_forward.3} parent=27 // pred_fallthru
        _
      // Predicated region
      $region37: #{residual_forward.3} parent=27 // pred_check
        %p707 = pneg %p156
      $region38: #{residual_forward.3} parent=27 // pred_check_branch
        %709 = sbr.rel (%p707) target = $region40
      $region39: #{residual_forward.3} parent=27 // pred_region
        _
      $region40: #{residual_forward.3} parent=27 // pred_fallthru
        _
    $region28: #{residual_forward.3} parent=5 // pred_fallthru
      _
    %p710 = scmp.le.s32.totalorder 2, %s11
    // Predicated region
    $region41: #{residual_forward.3} parent=5 // pred_check
      %p711 = pneg %p710
    $region42: #{residual_forward.3} parent=5 // pred_check_branch
      %713 = sbr.rel (%p711) target = $region44
    $region43: #{residual_forward.3} parent=5 // pred_region
      %s714 = ssub.s32 %s11, 2
      // Predicated region
      $region45: #{residual_forward.3} parent=43 // pred_check
        %p715 = pneg %p106
      $region46: #{residual_forward.3} parent=43 // pred_check_branch
        %717 = sbr.rel (%p715) target = $region48
      $region47: #{residual_forward.3} parent=43 // pred_region
        %p718 = scmp.lt.s32.totalorder %s23, 1
        %s719 = scalar_select %p718, %s23, 1
        %p720 = scmp.lt.s32.totalorder %s22, 0
        %s721 = scalar_select %p720, %s22, 0
        %s722 = smul.addr %s719, 32
        %s723 = sadd.s32 %s721, %s722
        %s724 = smul.addr %s723, 8
        %s725 = scalar_lea.vmem %s2, %s724
      $region48: #{residual_forward.3} parent=43 // pred_fallthru
        _
      // Predicated region
      $region49: #{residual_forward.3} parent=43 // pred_check
        %p726 = pneg %p134
      $region50: #{residual_forward.3} parent=43 // pred_check_branch
        %728 = sbr.rel (%p726) target = $region52
      $region51: #{residual_forward.3} parent=43 // pred_region
        %p729 = scmp.lt.s32.totalorder %s23, 1
        %s730 = scalar_select %p729, %s23, 1
        %p731 = scmp.lt.s32.totalorder %s22, 0
        %s732 = scalar_select %p731, %s22, 0
        %s733 = sadd.s32 %s732, %s730
        %s734 = scalar_lea.vmem %s3, %s733
      $region52: #{residual_forward.3} parent=43 // pred_fallthru
        _
      // Predicated region
      $region53: #{residual_forward.3} parent=43 // pred_check
        %p735 = pneg %p162
      $region54: #{residual_forward.3} parent=43 // pred_check_branch
        %737 = sbr.rel (%p735) target = $region56
      $region55: #{residual_forward.3} parent=43 // pred_region
        %p738 = scmp.lt.s32.totalorder %s23, 1
        %s739 = scalar_select %p738, %s23, 1
        %p740 = scmp.lt.s32.totalorder %s22, 0
        %s741 = scalar_select %p740, %s22, 0
        %s742 = sadd.s32 %s741, %s739
        %s743 = scalar_lea.vmem %s4, %s742
      $region56: #{residual_forward.3} parent=43 // pred_fallthru
        _
    $region44: #{residual_forward.3} parent=5 // pred_fallthru
      _
  $region6: #{residual_forward.3} parent=0 // loop_footer
    %s15 = sadd.s32 1, %s11
  $region7: #{residual_forward.3} parent=0 // loop_footer_branch
    %10 = sbr.rel target = $region3
  $region8: #{residual_forward.3} parent=0 // loop_exit
    _

// kernel: residual_forward.5
$region0: #{residual_forward.5}
  #allocation0 [shape = 'u32[]', space=smem, size = 0x4, offset = 0x4, fixed_abs, tag = 'smem constant byte address 0x4 - core index']
  #allocation1 [shape = 'u32[144,128]{1,0:T(1,128)}', space=vmem, size = 0x12000, scoped, tag = 'internal scratch']
  %s0 = inlined_call_operand.vmem [shape: f32[512,128], index: 0, kind: input, shape index: {}]
  %s1 = inlined_call_operand.vmem [shape: f32[1,128], index: 1, kind: input, shape index: {}]
  %s2 = inlined_call_operand.vmem [shape: f32[1,128], index: 2, kind: input, shape index: {}]
  %s3 = inlined_call_operand.vmem [shape: f32[512,128], index: 3, kind: input, shape index: {}]
  %s4 = inlined_call_operand.vmem [shape: f32[128,128], index: 4, kind: input, shape index: {}]
  %s5 = inlined_call_operand.vmem [shape: f32[1,128], index: 5, kind: input, shape index: {}]
  %s6 = inlined_call_operand.vmem [shape: f32[512,128], index: 6, kind: output, shape index: {}]
  %s7 = sld [smem:[#allocation0]]
  $region57: #{residual_forward.5} parent=0
    _
  %s9 = ssub.s32 1, %s7
  %s10 = scalar_select 0, %s9, %s7
  loop: start=0, step=1, limit=4
  $region2: #{residual_forward.5} parent=0 // loop_pre_header
    _
  $region3: #{residual_forward.5} parent=0 // loop_header
    %s12 = sphi 0, %s16
    %p13 = scmp.ge.s32.totalorder %s12, 4
    %s22 = sphi 0, %s24
    %s25 = sphi 0, %s22
    %s26 = sphi 0, %s25
    %s42 = sphi 0, %s26
    %s46 = sphi 0, %s46
    %s48 = sphi 0, %s46
    %s49 = sphi 0, %s48
    %s63 = sphi 0, %s49
    %s67 = sphi 0, %s67
    %s69 = sphi 0, %s67
    %s70 = sphi 0, %s69
    %s84 = sphi 0, %s70
    %s90 = sphi 0, %s92
    %s93 = sphi 0, %s90
    %s94 = sphi 0, %s93
    %s110 = sphi 0, %s94
    %s114 = sphi 0, %s114
    %s116 = sphi 0, %s114
    %s117 = sphi 0, %s116
    %s131 = sphi 0, %s117
    %s135 = sphi 0, %s135
    %s137 = sphi 0, %s135
    %s138 = sphi 0, %s137
    %s152 = sphi 0, %s138
    %s158 = sphi 0, %s160
    %s161 = sphi 0, %s158
    %s162 = sphi 0, %s161
    %s178 = sphi 0, %s162
  $region4: #{residual_forward.5} parent=0 // loop_header_branch
    %15 = sbr.rel (%p13) target = $region8
  $region5: #{residual_forward.5} parent=0 // loop_body
    %s17 = ssub.s32 %s12, 1
    %s18 = ssub.s32 %s12, 2
    %s19 = sadd.s32 %s12, 1
    %s20 = ssub.s32 %s12, %s19
    %p21 = scmp.eq.s32.totalorder %s20, 0
    %s23 = sadd.s32 %s22, 1
    %s24 = scalar_select %p21, %s22, %s23
    %p27 = pneg %p21
    %p28 = scmp.eq.s32.totalorder %s12, 1
    %p29 = por %p27, %p28
    %p30 = scmp.ne.s32.totalorder %s22, %s25
    %p31 = scmp.eq.s32.totalorder %s12, 0
    %p32 = por %p30, %p31
    %p33 = scmp.ne.s32.totalorder %s22, %s25
    %p34 = scmp.eq.s32.totalorder %s17, 1
    %p35 = por %p33, %p34
    %p36 = scmp.ne.s32.totalorder %s25, %s26
    %p37 = scmp.eq.s32.totalorder %s17, 0
    %p38 = por %p36, %p37
    %p39 = scmp.ne.s32.totalorder %s25, %s26
    %p40 = scmp.eq.s32.totalorder %s18, 1
    %p41 = por %p39, %p40
    %p43 = scmp.ne.s32.totalorder %s26, %s42
    %p44 = scmp.eq.s32.totalorder %s18, 0
    %p45 = por %p43, %p44
    %s47 = sadd.s32 %s46, 1
    %p50 = scmp.eq.s32.totalorder %s12, 1
    %p51 = scmp.ne.s32.totalorder %s46, %s48
    %p52 = scmp.eq.s32.totalorder %s12, 0
    %p53 = por %p51, %p52
    %p54 = scmp.ne.s32.totalorder %s46, %s48
    %p55 = scmp.eq.s32.totalorder %s17, 1
    %p56 = por %p54, %p55
    %p57 = scmp.ne.s32.totalorder %s48, %s49
    %p58 = scmp.eq.s32.totalorder %s17, 0
    %p59 = por %p57, %p58
    %p60 = scmp.ne.s32.totalorder %s48, %s49
    %p61 = scmp.eq.s32.totalorder %s18, 1
    %p62 = por %p60, %p61
    %p64 = scmp.ne.s32.totalorder %s49, %s63
    %p65 = scmp.eq.s32.totalorder %s18, 0
    %p66 = por %p64, %p65
    %s68 = sadd.s32 %s67, 1
    %p71 = scmp.eq.s32.totalorder %s12, 1
    %p72 = scmp.ne.s32.totalorder %s67, %s69
    %p73 = scmp.eq.s32.totalorder %s12, 0
    %p74 = por %p72, %p73
    %p75 = scmp.ne.s32.totalorder %s67, %s69
    %p76 = scmp.eq.s32.totalorder %s17, 1
    %p77 = por %p75, %p76
    %p78 = scmp.ne.s32.totalorder %s69, %s70
    %p79 = scmp.eq.s32.totalorder %s17, 0
    %p80 = por %p78, %p79
    %p81 = scmp.ne.s32.totalorder %s69, %s70
    %p82 = scmp.eq.s32.totalorder %s18, 1
    %p83 = por %p81, %p82
    %p85 = scmp.ne.s32.totalorder %s70, %s84
    %p86 = scmp.eq.s32.totalorder %s18, 0
    %p87 = por %p85, %p86
    %s88 = ssub.s32 %s12, %s19
    %p89 = scmp.eq.s32.totalorder %s88, 0
    %s91 = sadd.s32 %s90, 1
    %s92 = scalar_select %p89, %s90, %s91
    %p95 = pneg %p89
    %p96 = scmp.eq.s32.totalorder %s12, 1
    %p97 = por %p95, %p96
    %p98 = scmp.ne.s32.totalorder %s90, %s93
    %p99 = scmp.eq.s32.totalorder %s12, 0
    %p100 = por %p98, %p99
    %p101 = scmp.ne.s32.totalorder %s90, %s93
    %p102 = scmp.eq.s32.totalorder %s17, 1
    %p103 = por %p101, %p102
    %p104 = scmp.ne.s32.totalorder %s93, %s94
    %p105 = scmp.eq.s32.totalorder %s17, 0
    %p106 = por %p104, %p105
    %p107 = scmp.ne.s32.totalorder %s93, %s94
    %p108 = scmp.eq.s32.totalorder %s18, 1
    %p109 = por %p107, %p108
    %p111 = scmp.ne.s32.totalorder %s94, %s110
    %p112 = scmp.eq.s32.totalorder %s18, 0
    %p113 = por %p111, %p112
    %s115 = sadd.s32 %s114, 1
    %p118 = scmp.eq.s32.totalorder %s12, 1
    %p119 = scmp.ne.s32.totalorder %s114, %s116
    %p120 = scmp.eq.s32.totalorder %s12, 0
    %p121 = por %p119, %p120
    %p122 = scmp.ne.s32.totalorder %s114, %s116
    %p123 = scmp.eq.s32.totalorder %s17, 1
    %p124 = por %p122, %p123
    %p125 = scmp.ne.s32.totalorder %s116, %s117
    %p126 = scmp.eq.s32.totalorder %s17, 0
    %p127 = por %p125, %p126
    %p128 = scmp.ne.s32.totalorder %s116, %s117
    %p129 = scmp.eq.s32.totalorder %s18, 1
    %p130 = por %p128, %p129
    %p132 = scmp.ne.s32.totalorder %s117, %s131
    %p133 = scmp.eq.s32.totalorder %s18, 0
    %p134 = por %p132, %p133
    %s136 = sadd.s32 %s135, 1
    %p139 = scmp.eq.s32.totalorder %s12, 1
    %p140 = scmp.ne.s32.totalorder %s135, %s137
    %p141 = scmp.eq.s32.totalorder %s12, 0
    %p142 = por %p140, %p141
    %p143 = scmp.ne.s32.totalorder %s135, %s137
    %p144 = scmp.eq.s32.totalorder %s17, 1
    %p145 = por %p143, %p144
    %p146 = scmp.ne.s32.totalorder %s137, %s138
    %p147 = scmp.eq.s32.totalorder %s17, 0
    %p148 = por %p146, %p147
    %p149 = scmp.ne.s32.totalorder %s137, %s138
    %p150 = scmp.eq.s32.totalorder %s18, 1
    %p151 = por %p149, %p150
    %p153 = scmp.ne.s32.totalorder %s138, %s152
    %p154 = scmp.eq.s32.totalorder %s18, 0
    %p155 = por %p153, %p154
    %s156 = ssub.s32 %s12, %s19
    %p157 = scmp.eq.s32.totalorder %s156, 0
    %s159 = sadd.s32 %s158, 1
    %s160 = scalar_select %p157, %s158, %s159
    %p163 = pneg %p157
    %p164 = scmp.eq.s32.totalorder %s12, 1
    %p165 = por %p163, %p164
    %p166 = scmp.ne.s32.totalorder %s158, %s161
    %p167 = scmp.eq.s32.totalorder %s12, 0
    %p168 = por %p166, %p167
    %p169 = scmp.ne.s32.totalorder %s158, %s161
    %p170 = scmp.eq.s32.totalorder %s17, 1
    %p171 = por %p169, %p170
    %p172 = scmp.ne.s32.totalorder %s161, %s162
    %p173 = scmp.eq.s32.totalorder %s17, 0
    %p174 = por %p172, %p173
    %p175 = scmp.ne.s32.totalorder %s161, %s162
    %p176 = scmp.eq.s32.totalorder %s18, 1
    %p177 = por %p175, %p176
    %p179 = scmp.ne.s32.totalorder %s162, %s178
    %p180 = scmp.eq.s32.totalorder %s18, 0
    %p181 = por %p179, %p180
    %p182 = scmp.le.s32.totalorder 1, %s12
    %p183 = scmp.lt.s32.totalorder %s12, 3
    %p184 = pnand %p182, %p183
    %p185 = pneg %p184
    // Predicated region
    $region9: #{residual_forward.5} parent=5 // pred_check
      _
    $region10: #{residual_forward.5} parent=5 // pred_check_branch
      %187 = sbr.rel (%p184) target = $region12
    $region11: #{residual_forward.5} parent=5 // pred_region
      %s188 = ssub.s32 %s12, 1
      // Predicated region
      $region13: #{residual_forward.5} parent=11 // pred_check
        %p189 = pneg %p59
      $region14: #{residual_forward.5} parent=11 // pred_check_branch
        %191 = sbr.rel (%p189) target = $region16
      $region15: #{residual_forward.5} parent=11 // pred_region
        _
      $region16: #{residual_forward.5} parent=11 // pred_fallthru
        _
      // Predicated region
      $region17: #{residual_forward.5} parent=11 // pred_check
        %p192 = pneg %p80
      $region18: #{residual_forward.5} parent=11 // pred_check_branch
        %194 = sbr.rel (%p192) target = $region20
      $region19: #{residual_forward.5} parent=11 // pred_region
        _
      $region20: #{residual_forward.5} parent=11 // pred_fallthru
        _
      // Predicated region
      $region21: #{residual_forward.5} parent=11 // pred_check
        %p195 = pneg %p127
      $region22: #{residual_forward.5} parent=11 // pred_check_branch
        %197 = sbr.rel (%p195) target = $region24
      $region23: #{residual_forward.5} parent=11 // pred_region
        _
      $region24: #{residual_forward.5} parent=11 // pred_fallthru
        _
      // Predicated region
      $region25: #{residual_forward.5} parent=11 // pred_check
        %p198 = pneg %p148
      $region26: #{residual_forward.5} parent=11 // pred_check_branch
        %200 = sbr.rel (%p198) target = $region28
      $region27: #{residual_forward.5} parent=11 // pred_region
        _
      $region28: #{residual_forward.5} parent=11 // pred_fallthru
        _
    $region12: #{residual_forward.5} parent=5 // pred_fallthru
      _
    %p201 = scmp.lt.s32.totalorder %s12, 2
    // Predicated region
    $region29: #{residual_forward.5} parent=5 // pred_check
      %p202 = pneg %p201
    $region30: #{residual_forward.5} parent=5 // pred_check_branch
      %204 = sbr.rel (%p202) target = $region32
    $region31: #{residual_forward.5} parent=5 // pred_region
      // Predicated region
      $region33: #{residual_forward.5} parent=31 // pred_check
        %p205 = pneg %p32
      $region34: #{residual_forward.5} parent=31 // pred_check_branch
        %207 = sbr.rel (%p205) target = $region36
      $region35: #{residual_forward.5} parent=31 // pred_region
        %s208 = smul.u32 32, %s12
        %p209 = scmp.lt.s32.totalorder %s208, 63
        %s210 = scalar_select %p209, %s208, 63
        %s211 = smul.addr %s210, 8
        %s212 = scalar_lea.vmem %s0, %s211
        %s213 = smul.u32 32, %s12
      $region36: #{residual_forward.5} parent=31 // pred_fallthru
        _
      // Predicated region
      $region37: #{residual_forward.5} parent=31 // pred_check
        %p214 = pneg %p100
      $region38: #{residual_forward.5} parent=31 // pred_check_branch
        %216 = sbr.rel (%p214) target = $region40
      $region39: #{residual_forward.5} parent=31 // pred_region
        %s217 = smul.u32 32, %s12
        %p218 = scmp.lt.s32.totalorder %s217, 63
        %s219 = scalar_select %p218, %s217, 63
        %s220 = smul.addr %s219, 8
        %s221 = scalar_lea.vmem %s3, %s220
        %s222 = smul.u32 32, %s12
      $region40: #{residual_forward.5} parent=31 // pred_fallthru
        _
    $region32: #{residual_forward.5} parent=5 // pred_fallthru
      _
    %p223 = scmp.le.s32.totalorder 1, %s12
    %p224 = scmp.lt.s32.totalorder %s12, 3
    %p225 = pnand %p223, %p224
    %p226 = pneg %p225
    // Predicated region
    $region41: #{residual_forward.5} parent=5 // pred_check
      _
    $region42: #{residual_forward.5} parent=5 // pred_check_branch
      %228 = sbr.rel (%p225) target = $region44
    $region43: #{residual_forward.5} parent=5 // pred_region
      %s229 = ssub.s32 %s12, 1
      %s230 = smul.u32 32, %s17
      %p231 = scmp.lt.s32.totalorder %s230, 63
      %s232 = scalar_select %p231, %s230, 63
      %s233 = smul.addr %s232, 8
      %s234 = scalar_lea.vmem %s0, %s233
      %p235 = pneg %p38
      %p236 = pneg %p35
      %p237 = pneg %p59
      %p238 = pneg %p56
      %p239 = pneg %p80
      %p240 = pneg %p77
      %s241 = smul.u32 32, %s17
      %p242 = scmp.lt.s32.totalorder %s241, 63
      %s243 = scalar_select %p242, %s241, 63
      %s244 = smul.addr %s243, 8
      %s245 = scalar_lea.vmem %s3, %s244
      %p246 = pneg %p106
      %p247 = pneg %p103
      %p248 = pneg %p127
      %p249 = pneg %p124
      %p250 = pneg %p148
      %p251 = pneg %p145
      %p252 = pneg %p174
      %p253 = pneg %p171
      %s254 = smul.u32 32, %s17
      %p255 = scmp.lt.s32.totalorder %s254, 63
      %s256 = scalar_select %p255, %s254, 63
      %s257 = smul.addr %s256, 8
      %s258 = scalar_lea.vmem %s6, %s257
      %s259 = smul.u32 32, %s17
      %p260 = scmp.lt.s32.totalorder %s259, 63
      %s261 = scalar_select %p260, %s259, 63
      %s262 = smul.addr %s261, 8
      %s263 = scalar_lea.vmem %s0, %s262
      %s264 = smul.u32 32, %s17
      %s265 = smul.u32 32, %s17
      %p266 = scmp.lt.s32.totalorder %s265, 63
      %s267 = scalar_select %p266, %s265, 63
      %s268 = smul.addr %s267, 8
      %s269 = scalar_lea.vmem %s3, %s268
      %s270 = smul.u32 32, %s17
      %s271 = smul.u32 32, %s17
      %p272 = scmp.lt.s32.totalorder %s271, 63
      %s273 = scalar_select %p272, %s271, 63
      %s274 = smul.addr %s273, 8
      %s275 = scalar_lea.vmem %s6, %s274
      %s276 = smul.u32 32, %s17
      %v277 = vld [vmem:[%s269] sm:$0xff]
      %v278 = vld [vmem:[%s269 + $0x8] sm:$0xff]
      %v279 = vld [vmem:[%s269 + $0x10] sm:$0xff]
      %v280 = vld [vmem:[%s269 + $0x18] sm:$0xff]
      %v281 = vld [vmem:[%s269 + $0x20] sm:$0xff]
      %v282 = vld [vmem:[%s269 + $0x28] sm:$0xff]
      %v283 = vld [vmem:[%s269 + $0x30] sm:$0xff]
      %v284 = vld [vmem:[%s269 + $0x38] sm:$0xff]
      %v285 = vld [vmem:[%s269 + $0x40] sm:$0xff]
      %v286 = vld [vmem:[%s269 + $0x48] sm:$0xff]
      %v287 = vld [vmem:[%s269 + $0x50] sm:$0xff]
      %v288 = vld [vmem:[%s269 + $0x58] sm:$0xff]
      %v289 = vld [vmem:[%s269 + $0x60] sm:$0xff]
      %v290 = vld [vmem:[%s269 + $0x68] sm:$0xff]
      %v291 = vld [vmem:[%s269 + $0x70] sm:$0xff]
      %v292 = vld [vmem:[%s269 + $0x78] sm:$0xff]
      %v293 = vld [vmem:[%s269 + $0x80] sm:$0xff]
      %v294 = vld [vmem:[%s269 + $0x88] sm:$0xff]
      %v295 = vld [vmem:[%s269 + $0x90] sm:$0xff]
      %v296 = vld [vmem:[%s269 + $0x98] sm:$0xff]
      %v297 = vld [vmem:[%s269 + $0xa0] sm:$0xff]
      %v298 = vld [vmem:[%s269 + $0xa8] sm:$0xff]
      %v299 = vld [vmem:[%s269 + $0xb0] sm:$0xff]
      %v300 = vld [vmem:[%s269 + $0xb8] sm:$0xff]
      %v301 = vld [vmem:[%s269 + $0xc0] sm:$0xff]
      %v302 = vld [vmem:[%s269 + $0xc8] sm:$0xff]
      %v303 = vld [vmem:[%s269 + $0xd0] sm:$0xff]
      %v304 = vld [vmem:[%s269 + $0xd8] sm:$0xff]
      %v305 = vld [vmem:[%s269 + $0xe0] sm:$0xff]
      %v306 = vld [vmem:[%s269 + $0xe8] sm:$0xff]
      %v307 = vld [vmem:[%s269 + $0xf0] sm:$0xff]
      %v308 = vld [vmem:[%s269 + $0xf8] sm:$0xff]
      %v309 = vld [vmem:[%s4] sm:$0xff]
      %v310 = vld [vmem:[%s4 + $0x8] sm:$0xff]
      %v311 = vld [vmem:[%s4 + $0x10] sm:$0xff]
      %v312 = vld [vmem:[%s4 + $0x18] sm:$0xff]
      %v313 = vld [vmem:[%s4 + $0x20] sm:$0xff]
      %v314 = vld [vmem:[%s4 + $0x28] sm:$0xff]
      %v315 = vld [vmem:[%s4 + $0x30] sm:$0xff]
      %v316 = vld [vmem:[%s4 + $0x38] sm:$0xff]
      %v317 = vld [vmem:[%s4 + $0x40] sm:$0xff]
      %v318 = vld [vmem:[%s4 + $0x48] sm:$0xff]
      %v319 = vld [vmem:[%s4 + $0x50] sm:$0xff]
      %v320 = vld [vmem:[%s4 + $0x58] sm:$0xff]
      %v321 = vld [vmem:[%s4 + $0x60] sm:$0xff]
      %v322 = vld [vmem:[%s4 + $0x68] sm:$0xff]
      %v323 = vld [vmem:[%s4 + $0x70] sm:$0xff]
      %v324 = vld [vmem:[%s4 + $0x78] sm:$0xff]
      %v325 = vld [vmem:[%s5] sm:$0x1]
      %v327 = vlaneseq
      %v328 = vshrl.u32 %v327, 7
      %v329 = vsub.s32 0, %v328
      %v330 = vrot.slane %v325, %v329
      %332 = vmatprep.subr.mxu0 0.0
      %333 = vmatpush1.msra.mxu0 %v324
      %334 = vmatprep.subr.mxu0 0.0
      %335 = vmatpush1.msra.mxu0 %v323
      %336 = vmatprep.subr.mxu0 0.0
      %337 = vmatpush1.msra.mxu0 %v322
      %338 = vmatprep.subr.mxu0 0.0
      %339 = vmatpush1.msra.mxu0 %v321
      %340 = vmatprep.subr.mxu0 0.0
      %341 = vmatpush1.msra.mxu0 %v320
      %342 = vmatprep.subr.mxu0 0.0
      %343 = vmatpush1.msra.mxu0 %v319
      %344 = vmatprep.subr.mxu0 0.0
      %345 = vmatpush1.msra.mxu0 %v318
      %346 = vmatprep.subr.mxu0 0.0
      %347 = vmatpush1.msra.mxu0 %v317
      %348 = vmatprep.subr.mxu0 0.0
      %349 = vmatpush1.msra.mxu0 %v316
      %350 = vmatprep.subr.mxu0 0.0
      %351 = vmatpush1.msra.mxu0 %v315
      %352 = vmatprep.subr.mxu0 0.0
      %353 = vmatpush1.msra.mxu0 %v314
      %354 = vmatprep.subr.mxu0 0.0
      %355 = vmatpush1.msra.mxu0 %v313
      %356 = vmatprep.subr.mxu0 0.0
      %357 = vmatpush1.msra.mxu0 %v312
      %358 = vmatprep.subr.mxu0 0.0
      %359 = vmatpush1.msra.mxu0 %v311
      %360 = vmatprep.subr.mxu0 0.0
      %361 = vmatpush1.msra.mxu0 %v310
      %362 = vmatprep.subr.mxu0 0.0
      %363 = vmatpush1.msra.mxu0 %v309
      %364 = vmatprep.subr.mxu0 0.0
      %365 = vmatpush2.msra.mxu0 0.0
      %366 = vmatprep.subr.mxu0 0.0
      %367 = vmatpush2.msra.mxu0 0.0
      %368 = vmatprep.subr.mxu0 0.0
      %369 = vmatpush2.msra.mxu0 0.0
      %370 = vmatprep.subr.mxu0 0.0
      %371 = vmatpush2.msra.mxu0 0.0
      %372 = vmatprep.subr.mxu0 0.0
      %373 = vmatpush2.msra.mxu0 0.0
      %374 = vmatprep.subr.mxu0 0.0
      %375 = vmatpush2.msra.mxu0 0.0
      %376 = vmatprep.subr.mxu0 0.0
      %377 = vmatpush2.msra.mxu0 0.0
      %378 = vmatprep.subr.mxu0 0.0
      %379 = vmatpush2.msra.mxu0 0.0
      %380 = vmatprep.subr.mxu0 0.0
      %381 = vmatpush2.msra.mxu0 0.0
      %382 = vmatprep.subr.mxu0 0.0
      %383 = vmatpush2.msra.mxu0 0.0
      %384 = vmatprep.subr.mxu0 0.0
      %385 = vmatpush2.msra.mxu0 0.0
      %386 = vmatprep.subr.mxu0 0.0
      %387 = vmatpush2.msra.mxu0 0.0
      %388 = vmatprep.subr.mxu0 0.0
      %389 = vmatpush2.msra.mxu0 0.0
      %390 = vmatprep.subr.mxu0 0.0
      %391 = vmatpush2.msra.mxu0 0.0
      %392 = vmatprep.subr.mxu0 0.0
      %393 = vmatpush2.msra.mxu0 0.0
      %394 = vmatprep.subr.mxu0 0.0
      %395 = vmatpush2.msra.mxu0 0.0
      %396 = vmatprep.mubr.f32.mxu0 0.0
      %397 = vmatmul.mubr.f32.gmra.mxu0 %v277
      %v398 = vpop.f32.mrf.mxu0
      %v399 = vadd.f32 %v330, %v398
      %v400 = vpop.f32.mrf.mxu0
      %401 = vmatprep.mubr.f32.mxu0 0.0
      %402 = vmatmul.mubr.f32.gmra.mxu0 %v278
      %v403 = vpop.f32.mrf.mxu0
      %v404 = vadd.f32 %v330, %v403
      %v405 = vpop.f32.mrf.mxu0
      %406 = vmatprep.mubr.f32.mxu0 0.0
      %407 = vmatmul.mubr.f32.gmra.mxu0 %v279
      %v408 = vpop.f32.mrf.mxu0
      %v409 = vadd.f32 %v330, %v408
      %v410 = vpop.f32.mrf.mxu0
      %411 = vmatprep.mubr.f32.mxu0 0.0
      %412 = vmatmul.mubr.f32.gmra.mxu0 %v280
      %v413 = vpop.f32.mrf.mxu0
      %v414 = vadd.f32 %v330, %v413
      %v415 = vpop.f32.mrf.mxu0
      %416 = vmatprep.mubr.f32.mxu0 0.0
      %417 = vmatmul.mubr.f32.gmra.mxu0 %v281
      %v418 = vpop.f32.mrf.mxu0
      %v419 = vadd.f32 %v330, %v418
      %v420 = vpop.f32.mrf.mxu0
      %421 = vmatprep.mubr.f32.mxu0 0.0
      %422 = vmatmul.mubr.f32.gmra.mxu0 %v282
      %v423 = vpop.f32.mrf.mxu0
      %v424 = vadd.f32 %v330, %v423
      %v425 = vpop.f32.mrf.mxu0
      %426 = vmatprep.mubr.f32.mxu0 0.0
      %427 = vmatmul.mubr.f32.gmra.mxu0 %v283
      %v428 = vpop.f32.mrf.mxu0
      %v429 = vadd.f32 %v330, %v428
      %v430 = vpop.f32.mrf.mxu0
      %431 = vmatprep.mubr.f32.mxu0 0.0
      %432 = vmatmul.mubr.f32.gmra.mxu0 %v284
      %v433 = vpop.f32.mrf.mxu0
      %v434 = vadd.f32 %v330, %v433
      %v435 = vpop.f32.mrf.mxu0
      %436 = vmatprep.mubr.f32.mxu0 0.0
      %437 = vmatmul.mubr.f32.gmra.mxu0 %v285
      %v438 = vpop.f32.mrf.mxu0
      %v439 = vadd.f32 %v330, %v438
      %v440 = vpop.f32.mrf.mxu0
      %441 = vmatprep.mubr.f32.mxu0 0.0
      %442 = vmatmul.mubr.f32.gmra.mxu0 %v286
      %v443 = vpop.f32.mrf.mxu0
      %v444 = vadd.f32 %v330, %v443
      %v445 = vpop.f32.mrf.mxu0
      %446 = vmatprep.mubr.f32.mxu0 0.0
      %447 = vmatmul.mubr.f32.gmra.mxu0 %v287
      %v448 = vpop.f32.mrf.mxu0
      %v449 = vadd.f32 %v330, %v448
      %v450 = vpop.f32.mrf.mxu0
      %451 = vmatprep.mubr.f32.mxu0 0.0
      %452 = vmatmul.mubr.f32.gmra.mxu0 %v288
      %v453 = vpop.f32.mrf.mxu0
      %v454 = vadd.f32 %v330, %v453
      %v455 = vpop.f32.mrf.mxu0
      %456 = vmatprep.mubr.f32.mxu0 0.0
      %457 = vmatmul.mubr.f32.gmra.mxu0 %v289
      %v458 = vpop.f32.mrf.mxu0
      %v459 = vadd.f32 %v330, %v458
      %v460 = vpop.f32.mrf.mxu0
      %461 = vmatprep.mubr.f32.mxu0 0.0
      %462 = vmatmul.mubr.f32.gmra.mxu0 %v290
      %v463 = vpop.f32.mrf.mxu0
      %v464 = vadd.f32 %v330, %v463
      %v465 = vpop.f32.mrf.mxu0
      %466 = vmatprep.mubr.f32.mxu0 0.0
      %467 = vmatmul.mubr.f32.gmra.mxu0 %v291
      %v468 = vpop.f32.mrf.mxu0
      %v469 = vadd.f32 %v330, %v468
      %v470 = vpop.f32.mrf.mxu0
      %471 = vmatprep.mubr.f32.mxu0 0.0
      %472 = vmatmul.mubr.f32.gmra.mxu0 %v292
      %v473 = vpop.f32.mrf.mxu0
      %v474 = vadd.f32 %v330, %v473
      %v475 = vpop.f32.mrf.mxu0
      %476 = vmatprep.mubr.f32.mxu0 0.0
      %477 = vmatmul.mubr.f32.gmra.mxu0 %v293
      %v478 = vpop.f32.mrf.mxu0
      %v479 = vadd.f32 %v330, %v478
      %v480 = vpop.f32.mrf.mxu0
      %481 = vmatprep.mubr.f32.mxu0 0.0
      %482 = vmatmul.mubr.f32.gmra.mxu0 %v294
      %v483 = vpop.f32.mrf.mxu0
      %v484 = vadd.f32 %v330, %v483
      %v485 = vpop.f32.mrf.mxu0
      %486 = vmatprep.mubr.f32.mxu0 0.0
      %487 = vmatmul.mubr.f32.gmra.mxu0 %v295
      %v488 = vpop.f32.mrf.mxu0
      %v489 = vadd.f32 %v330, %v488
      %v490 = vpop.f32.mrf.mxu0
      %491 = vmatprep.mubr.f32.mxu0 0.0
      %492 = vmatmul.mubr.f32.gmra.mxu0 %v296
      %v493 = vpop.f32.mrf.mxu0
      %v494 = vadd.f32 %v330, %v493
      %v495 = vpop.f32.mrf.mxu0
      %496 = vmatprep.mubr.f32.mxu0 0.0
      %497 = vmatmul.mubr.f32.gmra.mxu0 %v297
      %v498 = vpop.f32.mrf.mxu0
      %v499 = vadd.f32 %v330, %v498
      %v500 = vpop.f32.mrf.mxu0
      %501 = vmatprep.mubr.f32.mxu0 0.0
      %502 = vmatmul.mubr.f32.gmra.mxu0 %v298
      %v503 = vpop.f32.mrf.mxu0
      %v504 = vadd.f32 %v330, %v503
      %v505 = vpop.f32.mrf.mxu0
      %506 = vmatprep.mubr.f32.mxu0 0.0
      %507 = vmatmul.mubr.f32.gmra.mxu0 %v299
      %v508 = vpop.f32.mrf.mxu0
      %v509 = vadd.f32 %v330, %v508
      %v510 = vpop.f32.mrf.mxu0
      %511 = vmatprep.mubr.f32.mxu0 0.0
      %512 = vmatmul.mubr.f32.gmra.mxu0 %v300
      %v513 = vpop.f32.mrf.mxu0
      %v514 = vadd.f32 %v330, %v513
      %v515 = vpop.f32.mrf.mxu0
      %516 = vmatprep.mubr.f32.mxu0 0.0
      %517 = vmatmul.mubr.f32.gmra.mxu0 %v301
      %v518 = vpop.f32.mrf.mxu0
      %v519 = vadd.f32 %v330, %v518
      %v520 = vpop.f32.mrf.mxu0
      %521 = vmatprep.mubr.f32.mxu0 0.0
      %522 = vmatmul.mubr.f32.gmra.mxu0 %v302
      %v523 = vpop.f32.mrf.mxu0
      %v524 = vadd.f32 %v330, %v523
      %v525 = vpop.f32.mrf.mxu0
      %526 = vmatprep.mubr.f32.mxu0 0.0
      %527 = vmatmul.mubr.f32.gmra.mxu0 %v303
      %v528 = vpop.f32.mrf.mxu0
      %v529 = vadd.f32 %v330, %v528
      %v530 = vpop.f32.mrf.mxu0
      %531 = vmatprep.mubr.f32.mxu0 0.0
      %532 = vmatmul.mubr.f32.gmra.mxu0 %v304
      %v533 = vpop.f32.mrf.mxu0
      %v534 = vadd.f32 %v330, %v533
      %v535 = vpop.f32.mrf.mxu0
      %536 = vmatprep.mubr.f32.mxu0 0.0
      %537 = vmatmul.mubr.f32.gmra.mxu0 %v305
      %v538 = vpop.f32.mrf.mxu0
      %v539 = vadd.f32 %v330, %v538
      %v540 = vpop.f32.mrf.mxu0
      %541 = vmatprep.mubr.f32.mxu0 0.0
      %542 = vmatmul.mubr.f32.gmra.mxu0 %v306
      %v543 = vpop.f32.mrf.mxu0
      %v544 = vadd.f32 %v330, %v543
      %v545 = vpop.f32.mrf.mxu0
      %546 = vmatprep.mubr.f32.mxu0 0.0
      %547 = vmatmul.mubr.f32.gmra.mxu0 %v307
      %v548 = vpop.f32.mrf.mxu0
      %v549 = vadd.f32 %v330, %v548
      %v550 = vpop.f32.mrf.mxu0
      %551 = vmatprep.mubr.f32.mxu0 0.0
      %552 = vmatmul.mubr.f32.gmra.mxu0 %v308
      %v553 = vpop.f32.mrf.mxu0
      %v554 = vadd.f32 %v330, %v553
      %v555 = vpop.f32.mrf.mxu0
      %556 = vdwg.mxu0
      %v557 = vld [vmem:[%s263] sm:$0xff]
      %v558 = vld [vmem:[%s263 + $0x8] sm:$0xff]
      %v559 = vld [vmem:[%s263 + $0x10] sm:$0xff]
      %v560 = vld [vmem:[%s263 + $0x18] sm:$0xff]
      %v561 = vld [vmem:[%s263 + $0x20] sm:$0xff]
      %v562 = vld [vmem:[%s263 + $0x28] sm:$0xff]
      %v563 = vld [vmem:[%s263 + $0x30] sm:$0xff]
      %v564 = vld [vmem:[%s263 + $0x38] sm:$0xff]
      %v565 = vld [vmem:[%s263 + $0x40] sm:$0xff]
      %v566 = vld [vmem:[%s263 + $0x48] sm:$0xff]
      %v567 = vld [vmem:[%s263 + $0x50] sm:$0xff]
      %v568 = vld [vmem:[%s263 + $0x58] sm:$0xff]
      %v569 = vld [vmem:[%s263 + $0x60] sm:$0xff]
      %v570 = vld [vmem:[%s263 + $0x68] sm:$0xff]
      %v571 = vld [vmem:[%s263 + $0x70] sm:$0xff]
      %v572 = vld [vmem:[%s263 + $0x78] sm:$0xff]
      %v573 = vld [vmem:[%s263 + $0x80] sm:$0xff]
      %v574 = vld [vmem:[%s263 + $0x88] sm:$0xff]
      %v575 = vld [vmem:[%s263 + $0x90] sm:$0xff]
      %v576 = vld [vmem:[%s263 + $0x98] sm:$0xff]
      %v577 = vld [vmem:[%s263 + $0xa0] sm:$0xff]
      %v578 = vld [vmem:[%s263 + $0xa8] sm:$0xff]
      %v579 = vld [vmem:[%s263 + $0xb0] sm:$0xff]
      %v580 = vld [vmem:[%s263 + $0xb8] sm:$0xff]
      %v581 = vld [vmem:[%s263 + $0xc0] sm:$0xff]
      %v582 = vld [vmem:[%s263 + $0xc8] sm:$0xff]
      %v583 = vld [vmem:[%s263 + $0xd0] sm:$0xff]
      %v584 = vld [vmem:[%s263 + $0xd8] sm:$0xff]
      %v585 = vld [vmem:[%s263 + $0xe0] sm:$0xff]
      %v586 = vld [vmem:[%s263 + $0xe8] sm:$0xff]
      %v587 = vld [vmem:[%s263 + $0xf0] sm:$0xff]
      %v588 = vld [vmem:[%s263 + $0xf8] sm:$0xff]
      %v589 = vld [vmem:[%s1] sm:$0x1]
      %v591 = vlaneseq
      %v592 = vshrl.u32 %v591, 7
      %v593 = vsub.s32 0, %v592
      %v594 = vrot.slane %v589, %v593
      %v596 = vmul.f32 %v557, %v594
      %v597 = vmul.f32 %v558, %v594
      %v598 = vmul.f32 %v559, %v594
      %v599 = vmul.f32 %v560, %v594
      %v600 = vmul.f32 %v561, %v594
      %v601 = vmul.f32 %v562, %v594
      %v602 = vmul.f32 %v563, %v594
      %v603 = vmul.f32 %v564, %v594
      %v604 = vmul.f32 %v565, %v594
      %v605 = vmul.f32 %v566, %v594
      %v606 = vmul.f32 %v567, %v594
      %v607 = vmul.f32 %v568, %v594
      %v608 = vmul.f32 %v569, %v594
      %v609 = vmul.f32 %v570, %v594
      %v610 = vmul.f32 %v571, %v594
      %v611 = vmul.f32 %v572, %v594
      %v612 = vmul.f32 %v573, %v594
      %v613 = vmul.f32 %v574, %v594
      %v614 = vmul.f32 %v575, %v594
      %v615 = vmul.f32 %v576, %v594
      %v616 = vmul.f32 %v577, %v594
      %v617 = vmul.f32 %v578, %v594
      %v618 = vmul.f32 %v579, %v594
      %v619 = vmul.f32 %v580, %v594
      %v620 = vmul.f32 %v581, %v594
      %v621 = vmul.f32 %v582, %v594
      %v622 = vmul.f32 %v583, %v594
      %v623 = vmul.f32 %v584, %v594
      %v624 = vmul.f32 %v585, %v594
      %v625 = vmul.f32 %v586, %v594
      %v626 = vmul.f32 %v587, %v594
      %v627 = vmul.f32 %v588, %v594
      %v628 = vld [vmem:[%s2] sm:$0x1]
      %v630 = vlaneseq
      %v631 = vshrl.u32 %v630, 7
      %v632 = vsub.s32 0, %v631
      %v633 = vrot.slane %v628, %v632
      %v635 = vadd.f32 %v596, %v633
      %v636 = vadd.f32 %v597, %v633
      %v637 = vadd.f32 %v598, %v633
      %v638 = vadd.f32 %v599, %v633
      %v639 = vadd.f32 %v600, %v633
      %v640 = vadd.f32 %v601, %v633
      %v641 = vadd.f32 %v602, %v633
      %v642 = vadd.f32 %v603, %v633
      %v643 = vadd.f32 %v604, %v633
      %v644 = vadd.f32 %v605, %v633
      %v645 = vadd.f32 %v606, %v633
      %v646 = vadd.f32 %v607, %v633
      %v647 = vadd.f32 %v608, %v633
      %v648 = vadd.f32 %v609, %v633
      %v649 = vadd.f32 %v610, %v633
      %v650 = vadd.f32 %v611, %v633
      %v651 = vadd.f32 %v612, %v633
      %v652 = vadd.f32 %v613, %v633
      %v653 = vadd.f32 %v614, %v633
      %v654 = vadd.f32 %v615, %v633
      %v655 = vadd.f32 %v616, %v633
      %v656 = vadd.f32 %v617, %v633
      %v657 = vadd.f32 %v618, %v633
      %v658 = vadd.f32 %v619, %v633
      %v659 = vadd.f32 %v620, %v633
      %v660 = vadd.f32 %v621, %v633
      %v661 = vadd.f32 %v622, %v633
      %v662 = vadd.f32 %v623, %v633
      %v663 = vadd.f32 %v624, %v633
      %v664 = vadd.f32 %v625, %v633
      %v665 = vadd.f32 %v626, %v633
      %v666 = vadd.f32 %v627, %v633
      %v667 = vadd.f32 %v635, %v399
      %v668 = vadd.f32 %v636, %v404
      %v669 = vadd.f32 %v637, %v409
      %v670 = vadd.f32 %v638, %v414
      %v671 = vadd.f32 %v639, %v419
      %v672 = vadd.f32 %v640, %v424
      %v673 = vadd.f32 %v641, %v429
      %v674 = vadd.f32 %v642, %v434
      %v675 = vadd.f32 %v643, %v439
      %v676 = vadd.f32 %v644, %v444
      %v677 = vadd.f32 %v645, %v449
      %v678 = vadd.f32 %v646, %v454
      %v679 = vadd.f32 %v647, %v459
      %v680 = vadd.f32 %v648, %v464
      %v681 = vadd.f32 %v649, %v469
      %v682 = vadd.f32 %v650, %v474
      %v683 = vadd.f32 %v651, %v479
      %v684 = vadd.f32 %v652, %v484
      %v685 = vadd.f32 %v653, %v489
      %v686 = vadd.f32 %v654, %v494
      %v687 = vadd.f32 %v655, %v499
      %v688 = vadd.f32 %v656, %v504
      %v689 = vadd.f32 %v657, %v509
      %v690 = vadd.f32 %v658, %v514
      %v691 = vadd.f32 %v659, %v519
      %v692 = vadd.f32 %v660, %v524
      %v693 = vadd.f32 %v661, %v529
      %v694 = vadd.f32 %v662, %v534
      %v695 = vadd.f32 %v663, %v539
      %v696 = vadd.f32 %v664, %v544
      %v697 = vadd.f32 %v665, %v549
      %v698 = vadd.f32 %v666, %v554
      %v699 = vmax.f32 %v667, 0.0
      %v700 = vmax.f32 %v668, 0.0
      %v701 = vmax.f32 %v669, 0.0
      %v702 = vmax.f32 %v670, 0.0
      %v703 = vmax.f32 %v671, 0.0
      %v704 = vmax.f32 %v672, 0.0
      %v705 = vmax.f32 %v673, 0.0
      %v706 = vmax.f32 %v674, 0.0
      %v707 = vmax.f32 %v675, 0.0
      %v708 = vmax.f32 %v676, 0.0
      %v709 = vmax.f32 %v677, 0.0
      %v710 = vmax.f32 %v678, 0.0
      %v711 = vmax.f32 %v679, 0.0
      %v712 = vmax.f32 %v680, 0.0
      %v713 = vmax.f32 %v681, 0.0
      %v714 = vmax.f32 %v682, 0.0
      %v715 = vmax.f32 %v683, 0.0
      %v716 = vmax.f32 %v684, 0.0
      %v717 = vmax.f32 %v685, 0.0
      %v718 = vmax.f32 %v686, 0.0
      %v719 = vmax.f32 %v687, 0.0
      %v720 = vmax.f32 %v688, 0.0
      %v721 = vmax.f32 %v689, 0.0
      %v722 = vmax.f32 %v690, 0.0
      %v723 = vmax.f32 %v691, 0.0
      %v724 = vmax.f32 %v692, 0.0
      %v725 = vmax.f32 %v693, 0.0
      %v726 = vmax.f32 %v694, 0.0
      %v727 = vmax.f32 %v695, 0.0
      %v728 = vmax.f32 %v696, 0.0
      %v729 = vmax.f32 %v697, 0.0
      %v730 = vmax.f32 %v698, 0.0
      %731 = vst [vmem:[%s275] sm:$0xff] %v699
      %732 = vst [vmem:[%s275 + $0x8] sm:$0xff] %v700
      %733 = vst [vmem:[%s275 + $0x10] sm:$0xff] %v701
      %734 = vst [vmem:[%s275 + $0x18] sm:$0xff] %v702
      %735 = vst [vmem:[%s275 + $0x20] sm:$0xff] %v703
      %736 = vst [vmem:[%s275 + $0x28] sm:$0xff] %v704
      %737 = vst [vmem:[%s275 + $0x30] sm:$0xff] %v705
      %738 = vst [vmem:[%s275 + $0x38] sm:$0xff] %v706
      %739 = vst [vmem:[%s275 + $0x40] sm:$0xff] %v707
      %740 = vst [vmem:[%s275 + $0x48] sm:$0xff] %v708
      %741 = vst [vmem:[%s275 + $0x50] sm:$0xff] %v709
      %742 = vst [vmem:[%s275 + $0x58] sm:$0xff] %v710
      %743 = vst [vmem:[%s275 + $0x60] sm:$0xff] %v711
      %744 = vst [vmem:[%s275 + $0x68] sm:$0xff] %v712
      %745 = vst [vmem:[%s275 + $0x70] sm:$0xff] %v713
      %746 = vst [vmem:[%s275 + $0x78] sm:$0xff] %v714
      %747 = vst [vmem:[%s275 + $0x80] sm:$0xff] %v715
      %748 = vst [vmem:[%s275 + $0x88] sm:$0xff] %v716
      %749 = vst [vmem:[%s275 + $0x90] sm:$0xff] %v717
      %750 = vst [vmem:[%s275 + $0x98] sm:$0xff] %v718
      %751 = vst [vmem:[%s275 + $0xa0] sm:$0xff] %v719
      %752 = vst [vmem:[%s275 + $0xa8] sm:$0xff] %v720
      %753 = vst [vmem:[%s275 + $0xb0] sm:$0xff] %v721
      %754 = vst [vmem:[%s275 + $0xb8] sm:$0xff] %v722
      %755 = vst [vmem:[%s275 + $0xc0] sm:$0xff] %v723
      %756 = vst [vmem:[%s275 + $0xc8] sm:$0xff] %v724
      %757 = vst [vmem:[%s275 + $0xd0] sm:$0xff] %v725
      %758 = vst [vmem:[%s275 + $0xd8] sm:$0xff] %v726
      %759 = vst [vmem:[%s275 + $0xe0] sm:$0xff] %v727
      %760 = vst [vmem:[%s275 + $0xe8] sm:$0xff] %v728
      %761 = vst [vmem:[%s275 + $0xf0] sm:$0xff] %v729
      %762 = vst [vmem:[%s275 + $0xf8] sm:$0xff] %v730
      %s763 = smul.u32 32, %s17
      %p764 = scmp.lt.s32.totalorder %s763, 63
      %s765 = scalar_select %p764, %s763, 63
      %s766 = smul.addr %s765, 8
      %s767 = scalar_lea.vmem %s6, %s766
      // Predicated region
      $region45: #{residual_forward.5} parent=43 // pred_check
        %p768 = pneg %p171
      $region46: #{residual_forward.5} parent=43 // pred_check_branch
        %770 = sbr.rel (%p768) target = $region48
      $region47: #{residual_forward.5} parent=43 // pred_region
        %s771 = smul.u32 32, %s17
      $region48: #{residual_forward.5} parent=43 // pred_fallthru
        _
    $region44: #{residual_forward.5} parent=5 // pred_fallthru
      _
    %p772 = scmp.le.s32.totalorder 2, %s12
    // Predicated region
    $region49: #{residual_forward.5} parent=5 // pred_check
      %p773 = pneg %p772
    $region50: #{residual_forward.5} parent=5 // pred_check_branch
      %775 = sbr.rel (%p773) target = $region52
    $region51: #{residual_forward.5} parent=5 // pred_region
      %s776 = ssub.s32 %s12, 2
      // Predicated region
      $region53: #{residual_forward.5} parent=51 // pred_check
        %p777 = pneg %p177
      $region54: #{residual_forward.5} parent=51 // pred_check_branch
        %779 = sbr.rel (%p777) target = $region56
      $region55: #{residual_forward.5} parent=51 // pred_region
        %s780 = smul.u32 32, %s18
        %p781 = scmp.lt.s32.totalorder %s780, 63
        %s782 = scalar_select %p781, %s780, 63
        %s783 = smul.addr %s782, 8
        %s784 = scalar_lea.vmem %s6, %s783
      $region56: #{residual_forward.5} parent=51 // pred_fallthru
        _
    $region52: #{residual_forward.5} parent=5 // pred_fallthru
      _
  $region6: #{residual_forward.5} parent=0 // loop_footer
    %s16 = sadd.s32 1, %s12
  $region7: #{residual_forward.5} parent=0 // loop_footer_branch
    %11 = sbr.rel target = $region3
  $region8: #{residual_forward.5} parent=0 // loop_exit
    _

// kernel: residual_forward.4
$region0: #{residual_forward.4}
  #allocation0 [shape = 'u32[]', space=smem, size = 0x4, offset = 0x4, fixed_abs, tag = 'smem constant byte address 0x4 - core index']
  #allocation1 [shape = 'u32[144,128]{1,0:T(1,128)}', space=vmem, size = 0x12000, scoped, tag = 'internal scratch']
  %s0 = inlined_call_operand.vmem [shape: f32[2,18,18,128], index: 0, kind: input, shape index: {}]
  %s1 = inlined_call_operand.vmem [shape: f32[9,128,128], index: 1, kind: input, shape index: {}]
  %s2 = inlined_call_operand.vmem [shape: f32[1,128], index: 2, kind: input, shape index: {}]
  %s3 = inlined_call_operand.vmem [shape: f32[1,128], index: 3, kind: input, shape index: {}]
  %s4 = inlined_call_operand.vmem [shape: f32[1,18,18,1], index: 4, kind: input, shape index: {}]
  %s5 = inlined_call_operand.vmem [shape: f32[2,256,128], index: 5, kind: output, shape index: {0}]
  %s6 = inlined_call_operand.vmem [shape: f32[2,1,128], index: 6, kind: output, shape index: {1}]
  %s7 = inlined_call_operand.vmem [shape: f32[2,1,128], index: 7, kind: output, shape index: {2}]
  %8 = xla_tuple %s5, %s6, %s7
  %s9 = sld [smem:[#allocation0]]
  $region69: #{residual_forward.4} parent=0
    _
  %s11 = ssub.s32 1, %s9
  %s12 = scalar_select 0, %s11, %s9
  loop: start=0, step=1, limit=4
  $region2: #{residual_forward.4} parent=0 // loop_pre_header
    _
  $region3: #{residual_forward.4} parent=0 // loop_header
    %s14 = sphi 0, %s18
    %p15 = scmp.ge.s32.totalorder %s14, 4
    %s21 = sphi 0, %s33
    %s22 = sphi 0, %s29
    %s23 = sphi 0, %s21
    %s24 = sphi 0, %s22
    %s25 = sphi 0, %s23
    %s26 = sphi 0, %s24
    %s36 = sphi 0, %s38
    %s39 = sphi 0, %s36
    %s40 = sphi 0, %s39
    %s56 = sphi 0, %s40
    %s62 = sphi 0, %s64
    %s65 = sphi 0, %s62
    %s66 = sphi 0, %s65
    %s82 = sphi 0, %s66
    %s86 = sphi 0, %s86
    %s88 = sphi 0, %s86
    %s89 = sphi 0, %s88
    %s103 = sphi 0, %s89
    %s107 = sphi 0, %s107
    %s109 = sphi 0, %s107
    %s110 = sphi 0, %s109
    %s124 = sphi 0, %s110
    %s128 = sphi 0, %s128
    %s130 = sphi 0, %s128
    %s131 = sphi 0, %s130
    %s145 = sphi 0, %s131
    %s153 = sphi 0, %s155
    %s156 = sphi 0, %s153
    %s157 = sphi 0, %s156
    %s173 = sphi 0, %s157
    %s181 = sphi 0, %s183
    %s184 = sphi 0, %s181
    %s185 = sphi 0, %s184
    %s201 = sphi 0, %s185
    %s209 = sphi 0, %s211
    %s212 = sphi 0, %s209
    %s213 = sphi 0, %s212
    %s229 = sphi 0, %s213
  $region4: #{residual_forward.4} parent=0 // loop_header_branch
    %17 = sbr.rel (%p15) target = $region8
  $region5: #{residual_forward.4} parent=0 // loop_body
    %s19 = ssub.s32 %s14, 1
    %s20 = ssub.s32 %s14, 2
    %s27 = sadd.s32 1, %s22
    %p28 = scmp.ge.s32.totalorder %s27, 2
    %s29 = scalar_select %p28, 0, %s27
    %s30 = sadd.s32 1, %s21
    %s31 = scalar_select %p28, %s30, %s21
    %p32 = scmp.ge.s32.totalorder %s31, 1
    %s33 = scalar_select %p32, 0, %s31
    %s34 = ssub.s32 %s22, %s29
    %p35 = scmp.eq.s32.totalorder %s34, 0
    %s37 = sadd.s32 %s36, 1
    %s38 = scalar_select %p35, %s36, %s37
    %p41 = pneg %p35
    %p42 = scmp.eq.s32.totalorder %s14, 1
    %p43 = por %p41, %p42
    %p44 = scmp.ne.s32.totalorder %s36, %s39
    %p45 = scmp.eq.s32.totalorder %s14, 0
    %p46 = por %p44, %p45
    %p47 = scmp.ne.s32.totalorder %s36, %s39
    %p48 = scmp.eq.s32.totalorder %s19, 1
    %p49 = por %p47, %p48
    %p50 = scmp.ne.s32.totalorder %s39, %s40
    %p51 = scmp.eq.s32.totalorder %s19, 0
    %p52 = por %p50, %p51
    %p53 = scmp.ne.s32.totalorder %s39, %s40
    %p54 = scmp.eq.s32.totalorder %s20, 1
    %p55 = por %p53, %p54
    %p57 = scmp.ne.s32.totalorder %s40, %s56
    %p58 = scmp.eq.s32.totalorder %s20, 0
    %p59 = por %p57, %p58
    %s60 = ssub.s32 %s21, %s33
    %p61 = scmp.eq.s32.totalorder %s60, 0
    %s63 = sadd.s32 %s62, 1
    %s64 = scalar_select %p61, %s62, %s63
    %p67 = pneg %p61
    %p68 = scmp.eq.s32.totalorder %s14, 1
    %p69 = por %p67, %p68
    %p70 = scmp.ne.s32.totalorder %s62, %s65
    %p71 = scmp.eq.s32.totalorder %s14, 0
    %p72 = por %p70, %p71
    %p73 = scmp.ne.s32.totalorder %s62, %s65
    %p74 = scmp.eq.s32.totalorder %s19, 1
    %p75 = por %p73, %p74
    %p76 = scmp.ne.s32.totalorder %s65, %s66
    %p77 = scmp.eq.s32.totalorder %s19, 0
    %p78 = por %p76, %p77
    %p79 = scmp.ne.s32.totalorder %s65, %s66
    %p80 = scmp.eq.s32.totalorder %s20, 1
    %p81 = por %p79, %p80
    %p83 = scmp.ne.s32.totalorder %s66, %s82
    %p84 = scmp.eq.s32.totalorder %s20, 0
    %p85 = por %p83, %p84
    %s87 = sadd.s32 %s86, 1
    %p90 = scmp.eq.s32.totalorder %s14, 1
    %p91 = scmp.ne.s32.totalorder %s86, %s88
    %p92 = scmp.eq.s32.totalorder %s14, 0
    %p93 = por %p91, %p92
    %p94 = scmp.ne.s32.totalorder %s86, %s88
    %p95 = scmp.eq.s32.totalorder %s19, 1
    %p96 = por %p94, %p95
    %p97 = scmp.ne.s32.totalorder %s88, %s89
    %p98 = scmp.eq.s32.totalorder %s19, 0
    %p99 = por %p97, %p98
    %p100 = scmp.ne.s32.totalorder %s88, %s89
    %p101 = scmp.eq.s32.totalorder %s20, 1
    %p102 = por %p100, %p101
    %p104 = scmp.ne.s32.totalorder %s89, %s103
    %p105 = scmp.eq.s32.totalorder %s20, 0
    %p106 = por %p104, %p105
    %s108 = sadd.s32 %s107, 1
    %p111 = scmp.eq.s32.totalorder %s14, 1
    %p112 = scmp.ne.s32.totalorder %s107, %s109
    %p113 = scmp.eq.s32.totalorder %s14, 0
    %p114 = por %p112, %p113
    %p115 = scmp.ne.s32.totalorder %s107, %s109
    %p116 = scmp.eq.s32.totalorder %s19, 1
    %p117 = por %p115, %p116
    %p118 = scmp.ne.s32.totalorder %s109, %s110
    %p119 = scmp.eq.s32.totalorder %s19, 0
    %p120 = por %p118, %p119
    %p121 = scmp.ne.s32.totalorder %s109, %s110
    %p122 = scmp.eq.s32.totalorder %s20, 1
    %p123 = por %p121, %p122
    %p125 = scmp.ne.s32.totalorder %s110, %s124
    %p126 = scmp.eq.s32.totalorder %s20, 0
    %p127 = por %p125, %p126
    %s129 = sadd.s32 %s128, 1
    %p132 = scmp.eq.s32.totalorder %s14, 1
    %p133 = scmp.ne.s32.totalorder %s128, %s130
    %p134 = scmp.eq.s32.totalorder %s14, 0
    %p135 = por %p133, %p134
    %p136 = scmp.ne.s32.totalorder %s128, %s130
    %p137 = scmp.eq.s32.totalorder %s19, 1
    %p138 = por %p136, %p137
    %p139 = scmp.ne.s32.totalorder %s130, %s131
    %p140 = scmp.eq.s32.totalorder %s19, 0
    %p141 = por %p139, %p140
    %p142 = scmp.ne.s32.totalorder %s130, %s131
    %p143 = scmp.eq.s32.totalorder %s20, 1
    %p144 = por %p142, %p143
    %p146 = scmp.ne.s32.totalorder %s131, %s145
    %p147 = scmp.eq.s32.totalorder %s20, 0
    %p148 = por %p146, %p147
    %s149 = ssub.s32 %s22, %s29
    %s150 = ssub.s32 %s21, %s33
    %s151 = sor.u32 %s149, %s150
    %p152 = scmp.eq.s32.totalorder %s151, 0
    %s154 = sadd.s32 %s153, 1
    %s155 = scalar_select %p152, %s153, %s154
    %p158 = pneg %p152
    %p159 = scmp.eq.s32.totalorder %s14, 1
    %p160 = por %p158, %p159
    %p161 = scmp.ne.s32.totalorder %s153, %s156
    %p162 = scmp.eq.s32.totalorder %s14, 0
    %p163 = por %p161, %p162
    %p164 = scmp.ne.s32.totalorder %s153, %s156
    %p165 = scmp.eq.s32.totalorder %s19, 1
    %p166 = por %p164, %p165
    %p167 = scmp.ne.s32.totalorder %s156, %s157
    %p168 = scmp.eq.s32.totalorder %s19, 0
    %p169 = por %p167, %p168
    %p170 = scmp.ne.s32.totalorder %s156, %s157
    %p171 = scmp.eq.s32.totalorder %s20, 1
    %p172 = por %p170, %p171
    %p174 = scmp.ne.s32.totalorder %s157, %s173
    %p175 = scmp.eq.s32.totalorder %s20, 0
    %p176 = por %p174, %p175
    %s177 = ssub.s32 %s22, %s29
    %s178 = ssub.s32 %s21, %s33
    %s179 = sor.u32 %s177, %s178
    %p180 = scmp.eq.s32.totalorder %s179, 0
    %s182 = sadd.s32 %s181, 1
    %s183 = scalar_select %p180, %s181, %s182
    %p186 = pneg %p180
    %p187 = scmp.eq.s32.totalorder %s14, 1
    %p188 = por %p186, %p187
    %p189 = scmp.ne.s32.totalorder %s181, %s184
    %p190 = scmp.eq.s32.totalorder %s14, 0
    %p191 = por %p189, %p190
    %p192 = scmp.ne.s32.totalorder %s181, %s184
    %p193 = scmp.eq.s32.totalorder %s19, 1
    %p194 = por %p192, %p193
    %p195 = scmp.ne.s32.totalorder %s184, %s185
    %p196 = scmp.eq.s32.totalorder %s19, 0
    %p197 = por %p195, %p196
    %p198 = scmp.ne.s32.totalorder %s184, %s185
    %p199 = scmp.eq.s32.totalorder %s20, 1
    %p200 = por %p198, %p199
    %p202 = scmp.ne.s32.totalorder %s185, %s201
    %p203 = scmp.eq.s32.totalorder %s20, 0
    %p204 = por %p202, %p203
    %s205 = ssub.s32 %s22, %s29
    %s206 = ssub.s32 %s21, %s33
    %s207 = sor.u32 %s205, %s206
    %p208 = scmp.eq.s32.totalorder %s207, 0
    %s210 = sadd.s32 %s209, 1
    %s211 = scalar_select %p208, %s209, %s210
    %p214 = pneg %p208
    %p215 = scmp.eq.s32.totalorder %s14, 1
    %p216 = por %p214, %p215
    %p217 = scmp.ne.s32.totalorder %s209, %s212
    %p218 = scmp.eq.s32.totalorder %s14, 0
    %p219 = por %p217, %p218
    %p220 = scmp.ne.s32.totalorder %s209, %s212
    %p221 = scmp.eq.s32.totalorder %s19, 1
    %p222 = por %p220, %p221
    %p223 = scmp.ne.s32.totalorder %s212, %s213
    %p224 = scmp.eq.s32.totalorder %s19, 0
    %p225 = por %p223, %p224
    %p226 = scmp.ne.s32.totalorder %s212, %s213
    %p227 = scmp.eq.s32.totalorder %s20, 1
    %p228 = por %p226, %p227
    %p230 = scmp.ne.s32.totalorder %s213, %s229
    %p231 = scmp.eq.s32.totalorder %s20, 0
    %p232 = por %p230, %p231
    %p233 = scmp.le.s32.totalorder 1, %s14
    %p234 = scmp.lt.s32.totalorder %s14, 3
    %p235 = pnand %p233, %p234
    %p236 = pneg %p235
    // Predicated region
    $region9: #{residual_forward.4} parent=5 // pred_check
      _
    $region10: #{residual_forward.4} parent=5 // pred_check_branch
      %238 = sbr.rel (%p235) target = $region12
    $region11: #{residual_forward.4} parent=5 // pred_region
      %s239 = ssub.s32 %s14, 1
      // Predicated region
      $region13: #{residual_forward.4} parent=11 // pred_check
        %p240 = pneg %p78
      $region14: #{residual_forward.4} parent=11 // pred_check_branch
        %242 = sbr.rel (%p240) target = $region16
      $region15: #{residual_forward.4} parent=11 // pred_region
        %p243 = scmp.lt.s32.totalorder %s23, 0
        %s244 = scalar_select %p243, %s23, 0
        %s245 = smul.addr %s244, 8
        %s246 = scalar_lea.vmem %s1, %s245
      $region16: #{residual_forward.4} parent=11 // pred_fallthru
        _
      // Predicated region
      $region17: #{residual_forward.4} parent=11 // pred_check
        %p247 = pneg %p99
      $region18: #{residual_forward.4} parent=11 // pred_check_branch
        %249 = sbr.rel (%p247) target = $region20
      $region19: #{residual_forward.4} parent=11 // pred_region
        _
      $region20: #{residual_forward.4} parent=11 // pred_fallthru
        _
      // Predicated region
      $region21: #{residual_forward.4} parent=11 // pred_check
        %p250 = pneg %p120
      $region22: #{residual_forward.4} parent=11 // pred_check_branch
        %252 = sbr.rel (%p250) target = $region24
      $region23: #{residual_forward.4} parent=11 // pred_region
        _
      $region24: #{residual_forward.4} parent=11 // pred_fallthru
        _
      // Predicated region
      $region25: #{residual_forward.4} parent=11 // pred_check
        %p253 = pneg %p141
      $region26: #{residual_forward.4} parent=11 // pred_check_branch
        %255 = sbr.rel (%p253) target = $region28
      $region27: #{residual_forward.4} parent=11 // pred_region
        _
      $region28: #{residual_forward.4} parent=11 // pred_fallthru
        _
    $region12: #{residual_forward.4} parent=5 // pred_fallthru
      _
    %p256 = scmp.lt.s32.totalorder %s14, 2
    // Predicated region
    $region29: #{residual_forward.4} parent=5 // pred_check
      %p257 = pneg %p256
    $region30: #{residual_forward.4} parent=5 // pred_check_branch
      %259 = sbr.rel (%p257) target = $region32
    $region31: #{residual_forward.4} parent=5 // pred_region
      // Predicated region
      $region33: #{residual_forward.4} parent=31 // pred_check
        %p260 = pneg %p46
      $region34: #{residual_forward.4} parent=31 // pred_check_branch
        %262 = sbr.rel (%p260) target = $region36
      $region35: #{residual_forward.4} parent=31 // pred_region
        %p263 = scmp.lt.s32.totalorder %s22, 1
        %s264 = scalar_select %p263, %s22, 1
        %s265 = smul.addr %s264, 54
        %s266 = smul.addr %s265, 8
        %s267 = scalar_lea.vmem %s0, %s266
      $region36: #{residual_forward.4} parent=31 // pred_fallthru
        _
    $region32: #{residual_forward.4} parent=5 // pred_fallthru
      _
    %p268 = scmp.le.s32.totalorder 1, %s14
    %p269 = scmp.lt.s32.totalorder %s14, 3
    %p270 = pnand %p268, %p269
    %p271 = pneg %p270
    // Predicated region
    $region37: #{residual_forward.4} parent=5 // pred_check
      _
    $region38: #{residual_forward.4} parent=5 // pred_check_branch
      %273 = sbr.rel (%p270) target = $region40
    $region39: #{residual_forward.4} parent=5 // pred_region
      %s274 = ssub.s32 %s14, 1
      %p275 = scmp.lt.s32.totalorder %s24, 1
      %s276 = scalar_select %p275, %s24, 1
      %s277 = smul.addr %s276, 54
      %s278 = smul.addr %s277, 8
      %s279 = scalar_lea.vmem %s0, %s278
      %p280 = pneg %p52
      %p281 = pneg %p49
      %p282 = scmp.lt.s32.totalorder %s23, 0
      %s283 = scalar_select %p282, %s23, 0
      %s284 = smul.addr %s283, 8
      %s285 = scalar_lea.vmem %s1, %s284
      %p286 = pneg %p78
      %p287 = pneg %p75
      %p288 = pneg %p99
      %p289 = pneg %p96
      %p290 = pneg %p120
      %p291 = pneg %p117
      %p292 = pneg %p141
      %p293 = pneg %p138
      %p294 = pneg %p169
      %p295 = pneg %p166
      %p296 = scmp.lt.s32.totalorder %s24, 1
      %s297 = scalar_select %p296, %s24, 1
      %p298 = scmp.lt.s32.totalorder %s23, 0
      %s299 = scalar_select %p298, %s23, 0
      %s300 = smul.addr %s297, 32
      %s301 = sadd.s32 %s299, %s300
      %s302 = smul.addr %s301, 8
      %s303 = scalar_lea.vmem %s5, %s302
      %p304 = pneg %p197
      %p305 = pneg %p194
      %p306 = scmp.lt.s32.totalorder %s24, 1
      %s307 = scalar_select %p306, %s24, 1
      %p308 = scmp.lt.s32.totalorder %s23, 0
      %s309 = scalar_select %p308, %s23, 0
      %s310 = sadd.s32 %s309, %s307
      %s311 = scalar_lea.vmem %s6, %s310
      %p312 = pneg %p225
      %p313 = pneg %p222
      %p314 = scmp.lt.s32.totalorder %s24, 1
      %s315 = scalar_select %p314, %s24, 1
      %p316 = scmp.lt.s32.totalorder %s23, 0
      %s317 = scalar_select %p316, %s23, 0
      %s318 = sadd.s32 %s317, %s315
      %s319 = scalar_lea.vmem %s7, %s318
      %p320 = scmp.lt.s32.totalorder %s24, 1
      %s321 = scalar_select %p320, %s24, 1
      %s322 = smul.addr %s321, 54
      %s323 = smul.addr %s322, 8
      %s324 = scalar_lea.vmem %s0, %s323
      %p325 = scmp.lt.s32.totalorder %s23, 0
      %s326 = scalar_select %p325, %s23, 0
      %s327 = smul.addr %s326, 8
      %s328 = scalar_lea.vmem %s1, %s327
      %p329 = scmp.lt.s32.totalorder %s24, 1
      %s330 = scalar_select %p329, %s24, 1
      %p331 = scmp.lt.s32.totalorder %s23, 0
      %s332 = scalar_select %p331, %s23, 0
      %s333 = smul.addr %s330, 32
      %s334 = sadd.s32 %s332, %s333
      %s335 = smul.addr %s334, 8
      %s336 = scalar_lea.vmem %s5, %s335
      %p337 = scmp.lt.s32.totalorder %s24, 1
      %s338 = scalar_select %p337, %s24, 1
      %p339 = scmp.lt.s32.totalorder %s23, 0
      %s340 = scalar_select %p339, %s23, 0
      %s341 = sadd.s32 %s340, %s338
      %s342 = scalar_lea.vmem %s6, %s341
      %p343 = scmp.lt.s32.totalorder %s24, 1
      %s344 = scalar_select %p343, %s24, 1
      %p345 = scmp.lt.s32.totalorder %s23, 0
      %s346 = scalar_select %p345, %s23, 0
      %s347 = sadd.s32 %s346, %s344
      %s348 = scalar_lea.vmem %s7, %s347
      %v349 = vld [vmem:[%s324] sm:$0xff]
      %v350 = vld [vmem:[%s324 + $0x8] sm:$0xff]
      %v351 = vld [vmem:[%s324 + $0x10] sm:$0x3]
      %v352 = vld [vmem:[%s324 + $0x18] sm:$0xff]
      %v353 = vld [vmem:[%s324 + $0x20] sm:$0xff]
      %v354 = vld [vmem:[%s324 + $0x28] sm:$0x3]
      %v355 = vld [vmem:[%s324 + $0x30] sm:$0xff]
      %v356 = vld [vmem:[%s324 + $0x38] sm:$0xff]
      %v357 = vld [vmem:[%s324 + $0x40] sm:$0x3]
      %v358 = vld [vmem:[%s324 + $0x48] sm:$0xff]
      %v359 = vld [vmem:[%s324 + $0x50] sm:$0xff]
      %v360 = vld [vmem:[%s324 + $0x58] sm:$0x3]
      %v361 = vld [vmem:[%s324 + $0x60] sm:$0xff]
      %v362 = vld [vmem:[%s324 + $0x68] sm:$0xff]
      %v363 = vld [vmem:[%s324 + $0x70] sm:$0x3]
      %v364 = vld [vmem:[%s324 + $0x78] sm:$0xff]
      %v365 = vld [vmem:[%s324 + $0x80] sm:$0xff]
      %v366 = vld [vmem:[%s324 + $0x88] sm:$0x3]
      %v367 = vld [vmem:[%s324 + $0x90] sm:$0xff]
      %v368 = vld [vmem:[%s324 + $0x98] sm:$0xff]
      %v369 = vld [vmem:[%s324 + $0xa0] sm:$0x3]
      %v370 = vld [vmem:[%s324 + $0xa8] sm:$0xff]
      %v371 = vld [vmem:[%s324 + $0xb0] sm:$0xff]
      %v372 = vld [vmem:[%s324 + $0xb8] sm:$0x3]
      %v373 = vld [vmem:[%s324 + $0xc0] sm:$0xff]
      %v374 = vld [vmem:[%s324 + $0xc8] sm:$0xff]
      %v375 = vld [vmem:[%s324 + $0xd0] sm:$0x3]
      %v376 = vld [vmem:[%s324 + $0xd8] sm:$0xff]
      %v377 = vld [vmem:[%s324 + $0xe0] sm:$0xff]
      %v378 = vld [vmem:[%s324 + $0xe8] sm:$0x3]
      %v379 = vld [vmem:[%s324 + $0xf0] sm:$0xff]
      %v380 = vld [vmem:[%s324 + $0xf8] sm:$0xff]
      %v381 = vld [vmem:[%s324 + $0x100] sm:$0x3]
      %v382 = vld [vmem:[%s324 + $0x108] sm:$0xff]
      %v383 = vld [vmem:[%s324 + $0x110] sm:$0xff]
      %v384 = vld [vmem:[%s324 + $0x118] sm:$0x3]
      %v385 = vld [vmem:[%s324 + $0x120] sm:$0xff]
      %v386 = vld [vmem:[%s324 + $0x128] sm:$0xff]
      %v387 = vld [vmem:[%s324 + $0x130] sm:$0x3]
      %v388 = vld [vmem:[%s324 + $0x138] sm:$0xff]
      %v389 = vld [vmem:[%s324 + $0x140] sm:$0xff]
      %v390 = vld [vmem:[%s324 + $0x148] sm:$0x3]
      %v391 = vld [vmem:[%s324 + $0x150] sm:$0xff]
      %v392 = vld [vmem:[%s324 + $0x158] sm:$0xff]
      %v393 = vld [vmem:[%s324 + $0x160] sm:$0x3]
      %v394 = vld [vmem:[%s324 + $0x168] sm:$0xff]
      %v395 = vld [vmem:[%s324 + $0x170] sm:$0xff]
      %v396 = vld [vmem:[%s324 + $0x178] sm:$0x3]
      %v397 = vld [vmem:[%s324 + $0x180] sm:$0xff]
      %v398 = vld [vmem:[%s324 + $0x188] sm:$0xff]
      %v399 = vld [vmem:[%s324 + $0x190] sm:$0x3]
      %v400 = vld [vmem:[%s324 + $0x198] sm:$0xff]
      %v401 = vld [vmem:[%s324 + $0x1a0] sm:$0xff]
      %v402 = vld [vmem:[%s324 + $0x1a8] sm:$0x3]
      %v403 = vld [vmem:[%s2] sm:$0x1]
      %v405 = vlaneseq
      %v406 = vshrl.u32 %v405, 7
      %v407 = vsub.s32 0, %v406
      %v408 = vrot.slane %v403, %v407
      %v410 = vmul.f32 %v349, %v408
      %v411 = vmul.f32 %v350, %v408
      %v412 = vmul.f32 %v351, %v408
      %v413 = vmul.f32 %v352, %v408
      %v414 = vmul.f32 %v353, %v408
      %v415 = vmul.f32 %v354, %v408
      %v416 = vmul.f32 %v355, %v408
      %v417 = vmul.f32 %v356, %v408
      %v418 = vmul.f32 %v357, %v408
      %v419 = vmul.f32 %v358, %v408
      %v420 = vmul.f32 %v359, %v408
      %v421 = vmul.f32 %v360, %v408
      %v422 = vmul.f32 %v361, %v408
      %v423 = vmul.f32 %v362, %v408
      %v424 = vmul.f32 %v363, %v408
      %v425 = vmul.f32 %v364, %v408
      %v426 = vmul.f32 %v365, %v408
      %v427 = vmul.f32 %v366, %v408
      %v428 = vmul.f32 %v367, %v408
      %v429 = vmul.f32 %v368, %v408
      %v430 = vmul.f32 %v369, %v408
      %v431 = vmul.f32 %v370, %v408
      %v432 = vmul.f32 %v371, %v408
      %v433 = vmul.f32 %v372, %v408
      %v434 = vmul.f32 %v373, %v408
      %v435 = vmul.f32 %v374, %v408
      %v436 = vmul.f32 %v375, %v408
      %v437 = vmul.f32 %v376, %v408
      %v438 = vmul.f32 %v377, %v408
      %v439 = vmul.f32 %v378, %v408
      %v440 = vmul.f32 %v379, %v408
      %v441 = vmul.f32 %v380, %v408
      %v442 = vmul.f32 %v381, %v408
      %v443 = vmul.f32 %v382, %v408
      %v444 = vmul.f32 %v383, %v408
      %v445 = vmul.f32 %v384, %v408
      %v446 = vmul.f32 %v385, %v408
      %v447 = vmul.f32 %v386, %v408
      %v448 = vmul.f32 %v387, %v408
      %v449 = vmul.f32 %v388, %v408
      %v450 = vmul.f32 %v389, %v408
      %v451 = vmul.f32 %v390, %v408
      %v452 = vmul.f32 %v391, %v408
      %v453 = vmul.f32 %v392, %v408
      %v454 = vmul.f32 %v393, %v408
      %v455 = vmul.f32 %v394, %v408
      %v456 = vmul.f32 %v395, %v408
      %v457 = vmul.f32 %v396, %v408
      %v458 = vmul.f32 %v397, %v408
      %v459 = vmul.f32 %v398, %v408
      %v460 = vmul.f32 %v399, %v408
      %v461 = vmul.f32 %v400, %v408
      %v462 = vmul.f32 %v401, %v408
      %v463 = vmul.f32 %v402, %v408
      %v464 = vld [vmem:[%s3] sm:$0x1]
      %v466 = vlaneseq
      %v467 = vshrl.u32 %v466, 7
      %v468 = vsub.s32 0, %v467
      %v469 = vrot.slane %v464, %v468
      %v471 = vadd.f32 %v410, %v469
      %v472 = vadd.f32 %v411, %v469
      %v473 = vadd.f32 %v412, %v469
      %v474 = vadd.f32 %v413, %v469
      %v475 = vadd.f32 %v414, %v469
      %v476 = vadd.f32 %v415, %v469
      %v477 = vadd.f32 %v416, %v469
      %v478 = vadd.f32 %v417, %v469
      %v479 = vadd.f32 %v418, %v469
      %v480 = vadd.f32 %v419, %v469
      %v481 = vadd.f32 %v420, %v469
      %v482 = vadd.f32 %v421, %v469
      %v483 = vadd.f32 %v422, %v469
      %v484 = vadd.f32 %v423, %v469
      %v485 = vadd.f32 %v424, %v469
      %v486 = vadd.f32 %v425, %v469
      %v487 = vadd.f32 %v426, %v469
      %v488 = vadd.f32 %v427, %v469
      %v489 = vadd.f32 %v428, %v469
      %v490 = vadd.f32 %v429, %v469
      %v491 = vadd.f32 %v430, %v469
      %v492 = vadd.f32 %v431, %v469
      %v493 = vadd.f32 %v432, %v469
      %v494 = vadd.f32 %v433, %v469
      %v495 = vadd.f32 %v434, %v469
      %v496 = vadd.f32 %v435, %v469
      %v497 = vadd.f32 %v436, %v469
      %v498 = vadd.f32 %v437, %v469
      %v499 = vadd.f32 %v438, %v469
      %v500 = vadd.f32 %v439, %v469
      %v501 = vadd.f32 %v440, %v469
      %v502 = vadd.f32 %v441, %v469
      %v503 = vadd.f32 %v442, %v469
      %v504 = vadd.f32 %v443, %v469
      %v505 = vadd.f32 %v444, %v469
      %v506 = vadd.f32 %v445, %v469
      %v507 = vadd.f32 %v446, %v469
      %v508 = vadd.f32 %v447, %v469
      %v509 = vadd.f32 %v448, %v469
      %v510 = vadd.f32 %v449, %v469
      %v511 = vadd.f32 %v450, %v469
      %v512 = vadd.f32 %v451, %v469
      %v513 = vadd.f32 %v452, %v469
      %v514 = vadd.f32 %v453, %v469
      %v515 = vadd.f32 %v454, %v469
      %v516 = vadd.f32 %v455, %v469
      %v517 = vadd.f32 %v456, %v469
      %v518 = vadd.f32 %v457, %v469
      %v519 = vadd.f32 %v458, %v469
      %v520 = vadd.f32 %v459, %v469
      %v521 = vadd.f32 %v460, %v469
      %v522 = vadd.f32 %v461, %v469
      %v523 = vadd.f32 %v462, %v469
      %v524 = vadd.f32 %v463, %v469
      %v525 = vmax.f32 %v471, 0.0
      %v526 = vmax.f32 %v472, 0.0
      %v527 = vmax.f32 %v473, 0.0
      %v528 = vmax.f32 %v474, 0.0
      %v529 = vmax.f32 %v475, 0.0
      %v530 = vmax.f32 %v476, 0.0
      %v531 = vmax.f32 %v477, 0.0
      %v532 = vmax.f32 %v478, 0.0
      %v533 = vmax.f32 %v479, 0.0
      %v534 = vmax.f32 %v480, 0.0
      %v535 = vmax.f32 %v481, 0.0
      %v536 = vmax.f32 %v482, 0.0
      %v537 = vmax.f32 %v483, 0.0
      %v538 = vmax.f32 %v484, 0.0
      %v539 = vmax.f32 %v485, 0.0
      %v540 = vmax.f32 %v486, 0.0
      %v541 = vmax.f32 %v487, 0.0
      %v542 = vmax.f32 %v488, 0.0
      %v543 = vmax.f32 %v489, 0.0
      %v544 = vmax.f32 %v490, 0.0
      %v545 = vmax.f32 %v491, 0.0
      %v546 = vmax.f32 %v492, 0.0
      %v547 = vmax.f32 %v493, 0.0
      %v548 = vmax.f32 %v494, 0.0
      %v549 = vmax.f32 %v495, 0.0
      %v550 = vmax.f32 %v496, 0.0
      %v551 = vmax.f32 %v497, 0.0
      %v552 = vmax.f32 %v498, 0.0
      %v553 = vmax.f32 %v499, 0.0
      %v554 = vmax.f32 %v500, 0.0
      %v555 = vmax.f32 %v501, 0.0
      %v556 = vmax.f32 %v502, 0.0
      %v557 = vmax.f32 %v503, 0.0
      %v558 = vmax.f32 %v504, 0.0
      %v559 = vmax.f32 %v505, 0.0
      %v560 = vmax.f32 %v506, 0.0
      %v561 = vmax.f32 %v507, 0.0
      %v562 = vmax.f32 %v508, 0.0
      %v563 = vmax.f32 %v509, 0.0
      %v564 = vmax.f32 %v510, 0.0
      %v565 = vmax.f32 %v511, 0.0
      %v566 = vmax.f32 %v512, 0.0
      %v567 = vmax.f32 %v513, 0.0
      %v568 = vmax.f32 %v514, 0.0
      %v569 = vmax.f32 %v515, 0.0
      %v570 = vmax.f32 %v516, 0.0
      %v571 = vmax.f32 %v517, 0.0
      %v572 = vmax.f32 %v518, 0.0
      %v573 = vmax.f32 %v519, 0.0
      %v574 = vmax.f32 %v520, 0.0
      %v575 = vmax.f32 %v521, 0.0
      %v576 = vmax.f32 %v522, 0.0
      %v577 = vmax.f32 %v523, 0.0
      %v578 = vmax.f32 %v524, 0.0
      %v579 = vld [vmem:[%s4] sm:$0xff]
      %v580 = vld [vmem:[%s4 + $0x8] sm:$0xff]
      %v581 = vld [vmem:[%s4 + $0x10] sm:$0x3]
      %v582 = vld [vmem:[%s4 + $0x18] sm:$0xff]
      %v583 = vld [vmem:[%s4 + $0x20] sm:$0xff]
      %v584 = vld [vmem:[%s4 + $0x28] sm:$0x3]
      %v585 = vld [vmem:[%s4 + $0x30] sm:$0xff]
      %v586 = vld [vmem:[%s4 + $0x38] sm:$0xff]
      %v587 = vld [vmem:[%s4 + $0x40] sm:$0x3]
      %v588 = vld [vmem:[%s4 + $0x48] sm:$0xff]
      %v589 = vld [vmem:[%s4 + $0x50] sm:$0xff]
      %v590 = vld [vmem:[%s4 + $0x58] sm:$0x3]
      %v591 = vld [vmem:[%s4 + $0x60] sm:$0xff]
      %v592 = vld [vmem:[%s4 + $0x68] sm:$0xff]
      %v593 = vld [vmem:[%s4 + $0x70] sm:$0x3]
      %v594 = vld [vmem:[%s4 + $0x78] sm:$0xff]
      %v595 = vld [vmem:[%s4 + $0x80] sm:$0xff]
      %v596 = vld [vmem:[%s4 + $0x88] sm:$0x3]
      %v597 = vld [vmem:[%s4 + $0x90] sm:$0xff]
      %v598 = vld [vmem:[%s4 + $0x98] sm:$0xff]
      %v599 = vld [vmem:[%s4 + $0xa0] sm:$0x3]
      %v600 = vld [vmem:[%s4 + $0xa8] sm:$0xff]
      %v601 = vld [vmem:[%s4 + $0xb0] sm:$0xff]
      %v602 = vld [vmem:[%s4 + $0xb8] sm:$0x3]
      %v603 = vld [vmem:[%s4 + $0xc0] sm:$0xff]
      %v604 = vld [vmem:[%s4 + $0xc8] sm:$0xff]
      %v605 = vld [vmem:[%s4 + $0xd0] sm:$0x3]
      %v606 = vld [vmem:[%s4 + $0xd8] sm:$0xff]
      %v607 = vld [vmem:[%s4 + $0xe0] sm:$0xff]
      %v608 = vld [vmem:[%s4 + $0xe8] sm:$0x3]
      %v609 = vld [vmem:[%s4 + $0xf0] sm:$0xff]
      %v610 = vld [vmem:[%s4 + $0xf8] sm:$0xff]
      %v611 = vld [vmem:[%s4 + $0x100] sm:$0x3]
      %v612 = vld [vmem:[%s4 + $0x108] sm:$0xff]
      %v613 = vld [vmem:[%s4 + $0x110] sm:$0xff]
      %v614 = vld [vmem:[%s4 + $0x118] sm:$0x3]
      %v615 = vld [vmem:[%s4 + $0x120] sm:$0xff]
      %v616 = vld [vmem:[%s4 + $0x128] sm:$0xff]
      %v617 = vld [vmem:[%s4 + $0x130] sm:$0x3]
      %v618 = vld [vmem:[%s4 + $0x138] sm:$0xff]
      %v619 = vld [vmem:[%s4 + $0x140] sm:$0xff]
      %v620 = vld [vmem:[%s4 + $0x148] sm:$0x3]
      %v621 = vld [vmem:[%s4 + $0x150] sm:$0xff]
      %v622 = vld [vmem:[%s4 + $0x158] sm:$0xff]
      %v623 = vld [vmem:[%s4 + $0x160] sm:$0x3]
      %v624 = vld [vmem:[%s4 + $0x168] sm:$0xff]
      %v625 = vld [vmem:[%s4 + $0x170] sm:$0xff]
      %v626 = vld [vmem:[%s4 + $0x178] sm:$0x3]
      %v627 = vld [vmem:[%s4 + $0x180] sm:$0xff]
      %v628 = vld [vmem:[%s4 + $0x188] sm:$0xff]
      %v629 = vld [vmem:[%s4 + $0x190] sm:$0x3]
      %v630 = vld [vmem:[%s4 + $0x198] sm:$0xff]
      %v631 = vld [vmem:[%s4 + $0x1a0] sm:$0xff]
      %v632 = vld [vmem:[%s4 + $0x1a8] sm:$0x3]
      %634 = vset.pattern.permute.xlu0 0
      %635 = vperm.xlu0 %634, %v579
      %v636 = vpop.permute.xlu0 %635
      %639 = vset.pattern.permute.xlu0 0
      %640 = vperm.xlu0 %639, %v580
      %v641 = vpop.permute.xlu0 %640
      %644 = vset.pattern.permute.xlu0 0
      %645 = vperm.xlu0 %644, %v581
      %v646 = vpop.permute.xlu0 %645
      %649 = vset.pattern.permute.xlu0 0
      %650 = vperm.xlu0 %649, %v582
      %v651 = vpop.permute.xlu0 %650
      %654 = vset.pattern.permute.xlu0 0
      %655 = vperm.xlu0 %654, %v583
      %v656 = vpop.permute.xlu0 %655
      %659 = vset.pattern.permute.xlu0 0
      %660 = vperm.xlu0 %659, %v584
      %v661 = vpop.permute.xlu0 %660
      %664 = vset.pattern.permute.xlu0 0
      %665 = vperm.xlu0 %664, %v585
      %v666 = vpop.permute.xlu0 %665
      %669 = vset.pattern.permute.xlu0 0
      %670 = vperm.xlu0 %669, %v586
      %v671 = vpop.permute.xlu0 %670
      %674 = vset.pattern.permute.xlu0 0
      %675 = vperm.xlu0 %674, %v587
      %v676 = vpop.permute.xlu0 %675
      %679 = vset.pattern.permute.xlu0 0
      %680 = vperm.xlu0 %679, %v588
      %v681 = vpop.permute.xlu0 %680
      %684 = vset.pattern.permute.xlu0 0
      %685 = vperm.xlu0 %684, %v589
      %v686 = vpop.permute.xlu0 %685
      %689 = vset.pattern.permute.xlu0 0
      %690 = vperm.xlu0 %689, %v590
      %v691 = vpop.permute.xlu0 %690
      %694 = vset.pattern.permute.xlu0 0
      %695 = vperm.xlu0 %694, %v591
      %v696 = vpop.permute.xlu0 %695
      %699 = vset.pattern.permute.xlu0 0
      %700 = vperm.xlu0 %699, %v592
      %v701 = vpop.permute.xlu0 %700
      %704 = vset.pattern.permute.xlu0 0
      %705 = vperm.xlu0 %704, %v593
      %v706 = vpop.permute.xlu0 %705
      %709 = vset.pattern.permute.xlu0 0
      %710 = vperm.xlu0 %709, %v594
      %v711 = vpop.permute.xlu0 %710
      %714 = vset.pattern.permute.xlu0 0
      %715 = vperm.xlu0 %714, %v595
      %v716 = vpop.permute.xlu0 %715
      %719 = vset.pattern.permute.xlu0 0
      %720 = vperm.xlu0 %719, %v596
      %v721 = vpop.permute.xlu0 %720
      %724 = vset.pattern.permute.xlu0 0
      %725 = vperm.xlu0 %724, %v597
      %v726 = vpop.permute.xlu0 %725
      %729 = vset.pattern.permute.xlu0 0
      %730 = vperm.xlu0 %729, %v598
      %v731 = vpop.permute.xlu0 %730
      %734 = vset.pattern.permute.xlu0 0
      %735 = vperm.xlu0 %734, %v599
      %v736 = vpop.permute.xlu0 %735
      %739 = vset.pattern.permute.xlu0 0
      %740 = vperm.xlu0 %739, %v600
      %v741 = vpop.permute.xlu0 %740
      %744 = vset.pattern.permute.xlu0 0
      %745 = vperm.xlu0 %744, %v601
      %v746 = vpop.permute.xlu0 %745
      %749 = vset.pattern.permute.xlu0 0
      %750 = vperm.xlu0 %749, %v602
      %v751 = vpop.permute.xlu0 %750
      %754 = vset.pattern.permute.xlu0 0
      %755 = vperm.xlu0 %754, %v603
      %v756 = vpop.permute.xlu0 %755
      %759 = vset.pattern.permute.xlu0 0
      %760 = vperm.xlu0 %759, %v604
      %v761 = vpop.permute.xlu0 %760
      %764 = vset.pattern.permute.xlu0 0
      %765 = vperm.xlu0 %764, %v605
      %v766 = vpop.permute.xlu0 %765
      %769 = vset.pattern.permute.xlu0 0
      %770 = vperm.xlu0 %769, %v606
      %v771 = vpop.permute.xlu0 %770
      %774 = vset.pattern.permute.xlu0 0
      %775 = vperm.xlu0 %774, %v607
      %v776 = vpop.permute.xlu0 %775
      %779 = vset.pattern.permute.xlu0 0
      %780 = vperm.xlu0 %779, %v608
      %v781 = vpop.permute.xlu0 %780
      %784 = vset.pattern.permute.xlu0 0
      %785 = vperm.xlu0 %784, %v609
      %v786 = vpop.permute.xlu0 %785
      %789 = vset.pattern.permute.xlu0 0
      %790 = vperm.xlu0 %789, %v610
      %v791 = vpop.permute.xlu0 %790
      %794 = vset.pattern.permute.xlu0 0
      %795 = vperm.xlu0 %794, %v611
      %v796 = vpop.permute.xlu0 %795
      %799 = vset.pattern.permute.xlu0 0
      %800 = vperm.xlu0 %799, %v612
      %v801 = vpop.permute.xlu0 %800
      %804 = vset.pattern.permute.xlu0 0
      %805 = vperm.xlu0 %804, %v613
      %v806 = vpop.permute.xlu0 %805
      %809 = vset.pattern.permute.xlu0 0
      %810 = vperm.xlu0 %809, %v614
      %v811 = vpop.permute.xlu0 %810
      %814 = vset.pattern.permute.xlu0 0
      %815 = vperm.xlu0 %814, %v615
      %v816 = vpop.permute.xlu0 %815
      %819 = vset.pattern.permute.xlu0 0
      %820 = vperm.xlu0 %819, %v616
      %v821 = vpop.permute.xlu0 %820
      %824 = vset.pattern.permute.xlu0 0
      %825 = vperm.xlu0 %824, %v617
      %v826 = vpop.permute.xlu0 %825
      %829 = vset.pattern.permute.xlu0 0
      %830 = vperm.xlu0 %829, %v618
      %v831 = vpop.permute.xlu0 %830
      %834 = vset.pattern.permute.xlu0 0
      %835 = vperm.xlu0 %834, %v619
      %v836 = vpop.permute.xlu0 %835
      %839 = vset.pattern.permute.xlu0 0
      %840 = vperm.xlu0 %839, %v620
      %v841 = vpop.permute.xlu0 %840
      %844 = vset.pattern.permute.xlu0 0
      %845 = vperm.xlu0 %844, %v621
      %v846 = vpop.permute.xlu0 %845
      %849 = vset.pattern.permute.xlu0 0
      %850 = vperm.xlu0 %849, %v622
      %v851 = vpop.permute.xlu0 %850
      %854 = vset.pattern.permute.xlu0 0
      %855 = vperm.xlu0 %854, %v623
      %v856 = vpop.permute.xlu0 %855
      %859 = vset.pattern.permute.xlu0 0
      %860 = vperm.xlu0 %859, %v624
      %v861 = vpop.permute.xlu0 %860
      %864 = vset.pattern.permute.xlu0 0
      %865 = vperm.xlu0 %864, %v625
      %v866 = vpop.permute.xlu0 %865
      %869 = vset.pattern.permute.xlu0 0
      %870 = vperm.xlu0 %869, %v626
      %v871 = vpop.permute.xlu0 %870
      %874 = vset.pattern.permute.xlu0 0
      %875 = vperm.xlu0 %874, %v627
      %v876 = vpop.permute.xlu0 %875
      %879 = vset.pattern.permute.xlu0 0
      %880 = vperm.xlu0 %879, %v628
      %v881 = vpop.permute.xlu0 %880
      %884 = vset.pattern.permute.xlu0 0
      %885 = vperm.xlu0 %884, %v629
      %v886 = vpop.permute.xlu0 %885
      %889 = vset.pattern.permute.xlu0 0
      %890 = vperm.xlu0 %889, %v630
      %v891 = vpop.permute.xlu0 %890
      %894 = vset.pattern.permute.xlu0 0
      %895 = vperm.xlu0 %894, %v631
      %v896 = vpop.permute.xlu0 %895
      %899 = vset.pattern.permute.xlu0 0
      %900 = vperm.xlu0 %899, %v632
      %v901 = vpop.permute.xlu0 %900
      %v903 = vmul.f32 %v525, %v636
      %v904 = vmul.f32 %v526, %v641
      %v905 = vmul.f32 %v527, %v646
      %v906 = vmul.f32 %v528, %v651
      %v907 = vmul.f32 %v529, %v656
      %v908 = vmul.f32 %v530, %v661
      %v909 = vmul.f32 %v531, %v666
      %v910 = vmul.f32 %v532, %v671
      %v911 = vmul.f32 %v533, %v676
      %v912 = vmul.f32 %v534, %v681
      %v913 = vmul.f32 %v535, %v686
      %v914 = vmul.f32 %v536, %v691
      %v915 = vmul.f32 %v537, %v696
      %v916 = vmul.f32 %v538, %v701
      %v917 = vmul.f32 %v539, %v706
      %v918 = vmul.f32 %v540, %v711
      %v919 = vmul.f32 %v541, %v716
      %v920 = vmul.f32 %v542, %v721
      %v921 = vmul.f32 %v543, %v726
      %v922 = vmul.f32 %v544, %v731
      %v923 = vmul.f32 %v545, %v736
      %v924 = vmul.f32 %v546, %v741
      %v925 = vmul.f32 %v547, %v746
      %v926 = vmul.f32 %v548, %v751
      %v927 = vmul.f32 %v549, %v756
      %v928 = vmul.f32 %v550, %v761
      %v929 = vmul.f32 %v551, %v766
      %v930 = vmul.f32 %v552, %v771
      %v931 = vmul.f32 %v553, %v776
      %v932 = vmul.f32 %v554, %v781
      %v933 = vmul.f32 %v555, %v786
      %v934 = vmul.f32 %v556, %v791
      %v935 = vmul.f32 %v557, %v796
      %v936 = vmul.f32 %v558, %v801
      %v937 = vmul.f32 %v559, %v806
      %v938 = vmul.f32 %v560, %v811
      %v939 = vmul.f32 %v561, %v816
      %v940 = vmul.f32 %v562, %v821
      %v941 = vmul.f32 %v563, %v826
      %v942 = vmul.f32 %v564, %v831
      %v943 = vmul.f32 %v565, %v836
      %v944 = vmul.f32 %v566, %v841
      %v945 = vmul.f32 %v567, %v846
      %v946 = vmul.f32 %v568, %v851
      %v947 = vmul.f32 %v569, %v856
      %v948 = vmul.f32 %v570, %v861
      %v949 = vmul.f32 %v571, %v866
      %v950 = vmul.f32 %v572, %v871
      %v951 = vmul.f32 %v573, %v876
      %v952 = vmul.f32 %v574, %v881
      %v953 = vmul.f32 %v575, %v886
      %v954 = vmul.f32 %v576, %v891
      %v955 = vmul.f32 %v577, %v896
      %v956 = vmul.f32 %v578, %v901
      %v957 = vld [vmem:[%s328] sm:$0xff]
      %v958 = vld [vmem:[%s328 + $0x8] sm:$0xff]
      %v959 = vld [vmem:[%s328 + $0x10] sm:$0xff]
      %v960 = vld [vmem:[%s328 + $0x18] sm:$0xff]
      %v961 = vld [vmem:[%s328 + $0x20] sm:$0xff]
      %v962 = vld [vmem:[%s328 + $0x28] sm:$0xff]
      %v963 = vld [vmem:[%s328 + $0x30] sm:$0xff]
      %v964 = vld [vmem:[%s328 + $0x38] sm:$0xff]
      %v965 = vld [vmem:[%s328 + $0x40] sm:$0xff]
      %v966 = vld [vmem:[%s328 + $0x48] sm:$0xff]
      %v967 = vld [vmem:[%s328 + $0x50] sm:$0xff]
      %v968 = vld [vmem:[%s328 + $0x58] sm:$0xff]
      %v969 = vld [vmem:[%s328 + $0x60] sm:$0xff]
      %v970 = vld [vmem:[%s328 + $0x68] sm:$0xff]
      %v971 = vld [vmem:[%s328 + $0x70] sm:$0xff]
      %v972 = vld [vmem:[%s328 + $0x78] sm:$0xff]
      %vm1021 = vcmask 1046528
      %v1022 = vrot.slane %v903, 1
      %v1023 = vrot.slane %v904, 1
      %v1024 = vsel %vm1021, %v1022, %v1023
      %v1025 = vrot.slane %v905, 1
      %v1026 = vsel %vm1021, %v1023, %v1025
      %v1027 = vrot.slane %v906, 1
      %v1028 = vrot.slane %v907, 1
      %v1029 = vsel %vm1021, %v1027, %v1028
      %v1030 = vrot.slane %v908, 1
      %v1031 = vsel %vm1021, %v1028, %v1030
      %v1032 = vrot.slane %v909, 1
      %v1033 = vrot.slane %v910, 1
      %v1034 = vsel %vm1021, %v1032, %v1033
      %v1035 = vrot.slane %v911, 1
      %v1036 = vsel %vm1021, %v1033, %v1035
      %v1037 = vrot.slane %v912, 1
      %v1038 = vrot.slane %v913, 1
      %v1039 = vsel %vm1021, %v1037, %v1038
      %v1040 = vrot.slane %v914, 1
      %v1041 = vsel %vm1021, %v1038, %v1040
      %v1042 = vrot.slane %v915, 1
      %v1043 = vrot.slane %v916, 1
      %v1044 = vsel %vm1021, %v1042, %v1043
      %v1045 = vrot.slane %v917, 1
      %v1046 = vsel %vm1021, %v1043, %v1045
      %v1047 = vrot.slane %v918, 1
      %v1048 = vrot.slane %v919, 1
      %v1049 = vsel %vm1021, %v1047, %v1048
      %v1050 = vrot.slane %v920, 1
      %v1051 = vsel %vm1021, %v1048, %v1050
      %v1052 = vrot.slane %v921, 1
      %v1053 = vrot.slane %v922, 1
      %v1054 = vsel %vm1021, %v1052, %v1053
      %v1055 = vrot.slane %v923, 1
      %v1056 = vsel %vm1021, %v1053, %v1055
      %v1057 = vrot.slane %v924, 1
      %v1058 = vrot.slane %v925, 1
      %v1059 = vsel %vm1021, %v1057, %v1058
      %v1060 = vrot.slane %v926, 1
      %v1061 = vsel %vm1021, %v1058, %v1060
      %v1062 = vrot.slane %v927, 1
      %v1063 = vrot.slane %v928, 1
      %v1064 = vsel %vm1021, %v1062, %v1063
      %v1065 = vrot.slane %v929, 1
      %v1066 = vsel %vm1021, %v1063, %v1065
      %v1067 = vrot.slane %v930, 1
      %v1068 = vrot.slane %v931, 1
      %v1069 = vsel %vm1021, %v1067, %v1068
      %v1070 = vrot.slane %v932, 1
      %v1071 = vsel %vm1021, %v1068, %v1070
      %v1072 = vrot.slane %v933, 1
      %v1073 = vrot.slane %v934, 1
      %v1074 = vsel %vm1021, %v1072, %v1073
      %v1075 = vrot.slane %v935, 1
      %v1076 = vsel %vm1021, %v1073, %v1075
      %v1077 = vrot.slane %v936, 1
      %v1078 = vrot.slane %v937, 1
      %v1079 = vsel %vm1021, %v1077, %v1078
      %v1080 = vrot.slane %v938, 1
      %v1081 = vsel %vm1021, %v1078, %v1080
      %v1082 = vrot.slane %v939, 1
      %v1083 = vrot.slane %v940, 1
      %v1084 = vsel %vm1021, %v1082, %v1083
      %v1085 = vrot.slane %v941, 1
      %v1086 = vsel %vm1021, %v1083, %v1085
      %v1087 = vrot.slane %v942, 1
      %v1088 = vrot.slane %v943, 1
      %v1089 = vsel %vm1021, %v1087, %v1088
      %v1090 = vrot.slane %v944, 1
      %v1091 = vsel %vm1021, %v1088, %v1090
      %v1092 = vrot.slane %v945, 1
      %v1093 = vrot.slane %v946, 1
      %v1094 = vsel %vm1021, %v1092, %v1093
      %v1095 = vrot.slane %v947, 1
      %v1096 = vsel %vm1021, %v1093, %v1095
      %v1097 = vrot.slane %v948, 1
      %v1098 = vrot.slane %v949, 1
      %v1099 = vsel %vm1021, %v1097, %v1098
      %v1100 = vrot.slane %v950, 1
      %v1101 = vsel %vm1021, %v1098, %v1100
      %s1134 = scalar_lea.vmem %s328, 128
      %v1135 = vld [vmem:[%s1134] sm:$0xff]
      %v1136 = vld [vmem:[%s1134 + $0x8] sm:$0xff]
      %v1137 = vld [vmem:[%s1134 + $0x10] sm:$0xff]
      %v1138 = vld [vmem:[%s1134 + $0x18] sm:$0xff]
      %v1139 = vld [vmem:[%s1134 + $0x20] sm:$0xff]
      %v1140 = vld [vmem:[%s1134 + $0x28] sm:$0xff]
      %v1141 = vld [vmem:[%s1134 + $0x30] sm:$0xff]
      %v1142 = vld [vmem:[%s1134 + $0x38] sm:$0xff]
      %v1143 = vld [vmem:[%s1134 + $0x40] sm:$0xff]
      %v1144 = vld [vmem:[%s1134 + $0x48] sm:$0xff]
      %v1145 = vld [vmem:[%s1134 + $0x50] sm:$0xff]
      %v1146 = vld [vmem:[%s1134 + $0x58] sm:$0xff]
      %v1147 = vld [vmem:[%s1134 + $0x60] sm:$0xff]
      %v1148 = vld [vmem:[%s1134 + $0x68] sm:$0xff]
      %v1149 = vld [vmem:[%s1134 + $0x70] sm:$0xff]
      %v1150 = vld [vmem:[%s1134 + $0x78] sm:$0xff]
      %1151 = vmatprep.subr.mxu0 0.0
      %1152 = vmatpush1.msra.mxu0 %v1150
      %1153 = vmatprep.subr.mxu0 0.0
      %1154 = vmatpush1.msra.mxu0 %v1149
      %1155 = vmatprep.subr.mxu0 0.0
      %1156 = vmatpush1.msra.mxu0 %v1148
      %1157 = vmatprep.subr.mxu0 0.0
      %1158 = vmatpush1.msra.mxu0 %v1147
      %1159 = vmatprep.subr.mxu0 0.0
      %1160 = vmatpush1.msra.mxu0 %v1146
      %1161 = vmatprep.subr.mxu0 0.0
      %1162 = vmatpush1.msra.mxu0 %v1145
      %1163 = vmatprep.subr.mxu0 0.0
      %1164 = vmatpush1.msra.mxu0 %v1144
      %1165 = vmatprep.subr.mxu0 0.0
      %1166 = vmatpush1.msra.mxu0 %v1143
      %1167 = vmatprep.subr.mxu0 0.0
      %1168 = vmatpush1.msra.mxu0 %v1142
      %1169 = vmatprep.subr.mxu0 0.0
      %1170 = vmatpush1.msra.mxu0 %v1141
      %1171 = vmatprep.subr.mxu0 0.0
      %1172 = vmatpush1.msra.mxu0 %v1140
      %1173 = vmatprep.subr.mxu0 0.0
      %1174 = vmatpush1.msra.mxu0 %v1139
      %1175 = vmatprep.subr.mxu0 0.0
      %1176 = vmatpush1.msra.mxu0 %v1138
      %1177 = vmatprep.subr.mxu0 0.0
      %1178 = vmatpush1.msra.mxu0 %v1137
      %1179 = vmatprep.subr.mxu0 0.0
      %1180 = vmatpush1.msra.mxu0 %v1136
      %1181 = vmatprep.subr.mxu0 0.0
      %1182 = vmatpush1.msra.mxu0 %v1135
      %1183 = vmatprep.subr.mxu0 0.0
      %1184 = vmatpush2.msra.mxu0 0.0
      %1185 = vmatprep.subr.mxu0 0.0
      %1186 = vmatpush2.msra.mxu0 0.0
      %1187 = vmatprep.subr.mxu0 0.0
      %1188 = vmatpush2.msra.mxu0 0.0
      %1189 = vmatprep.subr.mxu0 0.0
      %1190 = vmatpush2.msra.mxu0 0.0
      %1191 = vmatprep.subr.mxu0 0.0
      %1192 = vmatpush2.msra.mxu0 0.0
      %1193 = vmatprep.subr.mxu0 0.0
      %1194 = vmatpush2.msra.mxu0 0.0
      %1195 = vmatprep.subr.mxu0 0.0
      %1196 = vmatpush2.msra.mxu0 0.0
      %1197 = vmatprep.subr.mxu0 0.0
      %1198 = vmatpush2.msra.mxu0 0.0
      %1199 = vmatprep.subr.mxu0 0.0
      %1200 = vmatpush2.msra.mxu0 0.0
      %1201 = vmatprep.subr.mxu0 0.0
      %1202 = vmatpush2.msra.mxu0 0.0
      %1203 = vmatprep.subr.mxu0 0.0
      %1204 = vmatpush2.msra.mxu0 0.0
      %1205 = vmatprep.subr.mxu0 0.0
      %1206 = vmatpush2.msra.mxu0 0.0
      %1207 = vmatprep.subr.mxu0 0.0
      %1208 = vmatpush2.msra.mxu0 0.0
      %1209 = vmatprep.subr.mxu0 0.0
      %1210 = vmatpush2.msra.mxu0 0.0
      %1211 = vmatprep.subr.mxu0 0.0
      %1212 = vmatpush2.msra.mxu0 0.0
      %1213 = vmatprep.subr.mxu0 0.0
      %1214 = vmatpush2.msra.mxu0 0.0
      %1215 = vmatprep.mubr.f32.mxu0 0.0
      %1216 = vmatmul.mubr.f32.gmra.mxu0 %v1024
      %v1217 = vpop.f32.mrf.mxu0
      %v1218 = vadd.f32 0.0, %v1217
      %v1219 = vpop.f32.mrf.mxu0
      %1220 = vmatprep.mubr.f32.mxu0 0.0
      %1221 = vmatmul.mubr.f32.gmra.mxu0 %v1026
      %v1222 = vpop.f32.mrf.mxu0
      %v1223 = vadd.f32 0.0, %v1222
      %v1224 = vpop.f32.mrf.mxu0
      %1225 = vmatprep.mubr.f32.mxu0 0.0
      %1226 = vmatmul.mubr.f32.gmra.mxu0 %v1029
      %v1227 = vpop.f32.mrf.mxu0
      %v1228 = vadd.f32 0.0, %v1227
      %v1229 = vpop.f32.mrf.mxu0
      %1230 = vmatprep.mubr.f32.mxu0 0.0
      %1231 = vmatmul.mubr.f32.gmra.mxu0 %v1031
      %v1232 = vpop.f32.mrf.mxu0
      %v1233 = vadd.f32 0.0, %v1232
      %v1234 = vpop.f32.mrf.mxu0
      %1235 = vmatprep.mubr.f32.mxu0 0.0
      %1236 = vmatmul.mubr.f32.gmra.mxu0 %v1034
      %v1237 = vpop.f32.mrf.mxu0
      %v1238 = vadd.f32 0.0, %v1237
      %v1239 = vpop.f32.mrf.mxu0
      %1240 = vmatprep.mubr.f32.mxu0 0.0
      %1241 = vmatmul.mubr.f32.gmra.mxu0 %v1036
      %v1242 = vpop.f32.mrf.mxu0
      %v1243 = vadd.f32 0.0, %v1242
      %v1244 = vpop.f32.mrf.mxu0
      %1245 = vmatprep.mubr.f32.mxu0 0.0
      %1246 = vmatmul.mubr.f32.gmra.mxu0 %v1039
      %v1247 = vpop.f32.mrf.mxu0
      %v1248 = vadd.f32 0.0, %v1247
      %v1249 = vpop.f32.mrf.mxu0
      %1250 = vmatprep.mubr.f32.mxu0 0.0
      %1251 = vmatmul.mubr.f32.gmra.mxu0 %v1041
      %v1252 = vpop.f32.mrf.mxu0
      %v1253 = vadd.f32 0.0, %v1252
      %v1254 = vpop.f32.mrf.mxu0
      %1255 = vmatprep.mubr.f32.mxu0 0.0
      %1256 = vmatmul.mubr.f32.gmra.mxu0 %v1044
      %v1257 = vpop.f32.mrf.mxu0
      %v1258 = vadd.f32 0.0, %v1257
      %v1259 = vpop.f32.mrf.mxu0
      %1260 = vmatprep.mubr.f32.mxu0 0.0
      %1261 = vmatmul.mubr.f32.gmra.mxu0 %v1046
      %v1262 = vpop.f32.mrf.mxu0
      %v1263 = vadd.f32 0.0, %v1262
      %v1264 = vpop.f32.mrf.mxu0
      %1265 = vmatprep.mubr.f32.mxu0 0.0
      %1266 = vmatmul.mubr.f32.gmra.mxu0 %v1049
      %v1267 = vpop.f32.mrf.mxu0
      %v1268 = vadd.f32 0.0, %v1267
      %v1269 = vpop.f32.mrf.mxu0
      %1270 = vmatprep.mubr.f32.mxu0 0.0
      %1271 = vmatmul.mubr.f32.gmra.mxu0 %v1051
      %v1272 = vpop.f32.mrf.mxu0
      %v1273 = vadd.f32 0.0, %v1272
      %v1274 = vpop.f32.mrf.mxu0
      %1275 = vmatprep.mubr.f32.mxu0 0.0
      %1276 = vmatmul.mubr.f32.gmra.mxu0 %v1054
      %v1277 = vpop.f32.mrf.mxu0
      %v1278 = vadd.f32 0.0, %v1277
      %v1279 = vpop.f32.mrf.mxu0
      %1280 = vmatprep.mubr.f32.mxu0 0.0
      %1281 = vmatmul.mubr.f32.gmra.mxu0 %v1056
      %v1282 = vpop.f32.mrf.mxu0
      %v1283 = vadd.f32 0.0, %v1282
      %v1284 = vpop.f32.mrf.mxu0
      %1285 = vmatprep.mubr.f32.mxu0 0.0
      %1286 = vmatmul.mubr.f32.gmra.mxu0 %v1059
      %v1287 = vpop.f32.mrf.mxu0
      %v1288 = vadd.f32 0.0, %v1287
      %v1289 = vpop.f32.mrf.mxu0
      %1290 = vmatprep.mubr.f32.mxu0 0.0
      %1291 = vmatmul.mubr.f32.gmra.mxu0 %v1061
      %v1292 = vpop.f32.mrf.mxu0
      %v1293 = vadd.f32 0.0, %v1292
      %v1294 = vpop.f32.mrf.mxu0
      %1295 = vmatprep.mubr.f32.mxu0 0.0
      %1296 = vmatmul.mubr.f32.gmra.mxu0 %v1064
      %v1297 = vpop.f32.mrf.mxu0
      %v1298 = vadd.f32 0.0, %v1297
      %v1299 = vpop.f32.mrf.mxu0
      %1300 = vmatprep.mubr.f32.mxu0 0.0
      %1301 = vmatmul.mubr.f32.gmra.mxu0 %v1066
      %v1302 = vpop.f32.mrf.mxu0
      %v1303 = vadd.f32 0.0, %v1302
      %v1304 = vpop.f32.mrf.mxu0
      %1305 = vmatprep.mubr.f32.mxu0 0.0
      %1306 = vmatmul.mubr.f32.gmra.mxu0 %v1069
      %v1307 = vpop.f32.mrf.mxu0
      %v1308 = vadd.f32 0.0, %v1307
      %v1309 = vpop.f32.mrf.mxu0
      %1310 = vmatprep.mubr.f32.mxu0 0.0
      %1311 = vmatmul.mubr.f32.gmra.mxu0 %v1071
      %v1312 = vpop.f32.mrf.mxu0
      %v1313 = vadd.f32 0.0, %v1312
      %v1314 = vpop.f32.mrf.mxu0
      %1315 = vmatprep.mubr.f32.mxu0 0.0
      %1316 = vmatmul.mubr.f32.gmra.mxu0 %v1074
      %v1317 = vpop.f32.mrf.mxu0
      %v1318 = vadd.f32 0.0, %v1317
      %v1319 = vpop.f32.mrf.mxu0
      %1320 = vmatprep.mubr.f32.mxu0 0.0
      %1321 = vmatmul.mubr.f32.gmra.mxu0 %v1076
      %v1322 = vpop.f32.mrf.mxu0
      %v1323 = vadd.f32 0.0, %v1322
      %v1324 = vpop.f32.mrf.mxu0
      %1325 = vmatprep.mubr.f32.mxu0 0.0
      %1326 = vmatmul.mubr.f32.gmra.mxu0 %v1079
      %v1327 = vpop.f32.mrf.mxu0
      %v1328 = vadd.f32 0.0, %v1327
      %v1329 = vpop.f32.mrf.mxu0
      %1330 = vmatprep.mubr.f32.mxu0 0.0
      %1331 = vmatmul.mubr.f32.gmra.mxu0 %v1081
      %v1332 = vpop.f32.mrf.mxu0
      %v1333 = vadd.f32 0.0, %v1332
      %v1334 = vpop.f32.mrf.mxu0
      %1335 = vmatprep.mubr.f32.mxu0 0.0
      %1336 = vmatmul.mubr.f32.gmra.mxu0 %v1084
      %v1337 = vpop.f32.mrf.mxu0
      %v1338 = vadd.f32 0.0, %v1337
      %v1339 = vpop.f32.mrf.mxu0
      %1340 = vmatprep.mubr.f32.mxu0 0.0
      %1341 = vmatmul.mubr.f32.gmra.mxu0 %v1086
      %v1342 = vpop.f32.mrf.mxu0
      %v1343 = vadd.f32 0.0, %v1342
      %v1344 = vpop.f32.mrf.mxu0
      %1345 = vmatprep.mubr.f32.mxu0 0.0
      %1346 = vmatmul.mubr.f32.gmra.mxu0 %v1089
      %v1347 = vpop.f32.mrf.mxu0
      %v1348 = vadd.f32 0.0, %v1347
      %v1349 = vpop.f32.mrf.mxu0
      %1350 = vmatprep.mubr.f32.mxu0 0.0
      %1351 = vmatmul.mubr.f32.gmra.mxu0 %v1091
      %v1352 = vpop.f32.mrf.mxu0
      %v1353 = vadd.f32 0.0, %v1352
      %v1354 = vpop.f32.mrf.mxu0
      %1355 = vmatprep.mubr.f32.mxu0 0.0
      %1356 = vmatmul.mubr.f32.gmra.mxu0 %v1094
      %v1357 = vpop.f32.mrf.mxu0
      %v1358 = vadd.f32 0.0, %v1357
      %v1359 = vpop.f32.mrf.mxu0
      %1360 = vmatprep.mubr.f32.mxu0 0.0
      %1361 = vmatmul.mubr.f32.gmra.mxu0 %v1096
      %v1362 = vpop.f32.mrf.mxu0
      %v1363 = vadd.f32 0.0, %v1362
      %v1364 = vpop.f32.mrf.mxu0
      %1365 = vmatprep.mubr.f32.mxu0 0.0
      %1366 = vmatmul.mubr.f32.gmra.mxu0 %v1099
      %v1367 = vpop.f32.mrf.mxu0
      %v1368 = vadd.f32 0.0, %v1367
      %v1369 = vpop.f32.mrf.mxu0
      %1370 = vmatprep.mubr.f32.mxu0 0.0
      %1371 = vmatmul.mubr.f32.gmra.mxu0 %v1101
      %v1372 = vpop.f32.mrf.mxu0
      %v1373 = vadd.f32 0.0, %v1372
      %v1374 = vpop.f32.mrf.mxu0
      %1375 = vdwg.mxu0
      %1376 = vmatprep.subr.mxu0 0.0
      %1377 = vmatpush1.msra.mxu0 %v972
      %1378 = vmatprep.subr.mxu0 0.0
      %1379 = vmatpush1.msra.mxu0 %v971
      %1380 = vmatprep.subr.mxu0 0.0
      %1381 = vmatpush1.msra.mxu0 %v970
      %1382 = vmatprep.subr.mxu0 0.0
      %1383 = vmatpush1.msra.mxu0 %v969
      %1384 = vmatprep.subr.mxu0 0.0
      %1385 = vmatpush1.msra.mxu0 %v968
      %1386 = vmatprep.subr.mxu0 0.0
      %1387 = vmatpush1.msra.mxu0 %v967
      %1388 = vmatprep.subr.mxu0 0.0
      %1389 = vmatpush1.msra.mxu0 %v966
      %1390 = vmatprep.subr.mxu0 0.0
      %1391 = vmatpush1.msra.mxu0 %v965
      %1392 = vmatprep.subr.mxu0 0.0
      %1393 = vmatpush1.msra.mxu0 %v964
      %1394 = vmatprep.subr.mxu0 0.0
      %1395 = vmatpush1.msra.mxu0 %v963
      %1396 = vmatprep.subr.mxu0 0.0
      %1397 = vmatpush1.msra.mxu0 %v962
      %1398 = vmatprep.subr.mxu0 0.0
      %1399 = vmatpush1.msra.mxu0 %v961
      %1400 = vmatprep.subr.mxu0 0.0
      %1401 = vmatpush1.msra.mxu0 %v960
      %1402 = vmatprep.subr.mxu0 0.0
      %1403 = vmatpush1.msra.mxu0 %v959
      %1404 = vmatprep.subr.mxu0 0.0
      %1405 = vmatpush1.msra.mxu0 %v958
      %1406 = vmatprep.subr.mxu0 0.0
      %1407 = vmatpush1.msra.mxu0 %v957
      %1408 = vmatprep.subr.mxu0 0.0
      %1409 = vmatpush2.msra.mxu0 0.0
      %1410 = vmatprep.subr.mxu0 0.0
      %1411 = vmatpush2.msra.mxu0 0.0
      %1412 = vmatprep.subr.mxu0 0.0
      %1413 = vmatpush2.msra.mxu0 0.0
      %1414 = vmatprep.subr.mxu0 0.0
      %1415 = vmatpush2.msra.mxu0 0.0
      %1416 = vmatprep.subr.mxu0 0.0
      %1417 = vmatpush2.msra.mxu0 0.0
      %1418 = vmatprep.subr.mxu0 0.0
      %1419 = vmatpush2.msra.mxu0 0.0
      %1420 = vmatprep.subr.mxu0 0.0
      %1421 = vmatpush2.msra.mxu0 0.0
      %1422 = vmatprep.subr.mxu0 0.0
      %1423 = vmatpush2.msra.mxu0 0.0
      %1424 = vmatprep.subr.mxu0 0.0
      %1425 = vmatpush2.msra.mxu0 0.0
      %1426 = vmatprep.subr.mxu0 0.0
      %1427 = vmatpush2.msra.mxu0 0.0
      %1428 = vmatprep.subr.mxu0 0.0
      %1429 = vmatpush2.msra.mxu0 0.0
      %1430 = vmatprep.subr.mxu0 0.0
      %1431 = vmatpush2.msra.mxu0 0.0
      %1432 = vmatprep.subr.mxu0 0.0
      %1433 = vmatpush2.msra.mxu0 0.0
      %1434 = vmatprep.subr.mxu0 0.0
      %1435 = vmatpush2.msra.mxu0 0.0
      %1436 = vmatprep.subr.mxu0 0.0
      %1437 = vmatpush2.msra.mxu0 0.0
      %1438 = vmatprep.subr.mxu0 0.0
      %1439 = vmatpush2.msra.mxu0 0.0
      %1440 = vmatprep.mubr.f32.mxu0 0.0
      %1441 = vmatmul.mubr.f32.gmra.mxu0 %v903
      %v1442 = vpop.f32.mrf.mxu0
      %v1443 = vadd.f32 %v1218, %v1442
      %v1444 = vpop.f32.mrf.mxu0
      %1445 = vmatprep.mubr.f32.mxu0 0.0
      %1446 = vmatmul.mubr.f32.gmra.mxu0 %v904
      %v1447 = vpop.f32.mrf.mxu0
      %v1448 = vadd.f32 %v1223, %v1447
      %v1449 = vpop.f32.mrf.mxu0
      %1450 = vmatprep.mubr.f32.mxu0 0.0
      %1451 = vmatmul.mubr.f32.gmra.mxu0 %v906
      %v1452 = vpop.f32.mrf.mxu0
      %v1453 = vadd.f32 %v1228, %v1452
      %v1454 = vpop.f32.mrf.mxu0
      %1455 = vmatprep.mubr.f32.mxu0 0.0
      %1456 = vmatmul.mubr.f32.gmra.mxu0 %v907
      %v1457 = vpop.f32.mrf.mxu0
      %v1458 = vadd.f32 %v1233, %v1457
      %v1459 = vpop.f32.mrf.mxu0
      %1460 = vmatprep.mubr.f32.mxu0 0.0
      %1461 = vmatmul.mubr.f32.gmra.mxu0 %v909
      %v1462 = vpop.f32.mrf.mxu0
      %v1463 = vadd.f32 %v1238, %v1462
      %v1464 = vpop.f32.mrf.mxu0
      %1465 = vmatprep.mubr.f32.mxu0 0.0
      %1466 = vmatmul.mubr.f32.gmra.mxu0 %v910
      %v1467 = vpop.f32.mrf.mxu0
      %v1468 = vadd.f32 %v1243, %v1467
      %v1469 = vpop.f32.mrf.mxu0
      %1470 = vmatprep.mubr.f32.mxu0 0.0
      %1471 = vmatmul.mubr.f32.gmra.mxu0 %v912
      %v1472 = vpop.f32.mrf.mxu0
      %v1473 = vadd.f32 %v1248, %v1472
      %v1474 = vpop.f32.mrf.mxu0
      %1475 = vmatprep.mubr.f32.mxu0 0.0
      %1476 = vmatmul.mubr.f32.gmra.mxu0 %v913
      %v1477 = vpop.f32.mrf.mxu0
      %v1478 = vadd.f32 %v1253, %v1477
      %v1479 = vpop.f32.mrf.mxu0
      %1480 = vmatprep.mubr.f32.mxu0 0.0
      %1481 = vmatmul.mubr.f32.gmra.mxu0 %v915
      %v1482 = vpop.f32.mrf.mxu0
      %v1483 = vadd.f32 %v1258, %v1482
      %v1484 = vpop.f32.mrf.mxu0
      %1485 = vmatprep.mubr.f32.mxu0 0.0
      %1486 = vmatmul.mubr.f32.gmra.mxu0 %v916
      %v1487 = vpop.f32.mrf.mxu0
      %v1488 = vadd.f32 %v1263, %v1487
      %v1489 = vpop.f32.mrf.mxu0
      %1490 = vmatprep.mubr.f32.mxu0 0.0
      %1491 = vmatmul.mubr.f32.gmra.mxu0 %v918
      %v1492 = vpop.f32.mrf.mxu0
      %v1493 = vadd.f32 %v1268, %v1492
      %v1494 = vpop.f32.mrf.mxu0
      %1495 = vmatprep.mubr.f32.mxu0 0.0
      %1496 = vmatmul.mubr.f32.gmra.mxu0 %v919
      %v1497 = vpop.f32.mrf.mxu0
      %v1498 = vadd.f32 %v1273, %v1497
      %v1499 = vpop.f32.mrf.mxu0
      %1500 = vmatprep.mubr.f32.mxu0 0.0
      %1501 = vmatmul.mubr.f32.gmra.mxu0 %v921
      %v1502 = vpop.f32.mrf.mxu0
      %v1503 = vadd.f32 %v1278, %v1502
      %v1504 = vpop.f32.mrf.mxu0
      %1505 = vmatprep.mubr.f32.mxu0 0.0
      %1506 = vmatmul.mubr.f32.gmra.mxu0 %v922
      %v1507 = vpop.f32.mrf.mxu0
      %v1508 = vadd.f32 %v1283, %v1507
      %v1509 = vpop.f32.mrf.mxu0
      %1510 = vmatprep.mubr.f32.mxu0 0.0
      %1511 = vmatmul.mubr.f32.gmra.mxu0 %v924
      %v1512 = vpop.f32.mrf.mxu0
      %v1513 = vadd.f32 %v1288, %v1512
      %v1514 = vpop.f32.mrf.mxu0
      %1515 = vmatprep.mubr.f32.mxu0 0.0
      %1516 = vmatmul.mubr.f32.gmra.mxu0 %v925
      %v1517 = vpop.f32.mrf.mxu0
      %v1518 = vadd.f32 %v1293, %v1517
      %v1519 = vpop.f32.mrf.mxu0
      %1520 = vmatprep.mubr.f32.mxu0 0.0
      %1521 = vmatmul.mubr.f32.gmra.mxu0 %v927
      %v1522 = vpop.f32.mrf.mxu0
      %v1523 = vadd.f32 %v1298, %v1522
      %v1524 = vpop.f32.mrf.mxu0
      %1525 = vmatprep.mubr.f32.mxu0 0.0
      %1526 = vmatmul.mubr.f32.gmra.mxu0 %v928
      %v1527 = vpop.f32.mrf.mxu0
      %v1528 = vadd.f32 %v1303, %v1527
      %v1529 = vpop.f32.mrf.mxu0
      %1530 = vmatprep.mubr.f32.mxu0 0.0
      %1531 = vmatmul.mubr.f32.gmra.mxu0 %v930
      %v1532 = vpop.f32.mrf.mxu0
      %v1533 = vadd.f32 %v1308, %v1532
      %v1534 = vpop.f32.mrf.mxu0
      %1535 = vmatprep.mubr.f32.mxu0 0.0
      %1536 = vmatmul.mubr.f32.gmra.mxu0 %v931
      %v1537 = vpop.f32.mrf.mxu0
      %v1538 = vadd.f32 %v1313, %v1537
      %v1539 = vpop.f32.mrf.mxu0
      %1540 = vmatprep.mubr.f32.mxu0 0.0
      %1541 = vmatmul.mubr.f32.gmra.mxu0 %v933
      %v1542 = vpop.f32.mrf.mxu0
      %v1543 = vadd.f32 %v1318, %v1542
      %v1544 = vpop.f32.mrf.mxu0
      %1545 = vmatprep.mubr.f32.mxu0 0.0
      %1546 = vmatmul.mubr.f32.gmra.mxu0 %v934
      %v1547 = vpop.f32.mrf.mxu0
      %v1548 = vadd.f32 %v1323, %v1547
      %v1549 = vpop.f32.mrf.mxu0
      %1550 = vmatprep.mubr.f32.mxu0 0.0
      %1551 = vmatmul.mubr.f32.gmra.mxu0 %v936
      %v1552 = vpop.f32.mrf.mxu0
      %v1553 = vadd.f32 %v1328, %v1552
      %v1554 = vpop.f32.mrf.mxu0
      %1555 = vmatprep.mubr.f32.mxu0 0.0
      %1556 = vmatmul.mubr.f32.gmra.mxu0 %v937
      %v1557 = vpop.f32.mrf.mxu0
      %v1558 = vadd.f32 %v1333, %v1557
      %v1559 = vpop.f32.mrf.mxu0
      %1560 = vmatprep.mubr.f32.mxu0 0.0
      %1561 = vmatmul.mubr.f32.gmra.mxu0 %v939
      %v1562 = vpop.f32.mrf.mxu0
      %v1563 = vadd.f32 %v1338, %v1562
      %v1564 = vpop.f32.mrf.mxu0
      %1565 = vmatprep.mubr.f32.mxu0 0.0
      %1566 = vmatmul.mubr.f32.gmra.mxu0 %v940
      %v1567 = vpop.f32.mrf.mxu0
      %v1568 = vadd.f32 %v1343, %v1567
      %v1569 = vpop.f32.mrf.mxu0
      %1570 = vmatprep.mubr.f32.mxu0 0.0
      %1571 = vmatmul.mubr.f32.gmra.mxu0 %v942
      %v1572 = vpop.f32.mrf.mxu0
      %v1573 = vadd.f32 %v1348, %v1572
      %v1574 = vpop.f32.mrf.mxu0
      %1575 = vmatprep.mubr.f32.mxu0 0.0
      %1576 = vmatmul.mubr.f32.gmra.mxu0 %v943
      %v1577 = vpop.f32.mrf.mxu0
      %v1578 = vadd.f32 %v1353, %v1577
      %v1579 = vpop.f32.mrf.mxu0
      %1580 = vmatprep.mubr.f32.mxu0 0.0
      %1581 = vmatmul.mubr.f32.gmra.mxu0 %v945
      %v1582 = vpop.f32.mrf.mxu0
      %v1583 = vadd.f32 %v1358, %v1582
      %v1584 = vpop.f32.mrf.mxu0
      %1585 = vmatprep.mubr.f32.mxu0 0.0
      %1586 = vmatmul.mubr.f32.gmra.mxu0 %v946
      %v1587 = vpop.f32.mrf.mxu0
      %v1588 = vadd.f32 %v1363, %v1587
      %v1589 = vpop.f32.mrf.mxu0
      %1590 = vmatprep.mubr.f32.mxu0 0.0
      %1591 = vmatmul.mubr.f32.gmra.mxu0 %v948
      %v1592 = vpop.f32.mrf.mxu0
      %v1593 = vadd.f32 %v1368, %v1592
      %v1594 = vpop.f32.mrf.mxu0
      %1595 = vmatprep.mubr.f32.mxu0 0.0
      %1596 = vmatmul.mubr.f32.gmra.mxu0 %v949
      %v1597 = vpop.f32.mrf.mxu0
      %v1598 = vadd.f32 %v1373, %v1597
      %v1599 = vpop.f32.mrf.mxu0
      %1600 = vdwg.mxu0
      %vm1601 = vcmask 1045504
      %v1602 = vrot.slane %v903, 2
      %v1603 = vrot.slane %v904, 2
      %v1604 = vsel %vm1601, %v1602, %v1603
      %v1605 = vrot.slane %v905, 2
      %v1606 = vsel %vm1601, %v1603, %v1605
      %v1607 = vrot.slane %v906, 2
      %v1608 = vrot.slane %v907, 2
      %v1609 = vsel %vm1601, %v1607, %v1608
      %v1610 = vrot.slane %v908, 2
      %v1611 = vsel %vm1601, %v1608, %v1610
      %v1612 = vrot.slane %v909, 2
      %v1613 = vrot.slane %v910, 2
      %v1614 = vsel %vm1601, %v1612, %v1613
      %v1615 = vrot.slane %v911, 2
      %v1616 = vsel %vm1601, %v1613, %v1615
      %v1617 = vrot.slane %v912, 2
      %v1618 = vrot.slane %v913, 2
      %v1619 = vsel %vm1601, %v1617, %v1618
      %v1620 = vrot.slane %v914, 2
      %v1621 = vsel %vm1601, %v1618, %v1620
      %v1622 = vrot.slane %v915, 2
      %v1623 = vrot.slane %v916, 2
      %v1624 = vsel %vm1601, %v1622, %v1623
      %v1625 = vrot.slane %v917, 2
      %v1626 = vsel %vm1601, %v1623, %v1625
      %v1627 = vrot.slane %v918, 2
      %v1628 = vrot.slane %v919, 2
      %v1629 = vsel %vm1601, %v1627, %v1628
      %v1630 = vrot.slane %v920, 2
      %v1631 = vsel %vm1601, %v1628, %v1630
      %v1632 = vrot.slane %v921, 2
      %v1633 = vrot.slane %v922, 2
      %v1634 = vsel %vm1601, %v1632, %v1633
      %v1635 = vrot.slane %v923, 2
      %v1636 = vsel %vm1601, %v1633, %v1635
      %v1637 = vrot.slane %v924, 2
      %v1638 = vrot.slane %v925, 2
      %v1639 = vsel %vm1601, %v1637, %v1638
      %v1640 = vrot.slane %v926, 2
      %v1641 = vsel %vm1601, %v1638, %v1640
      %v1642 = vrot.slane %v927, 2
      %v1643 = vrot.slane %v928, 2
      %v1644 = vsel %vm1601, %v1642, %v1643
      %v1645 = vrot.slane %v929, 2
      %v1646 = vsel %vm1601, %v1643, %v1645
      %v1647 = vrot.slane %v930, 2
      %v1648 = vrot.slane %v931, 2
      %v1649 = vsel %vm1601, %v1647, %v1648
      %v1650 = vrot.slane %v932, 2
      %v1651 = vsel %vm1601, %v1648, %v1650
      %v1652 = vrot.slane %v933, 2
      %v1653 = vrot.slane %v934, 2
      %v1654 = vsel %vm1601, %v1652, %v1653
      %v1655 = vrot.slane %v935, 2
      %v1656 = vsel %vm1601, %v1653, %v1655
      %v1657 = vrot.slane %v936, 2
      %v1658 = vrot.slane %v937, 2
      %v1659 = vsel %vm1601, %v1657, %v1658
      %v1660 = vrot.slane %v938, 2
      %v1661 = vsel %vm1601, %v1658, %v1660
      %v1662 = vrot.slane %v939, 2
      %v1663 = vrot.slane %v940, 2
      %v1664 = vsel %vm1601, %v1662, %v1663
      %v1665 = vrot.slane %v941, 2
      %v1666 = vsel %vm1601, %v1663, %v1665
      %v1667 = vrot.slane %v942, 2
      %v1668 = vrot.slane %v943, 2
      %v1669 = vsel %vm1601, %v1667, %v1668
      %v1670 = vrot.slane %v944, 2
      %v1671 = vsel %vm1601, %v1668, %v1670
      %v1672 = vrot.slane %v945, 2
      %v1673 = vrot.slane %v946, 2
      %v1674 = vsel %vm1601, %v1672, %v1673
      %v1675 = vrot.slane %v947, 2
      %v1676 = vsel %vm1601, %v1673, %v1675
      %v1677 = vrot.slane %v948, 2
      %v1678 = vrot.slane %v949, 2
      %v1679 = vsel %vm1601, %v1677, %v1678
      %v1680 = vrot.slane %v950, 2
      %v1681 = vsel %vm1601, %v1678, %v1680
      %s1714 = scalar_lea.vmem %s328, 256
      %v1715 = vld [vmem:[%s1714] sm:$0xff]
      %v1716 = vld [vmem:[%s1714 + $0x8] sm:$0xff]
      %v1717 = vld [vmem:[%s1714 + $0x10] sm:$0xff]
      %v1718 = vld [vmem:[%s1714 + $0x18] sm:$0xff]
      %v1719 = vld [vmem:[%s1714 + $0x20] sm:$0xff]
      %v1720 = vld [vmem:[%s1714 + $0x28] sm:$0xff]
      %v1721 = vld [vmem:[%s1714 + $0x30] sm:$0xff]
      %v1722 = vld [vmem:[%s1714 + $0x38] sm:$0xff]
      %v1723 = vld [vmem:[%s1714 + $0x40] sm:$0xff]
      %v1724 = vld [vmem:[%s1714 + $0x48] sm:$0xff]
      %v1725 = vld [vmem:[%s1714 + $0x50] sm:$0xff]
      %v1726 = vld [vmem:[%s1714 + $0x58] sm:$0xff]
      %v1727 = vld [vmem:[%s1714 + $0x60] sm:$0xff]
      %v1728 = vld [vmem:[%s1714 + $0x68] sm:$0xff]
      %v1729 = vld [vmem:[%s1714 + $0x70] sm:$0xff]
      %v1730 = vld [vmem:[%s1714 + $0x78] sm:$0xff]
      %1731 = vmatprep.subr.mxu0 0.0
      %1732 = vmatpush1.msra.mxu0 %v1730
      %1733 = vmatprep.subr.mxu0 0.0
      %1734 = vmatpush1.msra.mxu0 %v1729
      %1735 = vmatprep.subr.mxu0 0.0
      %1736 = vmatpush1.msra.mxu0 %v1728
      %1737 = vmatprep.subr.mxu0 0.0
      %1738 = vmatpush1.msra.mxu0 %v1727
      %1739 = vmatprep.subr.mxu0 0.0
      %1740 = vmatpush1.msra.mxu0 %v1726
      %1741 = vmatprep.subr.mxu0 0.0
      %1742 = vmatpush1.msra.mxu0 %v1725
      %1743 = vmatprep.subr.mxu0 0.0
      %1744 = vmatpush1.msra.mxu0 %v1724
      %1745 = vmatprep.subr.mxu0 0.0
      %1746 = vmatpush1.msra.mxu0 %v1723
      %1747 = vmatprep.subr.mxu0 0.0
      %1748 = vmatpush1.msra.mxu0 %v1722
      %1749 = vmatprep.subr.mxu0 0.0
      %1750 = vmatpush1.msra.mxu0 %v1721
      %1751 = vmatprep.subr.mxu0 0.0
      %1752 = vmatpush1.msra.mxu0 %v1720
      %1753 = vmatprep.subr.mxu0 0.0
      %1754 = vmatpush1.msra.mxu0 %v1719
      %1755 = vmatprep.subr.mxu0 0.0
      %1756 = vmatpush1.msra.mxu0 %v1718
      %1757 = vmatprep.subr.mxu0 0.0
      %1758 = vmatpush1.msra.mxu0 %v1717
      %1759 = vmatprep.subr.mxu0 0.0
      %1760 = vmatpush1.msra.mxu0 %v1716
      %1761 = vmatprep.subr.mxu0 0.0
      %1762 = vmatpush1.msra.mxu0 %v1715
      %1763 = vmatprep.subr.mxu0 0.0
      %1764 = vmatpush2.msra.mxu0 0.0
      %1765 = vmatprep.subr.mxu0 0.0
      %1766 = vmatpush2.msra.mxu0 0.0
      %1767 = vmatprep.subr.mxu0 0.0
      %1768 = vmatpush2.msra.mxu0 0.0
      %1769 = vmatprep.subr.mxu0 0.0
      %1770 = vmatpush2.msra.mxu0 0.0
      %1771 = vmatprep.subr.mxu0 0.0
      %1772 = vmatpush2.msra.mxu0 0.0
      %1773 = vmatprep.subr.mxu0 0.0
      %1774 = vmatpush2.msra.mxu0 0.0
      %1775 = vmatprep.subr.mxu0 0.0
      %1776 = vmatpush2.msra.mxu0 0.0
      %1777 = vmatprep.subr.mxu0 0.0
      %1778 = vmatpush2.msra.mxu0 0.0
      %1779 = vmatprep.subr.mxu0 0.0
      %1780 = vmatpush2.msra.mxu0 0.0
      %1781 = vmatprep.subr.mxu0 0.0
      %1782 = vmatpush2.msra.mxu0 0.0
      %1783 = vmatprep.subr.mxu0 0.0
      %1784 = vmatpush2.msra.mxu0 0.0
      %1785 = vmatprep.subr.mxu0 0.0
      %1786 = vmatpush2.msra.mxu0 0.0
      %1787 = vmatprep.subr.mxu0 0.0
      %1788 = vmatpush2.msra.mxu0 0.0
      %1789 = vmatprep.subr.mxu0 0.0
      %1790 = vmatpush2.msra.mxu0 0.0
      %1791 = vmatprep.subr.mxu0 0.0
      %1792 = vmatpush2.msra.mxu0 0.0
      %1793 = vmatprep.subr.mxu0 0.0
      %1794 = vmatpush2.msra.mxu0 0.0
      %1795 = vmatprep.mubr.f32.mxu0 0.0
      %1796 = vmatmul.mubr.f32.gmra.mxu0 %v1604
      %v1797 = vpop.f32.mrf.mxu0
      %v1798 = vadd.f32 0.0, %v1797
      %v1799 = vpop.f32.mrf.mxu0
      %1800 = vmatprep.mubr.f32.mxu0 0.0
      %1801 = vmatmul.mubr.f32.gmra.mxu0 %v1606
      %v1802 = vpop.f32.mrf.mxu0
      %v1803 = vadd.f32 0.0, %v1802
      %v1804 = vpop.f32.mrf.mxu0
      %1805 = vmatprep.mubr.f32.mxu0 0.0
      %1806 = vmatmul.mubr.f32.gmra.mxu0 %v1609
      %v1807 = vpop.f32.mrf.mxu0
      %v1808 = vadd.f32 0.0, %v1807
      %v1809 = vpop.f32.mrf.mxu0
      %1810 = vmatprep.mubr.f32.mxu0 0.0
      %1811 = vmatmul.mubr.f32.gmra.mxu0 %v1611
      %v1812 = vpop.f32.mrf.mxu0
      %v1813 = vadd.f32 0.0, %v1812
      %v1814 = vpop.f32.mrf.mxu0
      %1815 = vmatprep.mubr.f32.mxu0 0.0
      %1816 = vmatmul.mubr.f32.gmra.mxu0 %v1614
      %v1817 = vpop.f32.mrf.mxu0
      %v1818 = vadd.f32 0.0, %v1817
      %v1819 = vpop.f32.mrf.mxu0
      %1820 = vmatprep.mubr.f32.mxu0 0.0
      %1821 = vmatmul.mubr.f32.gmra.mxu0 %v1616
      %v1822 = vpop.f32.mrf.mxu0
      %v1823 = vadd.f32 0.0, %v1822
      %v1824 = vpop.f32.mrf.mxu0
      %1825 = vmatprep.mubr.f32.mxu0 0.0
      %1826 = vmatmul.mubr.f32.gmra.mxu0 %v1619
      %v1827 = vpop.f32.mrf.mxu0
      %v1828 = vadd.f32 0.0, %v1827
      %v1829 = vpop.f32.mrf.mxu0
      %1830 = vmatprep.mubr.f32.mxu0 0.0
      %1831 = vmatmul.mubr.f32.gmra.mxu0 %v1621
      %v1832 = vpop.f32.mrf.mxu0
      %v1833 = vadd.f32 0.0, %v1832
      %v1834 = vpop.f32.mrf.mxu0
      %1835 = vmatprep.mubr.f32.mxu0 0.0
      %1836 = vmatmul.mubr.f32.gmra.mxu0 %v1624
      %v1837 = vpop.f32.mrf.mxu0
      %v1838 = vadd.f32 0.0, %v1837
      %v1839 = vpop.f32.mrf.mxu0
      %1840 = vmatprep.mubr.f32.mxu0 0.0
      %1841 = vmatmul.mubr.f32.gmra.mxu0 %v1626
      %v1842 = vpop.f32.mrf.mxu0
      %v1843 = vadd.f32 0.0, %v1842
      %v1844 = vpop.f32.mrf.mxu0
      %1845 = vmatprep.mubr.f32.mxu0 0.0
      %1846 = vmatmul.mubr.f32.gmra.mxu0 %v1629
      %v1847 = vpop.f32.mrf.mxu0
      %v1848 = vadd.f32 0.0, %v1847
      %v1849 = vpop.f32.mrf.mxu0
      %1850 = vmatprep.mubr.f32.mxu0 0.0
      %1851 = vmatmul.mubr.f32.gmra.mxu0 %v1631
      %v1852 = vpop.f32.mrf.mxu0
      %v1853 = vadd.f32 0.0, %v1852
      %v1854 = vpop.f32.mrf.mxu0
      %1855 = vmatprep.mubr.f32.mxu0 0.0
      %1856 = vmatmul.mubr.f32.gmra.mxu0 %v1634
      %v1857 = vpop.f32.mrf.mxu0
      %v1858 = vadd.f32 0.0, %v1857
      %v1859 = vpop.f32.mrf.mxu0
      %1860 = vmatprep.mubr.f32.mxu0 0.0
      %1861 = vmatmul.mubr.f32.gmra.mxu0 %v1636
      %v1862 = vpop.f32.mrf.mxu0
      %v1863 = vadd.f32 0.0, %v1862
      %v1864 = vpop.f32.mrf.mxu0
      %1865 = vmatprep.mubr.f32.mxu0 0.0
      %1866 = vmatmul.mubr.f32.gmra.mxu0 %v1639
      %v1867 = vpop.f32.mrf.mxu0
      %v1868 = vadd.f32 0.0, %v1867
      %v1869 = vpop.f32.mrf.mxu0
      %1870 = vmatprep.mubr.f32.mxu0 0.0
      %1871 = vmatmul.mubr.f32.gmra.mxu0 %v1641
      %v1872 = vpop.f32.mrf.mxu0
      %v1873 = vadd.f32 0.0, %v1872
      %v1874 = vpop.f32.mrf.mxu0
      %1875 = vmatprep.mubr.f32.mxu0 0.0
      %1876 = vmatmul.mubr.f32.gmra.mxu0 %v1644
      %v1877 = vpop.f32.mrf.mxu0
      %v1878 = vadd.f32 0.0, %v1877
      %v1879 = vpop.f32.mrf.mxu0
      %1880 = vmatprep.mubr.f32.mxu0 0.0
      %1881 = vmatmul.mubr.f32.gmra.mxu0 %v1646
      %v1882 = vpop.f32.mrf.mxu0
      %v1883 = vadd.f32 0.0, %v1882
      %v1884 = vpop.f32.mrf.mxu0
      %1885 = vmatprep.mubr.f32.mxu0 0.0
      %1886 = vmatmul.mubr.f32.gmra.mxu0 %v1649
      %v1887 = vpop.f32.mrf.mxu0
      %v1888 = vadd.f32 0.0, %v1887
      %v1889 = vpop.f32.mrf.mxu0
      %1890 = vmatprep.mubr.f32.mxu0 0.0
      %1891 = vmatmul.mubr.f32.gmra.mxu0 %v1651
      %v1892 = vpop.f32.mrf.mxu0
      %v1893 = vadd.f32 0.0, %v1892
      %v1894 = vpop.f32.mrf.mxu0
      %1895 = vmatprep.mubr.f32.mxu0 0.0
      %1896 = vmatmul.mubr.f32.gmra.mxu0 %v1654
      %v1897 = vpop.f32.mrf.mxu0
      %v1898 = vadd.f32 0.0, %v1897
      %v1899 = vpop.f32.mrf.mxu0
      %1900 = vmatprep.mubr.f32.mxu0 0.0
      %1901 = vmatmul.mubr.f32.gmra.mxu0 %v1656
      %v1902 = vpop.f32.mrf.mxu0
      %v1903 = vadd.f32 0.0, %v1902
      %v1904 = vpop.f32.mrf.mxu0
      %1905 = vmatprep.mubr.f32.mxu0 0.0
      %1906 = vmatmul.mubr.f32.gmra.mxu0 %v1659
      %v1907 = vpop.f32.mrf.mxu0
      %v1908 = vadd.f32 0.0, %v1907
      %v1909 = vpop.f32.mrf.mxu0
      %1910 = vmatprep.mubr.f32.mxu0 0.0
      %1911 = vmatmul.mubr.f32.gmra.mxu0 %v1661
      %v1912 = vpop.f32.mrf.mxu0
      %v1913 = vadd.f32 0.0, %v1912
      %v1914 = vpop.f32.mrf.mxu0
      %1915 = vmatprep.mubr.f32.mxu0 0.0
      %1916 = vmatmul.mubr.f32.gmra.mxu0 %v1664
      %v1917 = vpop.f32.mrf.mxu0
      %v1918 = vadd.f32 0.0, %v1917
      %v1919 = vpop.f32.mrf.mxu0
      %1920 = vmatprep.mubr.f32.mxu0 0.0
      %1921 = vmatmul.mubr.f32.gmra.mxu0 %v1666
      %v1922 = vpop.f32.mrf.mxu0
      %v1923 = vadd.f32 0.0, %v1922
      %v1924 = vpop.f32.mrf.mxu0
      %1925 = vmatprep.mubr.f32.mxu0 0.0
      %1926 = vmatmul.mubr.f32.gmra.mxu0 %v1669
      %v1927 = vpop.f32.mrf.mxu0
      %v1928 = vadd.f32 0.0, %v1927
      %v1929 = vpop.f32.mrf.mxu0
      %1930 = vmatprep.mubr.f32.mxu0 0.0
      %1931 = vmatmul.mubr.f32.gmra.mxu0 %v1671
      %v1932 = vpop.f32.mrf.mxu0
      %v1933 = vadd.f32 0.0, %v1932
      %v1934 = vpop.f32.mrf.mxu0
      %1935 = vmatprep.mubr.f32.mxu0 0.0
      %1936 = vmatmul.mubr.f32.gmra.mxu0 %v1674
      %v1937 = vpop.f32.mrf.mxu0
      %v1938 = vadd.f32 0.0, %v1937
      %v1939 = vpop.f32.mrf.mxu0
      %1940 = vmatprep.mubr.f32.mxu0 0.0
      %1941 = vmatmul.mubr.f32.gmra.mxu0 %v1676
      %v1942 = vpop.f32.mrf.mxu0
      %v1943 = vadd.f32 0.0, %v1942
      %v1944 = vpop.f32.mrf.mxu0
      %1945 = vmatprep.mubr.f32.mxu0 0.0
      %1946 = vmatmul.mubr.f32.gmra.mxu0 %v1679
      %v1947 = vpop.f32.mrf.mxu0
      %v1948 = vadd.f32 0.0, %v1947
      %v1949 = vpop.f32.mrf.mxu0
      %1950 = vmatprep.mubr.f32.mxu0 0.0
      %1951 = vmatmul.mubr.f32.gmra.mxu0 %v1681
      %v1952 = vpop.f32.mrf.mxu0
      %v1953 = vadd.f32 0.0, %v1952
      %v1954 = vpop.f32.mrf.mxu0
      %1955 = vdwg.mxu0
      %v1956 = vadd.f32 %v1443, %v1798
      %v1957 = vadd.f32 %v1448, %v1803
      %v1958 = vadd.f32 %v1453, %v1808
      %v1959 = vadd.f32 %v1458, %v1813
      %v1960 = vadd.f32 %v1463, %v1818
      %v1961 = vadd.f32 %v1468, %v1823
      %v1962 = vadd.f32 %v1473, %v1828
      %v1963 = vadd.f32 %v1478, %v1833
      %v1964 = vadd.f32 %v1483, %v1838
      %v1965 = vadd.f32 %v1488, %v1843
      %v1966 = vadd.f32 %v1493, %v1848
      %v1967 = vadd.f32 %v1498, %v1853
      %v1968 = vadd.f32 %v1503, %v1858
      %v1969 = vadd.f32 %v1508, %v1863
      %v1970 = vadd.f32 %v1513, %v1868
      %v1971 = vadd.f32 %v1518, %v1873
      %v1972 = vadd.f32 %v1523, %v1878
      %v1973 = vadd.f32 %v1528, %v1883
      %v1974 = vadd.f32 %v1533, %v1888
      %v1975 = vadd.f32 %v1538, %v1893
      %v1976 = vadd.f32 %v1543, %v1898
      %v1977 = vadd.f32 %v1548, %v1903
      %v1978 = vadd.f32 %v1553, %v1908
      %v1979 = vadd.f32 %v1558, %v1913
      %v1980 = vadd.f32 %v1563, %v1918
      %v1981 = vadd.f32 %v1568, %v1923
      %v1982 = vadd.f32 %v1573, %v1928
      %v1983 = vadd.f32 %v1578, %v1933
      %v1984 = vadd.f32 %v1583, %v1938
      %v1985 = vadd.f32 %v1588, %v1943
      %v1986 = vadd.f32 %v1593, %v1948
      %v1987 = vadd.f32 %v1598, %v1953
      %s1988 = scalar_lea.vmem %s328, 384
      %v1989 = vld [vmem:[%s1988] sm:$0xff]
      %v1990 = vld [vmem:[%s1988 + $0x8] sm:$0xff]
      %v1991 = vld [vmem:[%s1988 + $0x10] sm:$0xff]
      %v1992 = vld [vmem:[%s1988 + $0x18] sm:$0xff]
      %v1993 = vld [vmem:[%s1988 + $0x20] sm:$0xff]
      %v1994 = vld [vmem:[%s1988 + $0x28] sm:$0xff]
      %v1995 = vld [vmem:[%s1988 + $0x30] sm:$0xff]
      %v1996 = vld [vmem:[%s1988 + $0x38] sm:$0xff]
      %v1997 = vld [vmem:[%s1988 + $0x40] sm:$0xff]
      %v1998 = vld [vmem:[%s1988 + $0x48] sm:$0xff]
      %v1999 = vld [vmem:[%s1988 + $0x50] sm:$0xff]
      %v2000 = vld [vmem:[%s1988 + $0x58] sm:$0xff]
      %v2001 = vld [vmem:[%s1988 + $0x60] sm:$0xff]
      %v2002 = vld [vmem:[%s1988 + $0x68] sm:$0xff]
      %v2003 = vld [vmem:[%s1988 + $0x70] sm:$0xff]
      %v2004 = vld [vmem:[%s1988 + $0x78] sm:$0xff]
      %2005 = vmatprep.subr.mxu0 0.0
      %2006 = vmatpush1.msra.mxu0 %v2004
      %2007 = vmatprep.subr.mxu0 0.0
      %2008 = vmatpush1.msra.mxu0 %v2003
      %2009 = vmatprep.subr.mxu0 0.0
      %2010 = vmatpush1.msra.mxu0 %v2002
      %2011 = vmatprep.subr.mxu0 0.0
      %2012 = vmatpush1.msra.mxu0 %v2001
      %2013 = vmatprep.subr.mxu0 0.0
      %2014 = vmatpush1.msra.mxu0 %v2000
      %2015 = vmatprep.subr.mxu0 0.0
      %2016 = vmatpush1.msra.mxu0 %v1999
      %2017 = vmatprep.subr.mxu0 0.0
      %2018 = vmatpush1.msra.mxu0 %v1998
      %2019 = vmatprep.subr.mxu0 0.0
      %2020 = vmatpush1.msra.mxu0 %v1997
      %2021 = vmatprep.subr.mxu0 0.0
      %2022 = vmatpush1.msra.mxu0 %v1996
      %2023 = vmatprep.subr.mxu0 0.0
      %2024 = vmatpush1.msra.mxu0 %v1995
      %2025 = vmatprep.subr.mxu0 0.0
      %2026 = vmatpush1.msra.mxu0 %v1994
      %2027 = vmatprep.subr.mxu0 0.0
      %2028 = vmatpush1.msra.mxu0 %v1993
      %2029 = vmatprep.subr.mxu0 0.0
      %2030 = vmatpush1.msra.mxu0 %v1992
      %2031 = vmatprep.subr.mxu0 0.0
      %2032 = vmatpush1.msra.mxu0 %v1991
      %2033 = vmatprep.subr.mxu0 0.0
      %2034 = vmatpush1.msra.mxu0 %v1990
      %2035 = vmatprep.subr.mxu0 0.0
      %2036 = vmatpush1.msra.mxu0 %v1989
      %2037 = vmatprep.subr.mxu0 0.0
      %2038 = vmatpush2.msra.mxu0 0.0
      %2039 = vmatprep.subr.mxu0 0.0
      %2040 = vmatpush2.msra.mxu0 0.0
      %2041 = vmatprep.subr.mxu0 0.0
      %2042 = vmatpush2.msra.mxu0 0.0
      %2043 = vmatprep.subr.mxu0 0.0
      %2044 = vmatpush2.msra.mxu0 0.0
      %2045 = vmatprep.subr.mxu0 0.0
      %2046 = vmatpush2.msra.mxu0 0.0
      %2047 = vmatprep.subr.mxu0 0.0
      %2048 = vmatpush2.msra.mxu0 0.0
      %2049 = vmatprep.subr.mxu0 0.0
      %2050 = vmatpush2.msra.mxu0 0.0
      %2051 = vmatprep.subr.mxu0 0.0
      %2052 = vmatpush2.msra.mxu0 0.0
      %2053 = vmatprep.subr.mxu0 0.0
      %2054 = vmatpush2.msra.mxu0 0.0
      %2055 = vmatprep.subr.mxu0 0.0
      %2056 = vmatpush2.msra.mxu0 0.0
      %2057 = vmatprep.subr.mxu0 0.0
      %2058 = vmatpush2.msra.mxu0 0.0
      %2059 = vmatprep.subr.mxu0 0.0
      %2060 = vmatpush2.msra.mxu0 0.0
      %2061 = vmatprep.subr.mxu0 0.0
      %2062 = vmatpush2.msra.mxu0 0.0
      %2063 = vmatprep.subr.mxu0 0.0
      %2064 = vmatpush2.msra.mxu0 0.0
      %2065 = vmatprep.subr.mxu0 0.0
      %2066 = vmatpush2.msra.mxu0 0.0
      %2067 = vmatprep.subr.mxu0 0.0
      %2068 = vmatpush2.msra.mxu0 0.0
      %2069 = vmatprep.mubr.f32.mxu0 0.0
      %2070 = vmatmul.mubr.f32.gmra.mxu0 %v906
      %v2071 = vpop.f32.mrf.mxu0
      %v2072 = vadd.f32 0.0, %v2071
      %v2073 = vpop.f32.mrf.mxu0
      %2074 = vmatprep.mubr.f32.mxu0 0.0
      %2075 = vmatmul.mubr.f32.gmra.mxu0 %v907
      %v2076 = vpop.f32.mrf.mxu0
      %v2077 = vadd.f32 0.0, %v2076
      %v2078 = vpop.f32.mrf.mxu0
      %2079 = vmatprep.mubr.f32.mxu0 0.0
      %2080 = vmatmul.mubr.f32.gmra.mxu0 %v909
      %v2081 = vpop.f32.mrf.mxu0
      %v2082 = vadd.f32 0.0, %v2081
      %v2083 = vpop.f32.mrf.mxu0
      %2084 = vmatprep.mubr.f32.mxu0 0.0
      %2085 = vmatmul.mubr.f32.gmra.mxu0 %v910
      %v2086 = vpop.f32.mrf.mxu0
      %v2087 = vadd.f32 0.0, %v2086
      %v2088 = vpop.f32.mrf.mxu0
      %2089 = vmatprep.mubr.f32.mxu0 0.0
      %2090 = vmatmul.mubr.f32.gmra.mxu0 %v912
      %v2091 = vpop.f32.mrf.mxu0
      %v2092 = vadd.f32 0.0, %v2091
      %v2093 = vpop.f32.mrf.mxu0
      %2094 = vmatprep.mubr.f32.mxu0 0.0
      %2095 = vmatmul.mubr.f32.gmra.mxu0 %v913
      %v2096 = vpop.f32.mrf.mxu0
      %v2097 = vadd.f32 0.0, %v2096
      %v2098 = vpop.f32.mrf.mxu0
      %2099 = vmatprep.mubr.f32.mxu0 0.0
      %2100 = vmatmul.mubr.f32.gmra.mxu0 %v915
      %v2101 = vpop.f32.mrf.mxu0
      %v2102 = vadd.f32 0.0, %v2101
      %v2103 = vpop.f32.mrf.mxu0
      %2104 = vmatprep.mubr.f32.mxu0 0.0
      %2105 = vmatmul.mubr.f32.gmra.mxu0 %v916
      %v2106 = vpop.f32.mrf.mxu0
      %v2107 = vadd.f32 0.0, %v2106
      %v2108 = vpop.f32.mrf.mxu0
      %2109 = vmatprep.mubr.f32.mxu0 0.0
      %2110 = vmatmul.mubr.f32.gmra.mxu0 %v918
      %v2111 = vpop.f32.mrf.mxu0
      %v2112 = vadd.f32 0.0, %v2111
      %v2113 = vpop.f32.mrf.mxu0
      %2114 = vmatprep.mubr.f32.mxu0 0.0
      %2115 = vmatmul.mubr.f32.gmra.mxu0 %v919
      %v2116 = vpop.f32.mrf.mxu0
      %v2117 = vadd.f32 0.0, %v2116
      %v2118 = vpop.f32.mrf.mxu0
      %2119 = vmatprep.mubr.f32.mxu0 0.0
      %2120 = vmatmul.mubr.f32.gmra.mxu0 %v921
      %v2121 = vpop.f32.mrf.mxu0
      %v2122 = vadd.f32 0.0, %v2121
      %v2123 = vpop.f32.mrf.mxu0
      %2124 = vmatprep.mubr.f32.mxu0 0.0
      %2125 = vmatmul.mubr.f32.gmra.mxu0 %v922
      %v2126 = vpop.f32.mrf.mxu0
      %v2127 = vadd.f32 0.0, %v2126
      %v2128 = vpop.f32.mrf.mxu0
      %2129 = vmatprep.mubr.f32.mxu0 0.0
      %2130 = vmatmul.mubr.f32.gmra.mxu0 %v924
      %v2131 = vpop.f32.mrf.mxu0
      %v2132 = vadd.f32 0.0, %v2131
      %v2133 = vpop.f32.mrf.mxu0
      %2134 = vmatprep.mubr.f32.mxu0 0.0
      %2135 = vmatmul.mubr.f32.gmra.mxu0 %v925
      %v2136 = vpop.f32.mrf.mxu0
      %v2137 = vadd.f32 0.0, %v2136
      %v2138 = vpop.f32.mrf.mxu0
      %2139 = vmatprep.mubr.f32.mxu0 0.0
      %2140 = vmatmul.mubr.f32.gmra.mxu0 %v927
      %v2141 = vpop.f32.mrf.mxu0
      %v2142 = vadd.f32 0.0, %v2141
      %v2143 = vpop.f32.mrf.mxu0
      %2144 = vmatprep.mubr.f32.mxu0 0.0
      %2145 = vmatmul.mubr.f32.gmra.mxu0 %v928
      %v2146 = vpop.f32.mrf.mxu0
      %v2147 = vadd.f32 0.0, %v2146
      %v2148 = vpop.f32.mrf.mxu0
      %2149 = vmatprep.mubr.f32.mxu0 0.0
      %2150 = vmatmul.mubr.f32.gmra.mxu0 %v930
      %v2151 = vpop.f32.mrf.mxu0
      %v2152 = vadd.f32 0.0, %v2151
      %v2153 = vpop.f32.mrf.mxu0
      %2154 = vmatprep.mubr.f32.mxu0 0.0
      %2155 = vmatmul.mubr.f32.gmra.mxu0 %v931
      %v2156 = vpop.f32.mrf.mxu0
      %v2157 = vadd.f32 0.0, %v2156
      %v2158 = vpop.f32.mrf.mxu0
      %2159 = vmatprep.mubr.f32.mxu0 0.0
      %2160 = vmatmul.mubr.f32.gmra.mxu0 %v933
      %v2161 = vpop.f32.mrf.mxu0
      %v2162 = vadd.f32 0.0, %v2161
      %v2163 = vpop.f32.mrf.mxu0
      %2164 = vmatprep.mubr.f32.mxu0 0.0
      %2165 = vmatmul.mubr.f32.gmra.mxu0 %v934
      %v2166 = vpop.f32.mrf.mxu0
      %v2167 = vadd.f32 0.0, %v2166
      %v2168 = vpop.f32.mrf.mxu0
      %2169 = vmatprep.mubr.f32.mxu0 0.0
      %2170 = vmatmul.mubr.f32.gmra.mxu0 %v936
      %v2171 = vpop.f32.mrf.mxu0
      %v2172 = vadd.f32 0.0, %v2171
      %v2173 = vpop.f32.mrf.mxu0
      %2174 = vmatprep.mubr.f32.mxu0 0.0
      %2175 = vmatmul.mubr.f32.gmra.mxu0 %v937
      %v2176 = vpop.f32.mrf.mxu0
      %v2177 = vadd.f32 0.0, %v2176
      %v2178 = vpop.f32.mrf.mxu0
      %2179 = vmatprep.mubr.f32.mxu0 0.0
      %2180 = vmatmul.mubr.f32.gmra.mxu0 %v939
      %v2181 = vpop.f32.mrf.mxu0
      %v2182 = vadd.f32 0.0, %v2181
      %v2183 = vpop.f32.mrf.mxu0
      %2184 = vmatprep.mubr.f32.mxu0 0.0
      %2185 = vmatmul.mubr.f32.gmra.mxu0 %v940
      %v2186 = vpop.f32.mrf.mxu0
      %v2187 = vadd.f32 0.0, %v2186
      %v2188 = vpop.f32.mrf.mxu0
      %2189 = vmatprep.mubr.f32.mxu0 0.0
      %2190 = vmatmul.mubr.f32.gmra.mxu0 %v942
      %v2191 = vpop.f32.mrf.mxu0
      %v2192 = vadd.f32 0.0, %v2191
      %v2193 = vpop.f32.mrf.mxu0
      %2194 = vmatprep.mubr.f32.mxu0 0.0
      %2195 = vmatmul.mubr.f32.gmra.mxu0 %v943
      %v2196 = vpop.f32.mrf.mxu0
      %v2197 = vadd.f32 0.0, %v2196
      %v2198 = vpop.f32.mrf.mxu0
      %2199 = vmatprep.mubr.f32.mxu0 0.0
      %2200 = vmatmul.mubr.f32.gmra.mxu0 %v945
      %v2201 = vpop.f32.mrf.mxu0
      %v2202 = vadd.f32 0.0, %v2201
      %v2203 = vpop.f32.mrf.mxu0
      %2204 = vmatprep.mubr.f32.mxu0 0.0
      %2205 = vmatmul.mubr.f32.gmra.mxu0 %v946
      %v2206 = vpop.f32.mrf.mxu0
      %v2207 = vadd.f32 0.0, %v2206
      %v2208 = vpop.f32.mrf.mxu0
      %2209 = vmatprep.mubr.f32.mxu0 0.0
      %2210 = vmatmul.mubr.f32.gmra.mxu0 %v948
      %v2211 = vpop.f32.mrf.mxu0
      %v2212 = vadd.f32 0.0, %v2211
      %v2213 = vpop.f32.mrf.mxu0
      %2214 = vmatprep.mubr.f32.mxu0 0.0
      %2215 = vmatmul.mubr.f32.gmra.mxu0 %v949
      %v2216 = vpop.f32.mrf.mxu0
      %v2217 = vadd.f32 0.0, %v2216
      %v2218 = vpop.f32.mrf.mxu0
      %2219 = vmatprep.mubr.f32.mxu0 0.0
      %2220 = vmatmul.mubr.f32.gmra.mxu0 %v951
      %v2221 = vpop.f32.mrf.mxu0
      %v2222 = vadd.f32 0.0, %v2221
      %v2223 = vpop.f32.mrf.mxu0
      %2224 = vmatprep.mubr.f32.mxu0 0.0
      %2225 = vmatmul.mubr.f32.gmra.mxu0 %v952
      %v2226 = vpop.f32.mrf.mxu0
      %v2227 = vadd.f32 0.0, %v2226
      %v2228 = vpop.f32.mrf.mxu0
      %2229 = vdwg.mxu0
      %v2230 = vadd.f32 %v1956, %v2072
      %v2231 = vadd.f32 %v1957, %v2077
      %v2232 = vadd.f32 %v1958, %v2082
      %v2233 = vadd.f32 %v1959, %v2087
      %v2234 = vadd.f32 %v1960, %v2092
      %v2235 = vadd.f32 %v1961, %v2097
      %v2236 = vadd.f32 %v1962, %v2102
      %v2237 = vadd.f32 %v1963, %v2107
      %v2238 = vadd.f32 %v1964, %v2112
      %v2239 = vadd.f32 %v1965, %v2117
      %v2240 = vadd.f32 %v1966, %v2122
      %v2241 = vadd.f32 %v1967, %v2127
      %v2242 = vadd.f32 %v1968, %v2132
      %v2243 = vadd.f32 %v1969, %v2137
      %v2244 = vadd.f32 %v1970, %v2142
      %v2245 = vadd.f32 %v1971, %v2147
      %v2246 = vadd.f32 %v1972, %v2152
      %v2247 = vadd.f32 %v1973, %v2157
      %v2248 = vadd.f32 %v1974, %v2162
      %v2249 = vadd.f32 %v1975, %v2167
      %v2250 = vadd.f32 %v1976, %v2172
      %v2251 = vadd.f32 %v1977, %v2177
      %v2252 = vadd.f32 %v1978, %v2182
      %v2253 = vadd.f32 %v1979, %v2187
      %v2254 = vadd.f32 %v1980, %v2192
      %v2255 = vadd.f32 %v1981, %v2197
      %v2256 = vadd.f32 %v1982, %v2202
      %v2257 = vadd.f32 %v1983, %v2207
      %v2258 = vadd.f32 %v1984, %v2212
      %v2259 = vadd.f32 %v1985, %v2217
      %v2260 = vadd.f32 %v1986, %v2222
      %v2261 = vadd.f32 %v1987, %v2227
      %v2265 = vrot.slane %v951, 1
      %v2266 = vrot.slane %v952, 1
      %v2267 = vsel %vm1021, %v2265, %v2266
      %v2268 = vrot.slane %v953, 1
      %v2269 = vsel %vm1021, %v2266, %v2268
      %s2272 = scalar_lea.vmem %s328, 512
      %v2273 = vld [vmem:[%s2272] sm:$0xff]
      %v2274 = vld [vmem:[%s2272 + $0x8] sm:$0xff]
      %v2275 = vld [vmem:[%s2272 + $0x10] sm:$0xff]
      %v2276 = vld [vmem:[%s2272 + $0x18] sm:$0xff]
      %v2277 = vld [vmem:[%s2272 + $0x20] sm:$0xff]
      %v2278 = vld [vmem:[%s2272 + $0x28] sm:$0xff]
      %v2279 = vld [vmem:[%s2272 + $0x30] sm:$0xff]
      %v2280 = vld [vmem:[%s2272 + $0x38] sm:$0xff]
      %v2281 = vld [vmem:[%s2272 + $0x40] sm:$0xff]
      %v2282 = vld [vmem:[%s2272 + $0x48] sm:$0xff]
      %v2283 = vld [vmem:[%s2272 + $0x50] sm:$0xff]
      %v2284 = vld [vmem:[%s2272 + $0x58] sm:$0xff]
      %v2285 = vld [vmem:[%s2272 + $0x60] sm:$0xff]
      %v2286 = vld [vmem:[%s2272 + $0x68] sm:$0xff]
      %v2287 = vld [vmem:[%s2272 + $0x70] sm:$0xff]
      %v2288 = vld [vmem:[%s2272 + $0x78] sm:$0xff]
      %2289 = vmatprep.subr.mxu0 0.0
      %2290 = vmatpush1.msra.mxu0 %v2288
      %2291 = vmatprep.subr.mxu0 0.0
      %2292 = vmatpush1.msra.mxu0 %v2287
      %2293 = vmatprep.subr.mxu0 0.0
      %2294 = vmatpush1.msra.mxu0 %v2286
      %2295 = vmatprep.subr.mxu0 0.0
      %2296 = vmatpush1.msra.mxu0 %v2285
      %2297 = vmatprep.subr.mxu0 0.0
      %2298 = vmatpush1.msra.mxu0 %v2284
      %2299 = vmatprep.subr.mxu0 0.0
      %2300 = vmatpush1.msra.mxu0 %v2283
      %2301 = vmatprep.subr.mxu0 0.0
      %2302 = vmatpush1.msra.mxu0 %v2282
      %2303 = vmatprep.subr.mxu0 0.0
      %2304 = vmatpush1.msra.mxu0 %v2281
      %2305 = vmatprep.subr.mxu0 0.0
      %2306 = vmatpush1.msra.mxu0 %v2280
      %2307 = vmatprep.subr.mxu0 0.0
      %2308 = vmatpush1.msra.mxu0 %v2279
      %2309 = vmatprep.subr.mxu0 0.0
      %2310 = vmatpush1.msra.mxu0 %v2278
      %2311 = vmatprep.subr.mxu0 0.0
      %2312 = vmatpush1.msra.mxu0 %v2277
      %2313 = vmatprep.subr.mxu0 0.0
      %2314 = vmatpush1.msra.mxu0 %v2276
      %2315 = vmatprep.subr.mxu0 0.0
      %2316 = vmatpush1.msra.mxu0 %v2275
      %2317 = vmatprep.subr.mxu0 0.0
      %2318 = vmatpush1.msra.mxu0 %v2274
      %2319 = vmatprep.subr.mxu0 0.0
      %2320 = vmatpush1.msra.mxu0 %v2273
      %2321 = vmatprep.subr.mxu0 0.0
      %2322 = vmatpush2.msra.mxu0 0.0
      %2323 = vmatprep.subr.mxu0 0.0
      %2324 = vmatpush2.msra.mxu0 0.0
      %2325 = vmatprep.subr.mxu0 0.0
      %2326 = vmatpush2.msra.mxu0 0.0
      %2327 = vmatprep.subr.mxu0 0.0
      %2328 = vmatpush2.msra.mxu0 0.0
      %2329 = vmatprep.subr.mxu0 0.0
      %2330 = vmatpush2.msra.mxu0 0.0
      %2331 = vmatprep.subr.mxu0 0.0
      %2332 = vmatpush2.msra.mxu0 0.0
      %2333 = vmatprep.subr.mxu0 0.0
      %2334 = vmatpush2.msra.mxu0 0.0
      %2335 = vmatprep.subr.mxu0 0.0
      %2336 = vmatpush2.msra.mxu0 0.0
      %2337 = vmatprep.subr.mxu0 0.0
      %2338 = vmatpush2.msra.mxu0 0.0
      %2339 = vmatprep.subr.mxu0 0.0
      %2340 = vmatpush2.msra.mxu0 0.0
      %2341 = vmatprep.subr.mxu0 0.0
      %2342 = vmatpush2.msra.mxu0 0.0
      %2343 = vmatprep.subr.mxu0 0.0
      %2344 = vmatpush2.msra.mxu0 0.0
      %2345 = vmatprep.subr.mxu0 0.0
      %2346 = vmatpush2.msra.mxu0 0.0
      %2347 = vmatprep.subr.mxu0 0.0
      %2348 = vmatpush2.msra.mxu0 0.0
      %2349 = vmatprep.subr.mxu0 0.0
      %2350 = vmatpush2.msra.mxu0 0.0
      %2351 = vmatprep.subr.mxu0 0.0
      %2352 = vmatpush2.msra.mxu0 0.0
      %2353 = vmatprep.mubr.f32.mxu0 0.0
      %2354 = vmatmul.mubr.f32.gmra.mxu0 %v1029
      %v2355 = vpop.f32.mrf.mxu0
      %v2356 = vadd.f32 0.0, %v2355
      %v2357 = vpop.f32.mrf.mxu0
      %2358 = vmatprep.mubr.f32.mxu0 0.0
      %2359 = vmatmul.mubr.f32.gmra.mxu0 %v1031
      %v2360 = vpop.f32.mrf.mxu0
      %v2361 = vadd.f32 0.0, %v2360
      %v2362 = vpop.f32.mrf.mxu0
      %2363 = vmatprep.mubr.f32.mxu0 0.0
      %2364 = vmatmul.mubr.f32.gmra.mxu0 %v1034
      %v2365 = vpop.f32.mrf.mxu0
      %v2366 = vadd.f32 0.0, %v2365
      %v2367 = vpop.f32.mrf.mxu0
      %2368 = vmatprep.mubr.f32.mxu0 0.0
      %2369 = vmatmul.mubr.f32.gmra.mxu0 %v1036
      %v2370 = vpop.f32.mrf.mxu0
      %v2371 = vadd.f32 0.0, %v2370
      %v2372 = vpop.f32.mrf.mxu0
      %2373 = vmatprep.mubr.f32.mxu0 0.0
      %2374 = vmatmul.mubr.f32.gmra.mxu0 %v1039
      %v2375 = vpop.f32.mrf.mxu0
      %v2376 = vadd.f32 0.0, %v2375
      %v2377 = vpop.f32.mrf.mxu0
      %2378 = vmatprep.mubr.f32.mxu0 0.0
      %2379 = vmatmul.mubr.f32.gmra.mxu0 %v1041
      %v2380 = vpop.f32.mrf.mxu0
      %v2381 = vadd.f32 0.0, %v2380
      %v2382 = vpop.f32.mrf.mxu0
      %2383 = vmatprep.mubr.f32.mxu0 0.0
      %2384 = vmatmul.mubr.f32.gmra.mxu0 %v1044
      %v2385 = vpop.f32.mrf.mxu0
      %v2386 = vadd.f32 0.0, %v2385
      %v2387 = vpop.f32.mrf.mxu0
      %2388 = vmatprep.mubr.f32.mxu0 0.0
      %2389 = vmatmul.mubr.f32.gmra.mxu0 %v1046
      %v2390 = vpop.f32.mrf.mxu0
      %v2391 = vadd.f32 0.0, %v2390
      %v2392 = vpop.f32.mrf.mxu0
      %2393 = vmatprep.mubr.f32.mxu0 0.0
      %2394 = vmatmul.mubr.f32.gmra.mxu0 %v1049
      %v2395 = vpop.f32.mrf.mxu0
      %v2396 = vadd.f32 0.0, %v2395
      %v2397 = vpop.f32.mrf.mxu0
      %2398 = vmatprep.mubr.f32.mxu0 0.0
      %2399 = vmatmul.mubr.f32.gmra.mxu0 %v1051
      %v2400 = vpop.f32.mrf.mxu0
      %v2401 = vadd.f32 0.0, %v2400
      %v2402 = vpop.f32.mrf.mxu0
      %2403 = vmatprep.mubr.f32.mxu0 0.0
      %2404 = vmatmul.mubr.f32.gmra.mxu0 %v1054
      %v2405 = vpop.f32.mrf.mxu0
      %v2406 = vadd.f32 0.0, %v2405
      %v2407 = vpop.f32.mrf.mxu0
      %2408 = vmatprep.mubr.f32.mxu0 0.0
      %2409 = vmatmul.mubr.f32.gmra.mxu0 %v1056
      %v2410 = vpop.f32.mrf.mxu0
      %v2411 = vadd.f32 0.0, %v2410
      %v2412 = vpop.f32.mrf.mxu0
      %2413 = vmatprep.mubr.f32.mxu0 0.0
      %2414 = vmatmul.mubr.f32.gmra.mxu0 %v1059
      %v2415 = vpop.f32.mrf.mxu0
      %v2416 = vadd.f32 0.0, %v2415
      %v2417 = vpop.f32.mrf.mxu0
      %2418 = vmatprep.mubr.f32.mxu0 0.0
      %2419 = vmatmul.mubr.f32.gmra.mxu0 %v1061
      %v2420 = vpop.f32.mrf.mxu0
      %v2421 = vadd.f32 0.0, %v2420
      %v2422 = vpop.f32.mrf.mxu0
      %2423 = vmatprep.mubr.f32.mxu0 0.0
      %2424 = vmatmul.mubr.f32.gmra.mxu0 %v1064
      %v2425 = vpop.f32.mrf.mxu0
      %v2426 = vadd.f32 0.0, %v2425
      %v2427 = vpop.f32.mrf.mxu0
      %2428 = vmatprep.mubr.f32.mxu0 0.0
      %2429 = vmatmul.mubr.f32.gmra.mxu0 %v1066
      %v2430 = vpop.f32.mrf.mxu0
      %v2431 = vadd.f32 0.0, %v2430
      %v2432 = vpop.f32.mrf.mxu0
      %2433 = vmatprep.mubr.f32.mxu0 0.0
      %2434 = vmatmul.mubr.f32.gmra.mxu0 %v1069
      %v2435 = vpop.f32.mrf.mxu0
      %v2436 = vadd.f32 0.0, %v2435
      %v2437 = vpop.f32.mrf.mxu0
      %2438 = vmatprep.mubr.f32.mxu0 0.0
      %2439 = vmatmul.mubr.f32.gmra.mxu0 %v1071
      %v2440 = vpop.f32.mrf.mxu0
      %v2441 = vadd.f32 0.0, %v2440
      %v2442 = vpop.f32.mrf.mxu0
      %2443 = vmatprep.mubr.f32.mxu0 0.0
      %2444 = vmatmul.mubr.f32.gmra.mxu0 %v1074
      %v2445 = vpop.f32.mrf.mxu0
      %v2446 = vadd.f32 0.0, %v2445
      %v2447 = vpop.f32.mrf.mxu0
      %2448 = vmatprep.mubr.f32.mxu0 0.0
      %2449 = vmatmul.mubr.f32.gmra.mxu0 %v1076
      %v2450 = vpop.f32.mrf.mxu0
      %v2451 = vadd.f32 0.0, %v2450
      %v2452 = vpop.f32.mrf.mxu0
      %2453 = vmatprep.mubr.f32.mxu0 0.0
      %2454 = vmatmul.mubr.f32.gmra.mxu0 %v1079
      %v2455 = vpop.f32.mrf.mxu0
      %v2456 = vadd.f32 0.0, %v2455
      %v2457 = vpop.f32.mrf.mxu0
      %2458 = vmatprep.mubr.f32.mxu0 0.0
      %2459 = vmatmul.mubr.f32.gmra.mxu0 %v1081
      %v2460 = vpop.f32.mrf.mxu0
      %v2461 = vadd.f32 0.0, %v2460
      %v2462 = vpop.f32.mrf.mxu0
      %2463 = vmatprep.mubr.f32.mxu0 0.0
      %2464 = vmatmul.mubr.f32.gmra.mxu0 %v1084
      %v2465 = vpop.f32.mrf.mxu0
      %v2466 = vadd.f32 0.0, %v2465
      %v2467 = vpop.f32.mrf.mxu0
      %2468 = vmatprep.mubr.f32.mxu0 0.0
      %2469 = vmatmul.mubr.f32.gmra.mxu0 %v1086
      %v2470 = vpop.f32.mrf.mxu0
      %v2471 = vadd.f32 0.0, %v2470
      %v2472 = vpop.f32.mrf.mxu0
      %2473 = vmatprep.mubr.f32.mxu0 0.0
      %2474 = vmatmul.mubr.f32.gmra.mxu0 %v1089
      %v2475 = vpop.f32.mrf.mxu0
      %v2476 = vadd.f32 0.0, %v2475
      %v2477 = vpop.f32.mrf.mxu0
      %2478 = vmatprep.mubr.f32.mxu0 0.0
      %2479 = vmatmul.mubr.f32.gmra.mxu0 %v1091
      %v2480 = vpop.f32.mrf.mxu0
      %v2481 = vadd.f32 0.0, %v2480
      %v2482 = vpop.f32.mrf.mxu0
      %2483 = vmatprep.mubr.f32.mxu0 0.0
      %2484 = vmatmul.mubr.f32.gmra.mxu0 %v1094
      %v2485 = vpop.f32.mrf.mxu0
      %v2486 = vadd.f32 0.0, %v2485
      %v2487 = vpop.f32.mrf.mxu0
      %2488 = vmatprep.mubr.f32.mxu0 0.0
      %2489 = vmatmul.mubr.f32.gmra.mxu0 %v1096
      %v2490 = vpop.f32.mrf.mxu0
      %v2491 = vadd.f32 0.0, %v2490
      %v2492 = vpop.f32.mrf.mxu0
      %2493 = vmatprep.mubr.f32.mxu0 0.0
      %2494 = vmatmul.mubr.f32.gmra.mxu0 %v1099
      %v2495 = vpop.f32.mrf.mxu0
      %v2496 = vadd.f32 0.0, %v2495
      %v2497 = vpop.f32.mrf.mxu0
      %2498 = vmatprep.mubr.f32.mxu0 0.0
      %2499 = vmatmul.mubr.f32.gmra.mxu0 %v1101
      %v2500 = vpop.f32.mrf.mxu0
      %v2501 = vadd.f32 0.0, %v2500
      %v2502 = vpop.f32.mrf.mxu0
      %2503 = vmatprep.mubr.f32.mxu0 0.0
      %2504 = vmatmul.mubr.f32.gmra.mxu0 %v2267
      %v2505 = vpop.f32.mrf.mxu0
      %v2506 = vadd.f32 0.0, %v2505
      %v2507 = vpop.f32.mrf.mxu0
      %2508 = vmatprep.mubr.f32.mxu0 0.0
      %2509 = vmatmul.mubr.f32.gmra.mxu0 %v2269
      %v2510 = vpop.f32.mrf.mxu0
      %v2511 = vadd.f32 0.0, %v2510
      %v2512 = vpop.f32.mrf.mxu0
      %2513 = vdwg.mxu0
      %v2514 = vadd.f32 %v2230, %v2356
      %v2515 = vadd.f32 %v2231, %v2361
      %v2516 = vadd.f32 %v2232, %v2366
      %v2517 = vadd.f32 %v2233, %v2371
      %v2518 = vadd.f32 %v2234, %v2376
      %v2519 = vadd.f32 %v2235, %v2381
      %v2520 = vadd.f32 %v2236, %v2386
      %v2521 = vadd.f32 %v2237, %v2391
      %v2522 = vadd.f32 %v2238, %v2396
      %v2523 = vadd.f32 %v2239, %v2401
      %v2524 = vadd.f32 %v2240, %v2406
      %v2525 = vadd.f32 %v2241, %v2411
      %v2526 = vadd.f32 %v2242, %v2416
      %v2527 = vadd.f32 %v2243, %v2421
      %v2528 = vadd.f32 %v2244, %v2426
      %v2529 = vadd.f32 %v2245, %v2431
      %v2530 = vadd.f32 %v2246, %v2436
      %v2531 = vadd.f32 %v2247, %v2441
      %v2532 = vadd.f32 %v2248, %v2446
      %v2533 = vadd.f32 %v2249, %v2451
      %v2534 = vadd.f32 %v2250, %v2456
      %v2535 = vadd.f32 %v2251, %v2461
      %v2536 = vadd.f32 %v2252, %v2466
      %v2537 = vadd.f32 %v2253, %v2471
      %v2538 = vadd.f32 %v2254, %v2476
      %v2539 = vadd.f32 %v2255, %v2481
      %v2540 = vadd.f32 %v2256, %v2486
      %v2541 = vadd.f32 %v2257, %v2491
      %v2542 = vadd.f32 %v2258, %v2496
      %v2543 = vadd.f32 %v2259, %v2501
      %v2544 = vadd.f32 %v2260, %v2506
      %v2545 = vadd.f32 %v2261, %v2511
      %v2546 = vrot.slane %v951, 2
      %v2547 = vrot.slane %v952, 2
      %v2548 = vsel %vm1601, %v2546, %v2547
      %v2549 = vrot.slane %v953, 2
      %v2550 = vsel %vm1601, %v2547, %v2549
      %s2553 = scalar_lea.vmem %s328, 640
      %v2554 = vld [vmem:[%s2553] sm:$0xff]
      %v2555 = vld [vmem:[%s2553 + $0x8] sm:$0xff]
      %v2556 = vld [vmem:[%s2553 + $0x10] sm:$0xff]
      %v2557 = vld [vmem:[%s2553 + $0x18] sm:$0xff]
      %v2558 = vld [vmem:[%s2553 + $0x20] sm:$0xff]
      %v2559 = vld [vmem:[%s2553 + $0x28] sm:$0xff]
      %v2560 = vld [vmem:[%s2553 + $0x30] sm:$0xff]
      %v2561 = vld [vmem:[%s2553 + $0x38] sm:$0xff]
      %v2562 = vld [vmem:[%s2553 + $0x40] sm:$0xff]
      %v2563 = vld [vmem:[%s2553 + $0x48] sm:$0xff]
      %v2564 = vld [vmem:[%s2553 + $0x50] sm:$0xff]
      %v2565 = vld [vmem:[%s2553 + $0x58] sm:$0xff]
      %v2566 = vld [vmem:[%s2553 + $0x60] sm:$0xff]
      %v2567 = vld [vmem:[%s2553 + $0x68] sm:$0xff]
      %v2568 = vld [vmem:[%s2553 + $0x70] sm:$0xff]
      %v2569 = vld [vmem:[%s2553 + $0x78] sm:$0xff]
      %2570 = vmatprep.subr.mxu0 0.0
      %2571 = vmatpush1.msra.mxu0 %v2569
      %2572 = vmatprep.subr.mxu0 0.0
      %2573 = vmatpush1.msra.mxu0 %v2568
      %2574 = vmatprep.subr.mxu0 0.0
      %2575 = vmatpush1.msra.mxu0 %v2567
      %2576 = vmatprep.subr.mxu0 0.0
      %2577 = vmatpush1.msra.mxu0 %v2566
      %2578 = vmatprep.subr.mxu0 0.0
      %2579 = vmatpush1.msra.mxu0 %v2565
      %2580 = vmatprep.subr.mxu0 0.0
      %2581 = vmatpush1.msra.mxu0 %v2564
      %2582 = vmatprep.subr.mxu0 0.0
      %2583 = vmatpush1.msra.mxu0 %v2563
      %2584 = vmatprep.subr.mxu0 0.0
      %2585 = vmatpush1.msra.mxu0 %v2562
      %2586 = vmatprep.subr.mxu0 0.0
      %2587 = vmatpush1.msra.mxu0 %v2561
      %2588 = vmatprep.subr.mxu0 0.0
      %2589 = vmatpush1.msra.mxu0 %v2560
      %2590 = vmatprep.subr.mxu0 0.0
      %2591 = vmatpush1.msra.mxu0 %v2559
      %2592 = vmatprep.subr.mxu0 0.0
      %2593 = vmatpush1.msra.mxu0 %v2558
      %2594 = vmatprep.subr.mxu0 0.0
      %2595 = vmatpush1.msra.mxu0 %v2557
      %2596 = vmatprep.subr.mxu0 0.0
      %2597 = vmatpush1.msra.mxu0 %v2556
      %2598 = vmatprep.subr.mxu0 0.0
      %2599 = vmatpush1.msra.mxu0 %v2555
      %2600 = vmatprep.subr.mxu0 0.0
      %2601 = vmatpush1.msra.mxu0 %v2554
      %2602 = vmatprep.subr.mxu0 0.0
      %2603 = vmatpush2.msra.mxu0 0.0
      %2604 = vmatprep.subr.mxu0 0.0
      %2605 = vmatpush2.msra.mxu0 0.0
      %2606 = vmatprep.subr.mxu0 0.0
      %2607 = vmatpush2.msra.mxu0 0.0
      %2608 = vmatprep.subr.mxu0 0.0
      %2609 = vmatpush2.msra.mxu0 0.0
      %2610 = vmatprep.subr.mxu0 0.0
      %2611 = vmatpush2.msra.mxu0 0.0
      %2612 = vmatprep.subr.mxu0 0.0
      %2613 = vmatpush2.msra.mxu0 0.0
      %2614 = vmatprep.subr.mxu0 0.0
      %2615 = vmatpush2.msra.mxu0 0.0
      %2616 = vmatprep.subr.mxu0 0.0
      %2617 = vmatpush2.msra.mxu0 0.0
      %2618 = vmatprep.subr.mxu0 0.0
      %2619 = vmatpush2.msra.mxu0 0.0
      %2620 = vmatprep.subr.mxu0 0.0
      %2621 = vmatpush2.msra.mxu0 0.0
      %2622 = vmatprep.subr.mxu0 0.0
      %2623 = vmatpush2.msra.mxu0 0.0
      %2624 = vmatprep.subr.mxu0 0.0
      %2625 = vmatpush2.msra.mxu0 0.0
      %2626 = vmatprep.subr.mxu0 0.0
      %2627 = vmatpush2.msra.mxu0 0.0
      %2628 = vmatprep.subr.mxu0 0.0
      %2629 = vmatpush2.msra.mxu0 0.0
      %2630 = vmatprep.subr.mxu0 0.0
      %2631 = vmatpush2.msra.mxu0 0.0
      %2632 = vmatprep.subr.mxu0 0.0
      %2633 = vmatpush2.msra.mxu0 0.0
      %2634 = vmatprep.mubr.f32.mxu0 0.0
      %2635 = vmatmul.mubr.f32.gmra.mxu0 %v1609
      %v2636 = vpop.f32.mrf.mxu0
      %v2637 = vadd.f32 0.0, %v2636
      %v2638 = vpop.f32.mrf.mxu0
      %2639 = vmatprep.mubr.f32.mxu0 0.0
      %2640 = vmatmul.mubr.f32.gmra.mxu0 %v1611
      %v2641 = vpop.f32.mrf.mxu0
      %v2642 = vadd.f32 0.0, %v2641
      %v2643 = vpop.f32.mrf.mxu0
      %2644 = vmatprep.mubr.f32.mxu0 0.0
      %2645 = vmatmul.mubr.f32.gmra.mxu0 %v1614
      %v2646 = vpop.f32.mrf.mxu0
      %v2647 = vadd.f32 0.0, %v2646
      %v2648 = vpop.f32.mrf.mxu0
      %2649 = vmatprep.mubr.f32.mxu0 0.0
      %2650 = vmatmul.mubr.f32.gmra.mxu0 %v1616
      %v2651 = vpop.f32.mrf.mxu0
      %v2652 = vadd.f32 0.0, %v2651
      %v2653 = vpop.f32.mrf.mxu0
      %2654 = vmatprep.mubr.f32.mxu0 0.0
      %2655 = vmatmul.mubr.f32.gmra.mxu0 %v1619
      %v2656 = vpop.f32.mrf.mxu0
      %v2657 = vadd.f32 0.0, %v2656
      %v2658 = vpop.f32.mrf.mxu0
      %2659 = vmatprep.mubr.f32.mxu0 0.0
      %2660 = vmatmul.mubr.f32.gmra.mxu0 %v1621
      %v2661 = vpop.f32.mrf.mxu0
      %v2662 = vadd.f32 0.0, %v2661
      %v2663 = vpop.f32.mrf.mxu0
      %2664 = vmatprep.mubr.f32.mxu0 0.0
      %2665 = vmatmul.mubr.f32.gmra.mxu0 %v1624
      %v2666 = vpop.f32.mrf.mxu0
      %v2667 = vadd.f32 0.0, %v2666
      %v2668 = vpop.f32.mrf.mxu0
      %2669 = vmatprep.mubr.f32.mxu0 0.0
      %2670 = vmatmul.mubr.f32.gmra.mxu0 %v1626
      %v2671 = vpop.f32.mrf.mxu0
      %v2672 = vadd.f32 0.0, %v2671
      %v2673 = vpop.f32.mrf.mxu0
      %2674 = vmatprep.mubr.f32.mxu0 0.0
      %2675 = vmatmul.mubr.f32.gmra.mxu0 %v1629
      %v2676 = vpop.f32.mrf.mxu0
      %v2677 = vadd.f32 0.0, %v2676
      %v2678 = vpop.f32.mrf.mxu0
      %2679 = vmatprep.mubr.f32.mxu0 0.0
      %2680 = vmatmul.mubr.f32.gmra.mxu0 %v1631
      %v2681 = vpop.f32.mrf.mxu0
      %v2682 = vadd.f32 0.0, %v2681
      %v2683 = vpop.f32.mrf.mxu0
      %2684 = vmatprep.mubr.f32.mxu0 0.0
      %2685 = vmatmul.mubr.f32.gmra.mxu0 %v1634
      %v2686 = vpop.f32.mrf.mxu0
      %v2687 = vadd.f32 0.0, %v2686
      %v2688 = vpop.f32.mrf.mxu0
      %2689 = vmatprep.mubr.f32.mxu0 0.0
      %2690 = vmatmul.mubr.f32.gmra.mxu0 %v1636
      %v2691 = vpop.f32.mrf.mxu0
      %v2692 = vadd.f32 0.0, %v2691
      %v2693 = vpop.f32.mrf.mxu0
      %2694 = vmatprep.mubr.f32.mxu0 0.0
      %2695 = vmatmul.mubr.f32.gmra.mxu0 %v1639
      %v2696 = vpop.f32.mrf.mxu0
      %v2697 = vadd.f32 0.0, %v2696
      %v2698 = vpop.f32.mrf.mxu0
      %2699 = vmatprep.mubr.f32.mxu0 0.0
      %2700 = vmatmul.mubr.f32.gmra.mxu0 %v1641
      %v2701 = vpop.f32.mrf.mxu0
      %v2702 = vadd.f32 0.0, %v2701
      %v2703 = vpop.f32.mrf.mxu0
      %2704 = vmatprep.mubr.f32.mxu0 0.0
      %2705 = vmatmul.mubr.f32.gmra.mxu0 %v1644
      %v2706 = vpop.f32.mrf.mxu0
      %v2707 = vadd.f32 0.0, %v2706
      %v2708 = vpop.f32.mrf.mxu0
      %2709 = vmatprep.mubr.f32.mxu0 0.0
      %2710 = vmatmul.mubr.f32.gmra.mxu0 %v1646
      %v2711 = vpop.f32.mrf.mxu0
      %v2712 = vadd.f32 0.0, %v2711
      %v2713 = vpop.f32.mrf.mxu0
      %2714 = vmatprep.mubr.f32.mxu0 0.0
      %2715 = vmatmul.mubr.f32.gmra.mxu0 %v1649
      %v2716 = vpop.f32.mrf.mxu0
      %v2717 = vadd.f32 0.0, %v2716
      %v2718 = vpop.f32.mrf.mxu0
      %2719 = vmatprep.mubr.f32.mxu0 0.0
      %2720 = vmatmul.mubr.f32.gmra.mxu0 %v1651
      %v2721 = vpop.f32.mrf.mxu0
      %v2722 = vadd.f32 0.0, %v2721
      %v2723 = vpop.f32.mrf.mxu0
      %2724 = vmatprep.mubr.f32.mxu0 0.0
      %2725 = vmatmul.mubr.f32.gmra.mxu0 %v1654
      %v2726 = vpop.f32.mrf.mxu0
      %v2727 = vadd.f32 0.0, %v2726
      %v2728 = vpop.f32.mrf.mxu0
      %2729 = vmatprep.mubr.f32.mxu0 0.0
      %2730 = vmatmul.mubr.f32.gmra.mxu0 %v1656
      %v2731 = vpop.f32.mrf.mxu0
      %v2732 = vadd.f32 0.0, %v2731
      %v2733 = vpop.f32.mrf.mxu0
      %2734 = vmatprep.mubr.f32.mxu0 0.0
      %2735 = vmatmul.mubr.f32.gmra.mxu0 %v1659
      %v2736 = vpop.f32.mrf.mxu0
      %v2737 = vadd.f32 0.0, %v2736
      %v2738 = vpop.f32.mrf.mxu0
      %2739 = vmatprep.mubr.f32.mxu0 0.0
      %2740 = vmatmul.mubr.f32.gmra.mxu0 %v1661
      %v2741 = vpop.f32.mrf.mxu0
      %v2742 = vadd.f32 0.0, %v2741
      %v2743 = vpop.f32.mrf.mxu0
      %2744 = vmatprep.mubr.f32.mxu0 0.0
      %2745 = vmatmul.mubr.f32.gmra.mxu0 %v1664
      %v2746 = vpop.f32.mrf.mxu0
      %v2747 = vadd.f32 0.0, %v2746
      %v2748 = vpop.f32.mrf.mxu0
      %2749 = vmatprep.mubr.f32.mxu0 0.0
      %2750 = vmatmul.mubr.f32.gmra.mxu0 %v1666
      %v2751 = vpop.f32.mrf.mxu0
      %v2752 = vadd.f32 0.0, %v2751
      %v2753 = vpop.f32.mrf.mxu0
      %2754 = vmatprep.mubr.f32.mxu0 0.0
      %2755 = vmatmul.mubr.f32.gmra.mxu0 %v1669
      %v2756 = vpop.f32.mrf.mxu0
      %v2757 = vadd.f32 0.0, %v2756
      %v2758 = vpop.f32.mrf.mxu0
      %2759 = vmatprep.mubr.f32.mxu0 0.0
      %2760 = vmatmul.mubr.f32.gmra.mxu0 %v1671
      %v2761 = vpop.f32.mrf.mxu0
      %v2762 = vadd.f32 0.0, %v2761
      %v2763 = vpop.f32.mrf.mxu0
      %2764 = vmatprep.mubr.f32.mxu0 0.0
      %2765 = vmatmul.mubr.f32.gmra.mxu0 %v1674
      %v2766 = vpop.f32.mrf.mxu0
      %v2767 = vadd.f32 0.0, %v2766
      %v2768 = vpop.f32.mrf.mxu0
      %2769 = vmatprep.mubr.f32.mxu0 0.0
      %2770 = vmatmul.mubr.f32.gmra.mxu0 %v1676
      %v2771 = vpop.f32.mrf.mxu0
      %v2772 = vadd.f32 0.0, %v2771
      %v2773 = vpop.f32.mrf.mxu0
      %2774 = vmatprep.mubr.f32.mxu0 0.0
      %2775 = vmatmul.mubr.f32.gmra.mxu0 %v1679
      %v2776 = vpop.f32.mrf.mxu0
      %v2777 = vadd.f32 0.0, %v2776
      %v2778 = vpop.f32.mrf.mxu0
      %2779 = vmatprep.mubr.f32.mxu0 0.0
      %2780 = vmatmul.mubr.f32.gmra.mxu0 %v1681
      %v2781 = vpop.f32.mrf.mxu0
      %v2782 = vadd.f32 0.0, %v2781
      %v2783 = vpop.f32.mrf.mxu0
      %2784 = vmatprep.mubr.f32.mxu0 0.0
      %2785 = vmatmul.mubr.f32.gmra.mxu0 %v2548
      %v2786 = vpop.f32.mrf.mxu0
      %v2787 = vadd.f32 0.0, %v2786
      %v2788 = vpop.f32.mrf.mxu0
      %2789 = vmatprep.mubr.f32.mxu0 0.0
      %2790 = vmatmul.mubr.f32.gmra.mxu0 %v2550
      %v2791 = vpop.f32.mrf.mxu0
      %v2792 = vadd.f32 0.0, %v2791
      %v2793 = vpop.f32.mrf.mxu0
      %2794 = vdwg.mxu0
      %v2795 = vadd.f32 %v2514, %v2637
      %v2796 = vadd.f32 %v2515, %v2642
      %v2797 = vadd.f32 %v2516, %v2647
      %v2798 = vadd.f32 %v2517, %v2652
      %v2799 = vadd.f32 %v2518, %v2657
      %v2800 = vadd.f32 %v2519, %v2662
      %v2801 = vadd.f32 %v2520, %v2667
      %v2802 = vadd.f32 %v2521, %v2672
      %v2803 = vadd.f32 %v2522, %v2677
      %v2804 = vadd.f32 %v2523, %v2682
      %v2805 = vadd.f32 %v2524, %v2687
      %v2806 = vadd.f32 %v2525, %v2692
      %v2807 = vadd.f32 %v2526, %v2697
      %v2808 = vadd.f32 %v2527, %v2702
      %v2809 = vadd.f32 %v2528, %v2707
      %v2810 = vadd.f32 %v2529, %v2712
      %v2811 = vadd.f32 %v2530, %v2717
      %v2812 = vadd.f32 %v2531, %v2722
      %v2813 = vadd.f32 %v2532, %v2727
      %v2814 = vadd.f32 %v2533, %v2732
      %v2815 = vadd.f32 %v2534, %v2737
      %v2816 = vadd.f32 %v2535, %v2742
      %v2817 = vadd.f32 %v2536, %v2747
      %v2818 = vadd.f32 %v2537, %v2752
      %v2819 = vadd.f32 %v2538, %v2757
      %v2820 = vadd.f32 %v2539, %v2762
      %v2821 = vadd.f32 %v2540, %v2767
      %v2822 = vadd.f32 %v2541, %v2772
      %v2823 = vadd.f32 %v2542, %v2777
      %v2824 = vadd.f32 %v2543, %v2782
      %v2825 = vadd.f32 %v2544, %v2787
      %v2826 = vadd.f32 %v2545, %v2792
      %s2827 = scalar_lea.vmem %s328, 768
      %v2828 = vld [vmem:[%s2827] sm:$0xff]
      %v2829 = vld [vmem:[%s2827 + $0x8] sm:$0xff]
      %v2830 = vld [vmem:[%s2827 + $0x10] sm:$0xff]
      %v2831 = vld [vmem:[%s2827 + $0x18] sm:$0xff]
      %v2832 = vld [vmem:[%s2827 + $0x20] sm:$0xff]
      %v2833 = vld [vmem:[%s2827 + $0x28] sm:$0xff]
      %v2834 = vld [vmem:[%s2827 + $0x30] sm:$0xff]
      %v2835 = vld [vmem:[%s2827 + $0x38] sm:$0xff]
      %v2836 = vld [vmem:[%s2827 + $0x40] sm:$0xff]
      %v2837 = vld [vmem:[%s2827 + $0x48] sm:$0xff]
      %v2838 = vld [vmem:[%s2827 + $0x50] sm:$0xff]
      %v2839 = vld [vmem:[%s2827 + $0x58] sm:$0xff]
      %v2840 = vld [vmem:[%s2827 + $0x60] sm:$0xff]
      %v2841 = vld [vmem:[%s2827 + $0x68] sm:$0xff]
      %v2842 = vld [vmem:[%s2827 + $0x70] sm:$0xff]
      %v2843 = vld [vmem:[%s2827 + $0x78] sm:$0xff]
      %2844 = vmatprep.subr.mxu0 0.0
      %2845 = vmatpush1.msra.mxu0 %v2843
      %2846 = vmatprep.subr.mxu0 0.0
      %2847 = vmatpush1.msra.mxu0 %v2842
      %2848 = vmatprep.subr.mxu0 0.0
      %2849 = vmatpush1.msra.mxu0 %v2841
      %2850 = vmatprep.subr.mxu0 0.0
      %2851 = vmatpush1.msra.mxu0 %v2840
      %2852 = vmatprep.subr.mxu0 0.0
      %2853 = vmatpush1.msra.mxu0 %v2839
      %2854 = vmatprep.subr.mxu0 0.0
      %2855 = vmatpush1.msra.mxu0 %v2838
      %2856 = vmatprep.subr.mxu0 0.0
      %2857 = vmatpush1.msra.mxu0 %v2837
      %2858 = vmatprep.subr.mxu0 0.0
      %2859 = vmatpush1.msra.mxu0 %v2836
      %2860 = vmatprep.subr.mxu0 0.0
      %2861 = vmatpush1.msra.mxu0 %v2835
      %2862 = vmatprep.subr.mxu0 0.0
      %2863 = vmatpush1.msra.mxu0 %v2834
      %2864 = vmatprep.subr.mxu0 0.0
      %2865 = vmatpush1.msra.mxu0 %v2833
      %2866 = vmatprep.subr.mxu0 0.0
      %2867 = vmatpush1.msra.mxu0 %v2832
      %2868 = vmatprep.subr.mxu0 0.0
      %2869 = vmatpush1.msra.mxu0 %v2831
      %2870 = vmatprep.subr.mxu0 0.0
      %2871 = vmatpush1.msra.mxu0 %v2830
      %2872 = vmatprep.subr.mxu0 0.0
      %2873 = vmatpush1.msra.mxu0 %v2829
      %2874 = vmatprep.subr.mxu0 0.0
      %2875 = vmatpush1.msra.mxu0 %v2828
      %2876 = vmatprep.subr.mxu0 0.0
      %2877 = vmatpush2.msra.mxu0 0.0
      %2878 = vmatprep.subr.mxu0 0.0
      %2879 = vmatpush2.msra.mxu0 0.0
      %2880 = vmatprep.subr.mxu0 0.0
      %2881 = vmatpush2.msra.mxu0 0.0
      %2882 = vmatprep.subr.mxu0 0.0
      %2883 = vmatpush2.msra.mxu0 0.0
      %2884 = vmatprep.subr.mxu0 0.0
      %2885 = vmatpush2.msra.mxu0 0.0
      %2886 = vmatprep.subr.mxu0 0.0
      %2887 = vmatpush2.msra.mxu0 0.0
      %2888 = vmatprep.subr.mxu0 0.0
      %2889 = vmatpush2.msra.mxu0 0.0
      %2890 = vmatprep.subr.mxu0 0.0
      %2891 = vmatpush2.msra.mxu0 0.0
      %2892 = vmatprep.subr.mxu0 0.0
      %2893 = vmatpush2.msra.mxu0 0.0
      %2894 = vmatprep.subr.mxu0 0.0
      %2895 = vmatpush2.msra.mxu0 0.0
      %2896 = vmatprep.subr.mxu0 0.0
      %2897 = vmatpush2.msra.mxu0 0.0
      %2898 = vmatprep.subr.mxu0 0.0
      %2899 = vmatpush2.msra.mxu0 0.0
      %2900 = vmatprep.subr.mxu0 0.0
      %2901 = vmatpush2.msra.mxu0 0.0
      %2902 = vmatprep.subr.mxu0 0.0
      %2903 = vmatpush2.msra.mxu0 0.0
      %2904 = vmatprep.subr.mxu0 0.0
      %2905 = vmatpush2.msra.mxu0 0.0
      %2906 = vmatprep.subr.mxu0 0.0
      %2907 = vmatpush2.msra.mxu0 0.0
      %2908 = vmatprep.mubr.f32.mxu0 0.0
      %2909 = vmatmul.mubr.f32.gmra.mxu0 %v909
      %v2910 = vpop.f32.mrf.mxu0
      %v2911 = vadd.f32 0.0, %v2910
      %v2912 = vpop.f32.mrf.mxu0
      %2913 = vmatprep.mubr.f32.mxu0 0.0
      %2914 = vmatmul.mubr.f32.gmra.mxu0 %v910
      %v2915 = vpop.f32.mrf.mxu0
      %v2916 = vadd.f32 0.0, %v2915
      %v2917 = vpop.f32.mrf.mxu0
      %2918 = vmatprep.mubr.f32.mxu0 0.0
      %2919 = vmatmul.mubr.f32.gmra.mxu0 %v912
      %v2920 = vpop.f32.mrf.mxu0
      %v2921 = vadd.f32 0.0, %v2920
      %v2922 = vpop.f32.mrf.mxu0
      %2923 = vmatprep.mubr.f32.mxu0 0.0
      %2924 = vmatmul.mubr.f32.gmra.mxu0 %v913
      %v2925 = vpop.f32.mrf.mxu0
      %v2926 = vadd.f32 0.0, %v2925
      %v2927 = vpop.f32.mrf.mxu0
      %2928 = vmatprep.mubr.f32.mxu0 0.0
      %2929 = vmatmul.mubr.f32.gmra.mxu0 %v915
      %v2930 = vpop.f32.mrf.mxu0
      %v2931 = vadd.f32 0.0, %v2930
      %v2932 = vpop.f32.mrf.mxu0
      %2933 = vmatprep.mubr.f32.mxu0 0.0
      %2934 = vmatmul.mubr.f32.gmra.mxu0 %v916
      %v2935 = vpop.f32.mrf.mxu0
      %v2936 = vadd.f32 0.0, %v2935
      %v2937 = vpop.f32.mrf.mxu0
      %2938 = vmatprep.mubr.f32.mxu0 0.0
      %2939 = vmatmul.mubr.f32.gmra.mxu0 %v918
      %v2940 = vpop.f32.mrf.mxu0
      %v2941 = vadd.f32 0.0, %v2940
      %v2942 = vpop.f32.mrf.mxu0
      %2943 = vmatprep.mubr.f32.mxu0 0.0
      %2944 = vmatmul.mubr.f32.gmra.mxu0 %v919
      %v2945 = vpop.f32.mrf.mxu0
      %v2946 = vadd.f32 0.0, %v2945
      %v2947 = vpop.f32.mrf.mxu0
      %2948 = vmatprep.mubr.f32.mxu0 0.0
      %2949 = vmatmul.mubr.f32.gmra.mxu0 %v921
      %v2950 = vpop.f32.mrf.mxu0
      %v2951 = vadd.f32 0.0, %v2950
      %v2952 = vpop.f32.mrf.mxu0
      %2953 = vmatprep.mubr.f32.mxu0 0.0
      %2954 = vmatmul.mubr.f32.gmra.mxu0 %v922
      %v2955 = vpop.f32.mrf.mxu0
      %v2956 = vadd.f32 0.0, %v2955
      %v2957 = vpop.f32.mrf.mxu0
      %2958 = vmatprep.mubr.f32.mxu0 0.0
      %2959 = vmatmul.mubr.f32.gmra.mxu0 %v924
      %v2960 = vpop.f32.mrf.mxu0
      %v2961 = vadd.f32 0.0, %v2960
      %v2962 = vpop.f32.mrf.mxu0
      %2963 = vmatprep.mubr.f32.mxu0 0.0
      %2964 = vmatmul.mubr.f32.gmra.mxu0 %v925
      %v2965 = vpop.f32.mrf.mxu0
      %v2966 = vadd.f32 0.0, %v2965
      %v2967 = vpop.f32.mrf.mxu0
      %2968 = vmatprep.mubr.f32.mxu0 0.0
      %2969 = vmatmul.mubr.f32.gmra.mxu0 %v927
      %v2970 = vpop.f32.mrf.mxu0
      %v2971 = vadd.f32 0.0, %v2970
      %v2972 = vpop.f32.mrf.mxu0
      %2973 = vmatprep.mubr.f32.mxu0 0.0
      %2974 = vmatmul.mubr.f32.gmra.mxu0 %v928
      %v2975 = vpop.f32.mrf.mxu0
      %v2976 = vadd.f32 0.0, %v2975
      %v2977 = vpop.f32.mrf.mxu0
      %2978 = vmatprep.mubr.f32.mxu0 0.0
      %2979 = vmatmul.mubr.f32.gmra.mxu0 %v930
      %v2980 = vpop.f32.mrf.mxu0
      %v2981 = vadd.f32 0.0, %v2980
      %v2982 = vpop.f32.mrf.mxu0
      %2983 = vmatprep.mubr.f32.mxu0 0.0
      %2984 = vmatmul.mubr.f32.gmra.mxu0 %v931
      %v2985 = vpop.f32.mrf.mxu0
      %v2986 = vadd.f32 0.0, %v2985
      %v2987 = vpop.f32.mrf.mxu0
      %2988 = vmatprep.mubr.f32.mxu0 0.0
      %2989 = vmatmul.mubr.f32.gmra.mxu0 %v933
      %v2990 = vpop.f32.mrf.mxu0
      %v2991 = vadd.f32 0.0, %v2990
      %v2992 = vpop.f32.mrf.mxu0
      %2993 = vmatprep.mubr.f32.mxu0 0.0
      %2994 = vmatmul.mubr.f32.gmra.mxu0 %v934
      %v2995 = vpop.f32.mrf.mxu0
      %v2996 = vadd.f32 0.0, %v2995
      %v2997 = vpop.f32.mrf.mxu0
      %2998 = vmatprep.mubr.f32.mxu0 0.0
      %2999 = vmatmul.mubr.f32.gmra.mxu0 %v936
      %v3000 = vpop.f32.mrf.mxu0
      %v3001 = vadd.f32 0.0, %v3000
      %v3002 = vpop.f32.mrf.mxu0
      %3003 = vmatprep.mubr.f32.mxu0 0.0
      %3004 = vmatmul.mubr.f32.gmra.mxu0 %v937
      %v3005 = vpop.f32.mrf.mxu0
      %v3006 = vadd.f32 0.0, %v3005
      %v3007 = vpop.f32.mrf.mxu0
      %3008 = vmatprep.mubr.f32.mxu0 0.0
      %3009 = vmatmul.mubr.f32.gmra.mxu0 %v939
      %v3010 = vpop.f32.mrf.mxu0
      %v3011 = vadd.f32 0.0, %v3010
      %v3012 = vpop.f32.mrf.mxu0
      %3013 = vmatprep.mubr.f32.mxu0 0.0
      %3014 = vmatmul.mubr.f32.gmra.mxu0 %v940
      %v3015 = vpop.f32.mrf.mxu0
      %v3016 = vadd.f32 0.0, %v3015
      %v3017 = vpop.f32.mrf.mxu0
      %3018 = vmatprep.mubr.f32.mxu0 0.0
      %3019 = vmatmul.mubr.f32.gmra.mxu0 %v942
      %v3020 = vpop.f32.mrf.mxu0
      %v3021 = vadd.f32 0.0, %v3020
      %v3022 = vpop.f32.mrf.mxu0
      %3023 = vmatprep.mubr.f32.mxu0 0.0
      %3024 = vmatmul.mubr.f32.gmra.mxu0 %v943
      %v3025 = vpop.f32.mrf.mxu0
      %v3026 = vadd.f32 0.0, %v3025
      %v3027 = vpop.f32.mrf.mxu0
      %3028 = vmatprep.mubr.f32.mxu0 0.0
      %3029 = vmatmul.mubr.f32.gmra.mxu0 %v945
      %v3030 = vpop.f32.mrf.mxu0
      %v3031 = vadd.f32 0.0, %v3030
      %v3032 = vpop.f32.mrf.mxu0
      %3033 = vmatprep.mubr.f32.mxu0 0.0
      %3034 = vmatmul.mubr.f32.gmra.mxu0 %v946
      %v3035 = vpop.f32.mrf.mxu0
      %v3036 = vadd.f32 0.0, %v3035
      %v3037 = vpop.f32.mrf.mxu0
      %3038 = vmatprep.mubr.f32.mxu0 0.0
      %3039 = vmatmul.mubr.f32.gmra.mxu0 %v948
      %v3040 = vpop.f32.mrf.mxu0
      %v3041 = vadd.f32 0.0, %v3040
      %v3042 = vpop.f32.mrf.mxu0
      %3043 = vmatprep.mubr.f32.mxu0 0.0
      %3044 = vmatmul.mubr.f32.gmra.mxu0 %v949
      %v3045 = vpop.f32.mrf.mxu0
      %v3046 = vadd.f32 0.0, %v3045
      %v3047 = vpop.f32.mrf.mxu0
      %3048 = vmatprep.mubr.f32.mxu0 0.0
      %3049 = vmatmul.mubr.f32.gmra.mxu0 %v951
      %v3050 = vpop.f32.mrf.mxu0
      %v3051 = vadd.f32 0.0, %v3050
      %v3052 = vpop.f32.mrf.mxu0
      %3053 = vmatprep.mubr.f32.mxu0 0.0
      %3054 = vmatmul.mubr.f32.gmra.mxu0 %v952
      %v3055 = vpop.f32.mrf.mxu0
      %v3056 = vadd.f32 0.0, %v3055
      %v3057 = vpop.f32.mrf.mxu0
      %3058 = vmatprep.mubr.f32.mxu0 0.0
      %3059 = vmatmul.mubr.f32.gmra.mxu0 %v954
      %v3060 = vpop.f32.mrf.mxu0
      %v3061 = vadd.f32 0.0, %v3060
      %v3062 = vpop.f32.mrf.mxu0
      %3063 = vmatprep.mubr.f32.mxu0 0.0
      %3064 = vmatmul.mubr.f32.gmra.mxu0 %v955
      %v3065 = vpop.f32.mrf.mxu0
      %v3066 = vadd.f32 0.0, %v3065
      %v3067 = vpop.f32.mrf.mxu0
      %3068 = vdwg.mxu0
      %v3069 = vadd.f32 %v2795, %v2911
      %v3070 = vadd.f32 %v2796, %v2916
      %v3071 = vadd.f32 %v2797, %v2921
      %v3072 = vadd.f32 %v2798, %v2926
      %v3073 = vadd.f32 %v2799, %v2931
      %v3074 = vadd.f32 %v2800, %v2936
      %v3075 = vadd.f32 %v2801, %v2941
      %v3076 = vadd.f32 %v2802, %v2946
      %v3077 = vadd.f32 %v2803, %v2951
      %v3078 = vadd.f32 %v2804, %v2956
      %v3079 = vadd.f32 %v2805, %v2961
      %v3080 = vadd.f32 %v2806, %v2966
      %v3081 = vadd.f32 %v2807, %v2971
      %v3082 = vadd.f32 %v2808, %v2976
      %v3083 = vadd.f32 %v2809, %v2981
      %v3084 = vadd.f32 %v2810, %v2986
      %v3085 = vadd.f32 %v2811, %v2991
      %v3086 = vadd.f32 %v2812, %v2996
      %v3087 = vadd.f32 %v2813, %v3001
      %v3088 = vadd.f32 %v2814, %v3006
      %v3089 = vadd.f32 %v2815, %v3011
      %v3090 = vadd.f32 %v2816, %v3016
      %v3091 = vadd.f32 %v2817, %v3021
      %v3092 = vadd.f32 %v2818, %v3026
      %v3093 = vadd.f32 %v2819, %v3031
      %v3094 = vadd.f32 %v2820, %v3036
      %v3095 = vadd.f32 %v2821, %v3041
      %v3096 = vadd.f32 %v2822, %v3046
      %v3097 = vadd.f32 %v2823, %v3051
      %v3098 = vadd.f32 %v2824, %v3056
      %v3099 = vadd.f32 %v2825, %v3061
      %v3100 = vadd.f32 %v2826, %v3066
      %v3104 = vrot.slane %v954, 1
      %v3105 = vrot.slane %v955, 1
      %v3106 = vsel %vm1021, %v3104, %v3105
      %v3107 = vrot.slane %v956, 1
      %v3108 = vsel %vm1021, %v3105, %v3107
      %s3111 = scalar_lea.vmem %s328, 896
      %v3112 = vld [vmem:[%s3111] sm:$0xff]
      %v3113 = vld [vmem:[%s3111 + $0x8] sm:$0xff]
      %v3114 = vld [vmem:[%s3111 + $0x10] sm:$0xff]
      %v3115 = vld [vmem:[%s3111 + $0x18] sm:$0xff]
      %v3116 = vld [vmem:[%s3111 + $0x20] sm:$0xff]
      %v3117 = vld [vmem:[%s3111 + $0x28] sm:$0xff]
      %v3118 = vld [vmem:[%s3111 + $0x30] sm:$0xff]
      %v3119 = vld [vmem:[%s3111 + $0x38] sm:$0xff]
      %v3120 = vld [vmem:[%s3111 + $0x40] sm:$0xff]
      %v3121 = vld [vmem:[%s3111 + $0x48] sm:$0xff]
      %v3122 = vld [vmem:[%s3111 + $0x50] sm:$0xff]
      %v3123 = vld [vmem:[%s3111 + $0x58] sm:$0xff]
      %v3124 = vld [vmem:[%s3111 + $0x60] sm:$0xff]
      %v3125 = vld [vmem:[%s3111 + $0x68] sm:$0xff]
      %v3126 = vld [vmem:[%s3111 + $0x70] sm:$0xff]
      %v3127 = vld [vmem:[%s3111 + $0x78] sm:$0xff]
      %3128 = vmatprep.subr.mxu0 0.0
      %3129 = vmatpush1.msra.mxu0 %v3127
      %3130 = vmatprep.subr.mxu0 0.0
      %3131 = vmatpush1.msra.mxu0 %v3126
      %3132 = vmatprep.subr.mxu0 0.0
      %3133 = vmatpush1.msra.mxu0 %v3125
      %3134 = vmatprep.subr.mxu0 0.0
      %3135 = vmatpush1.msra.mxu0 %v3124
      %3136 = vmatprep.subr.mxu0 0.0
      %3137 = vmatpush1.msra.mxu0 %v3123
      %3138 = vmatprep.subr.mxu0 0.0
      %3139 = vmatpush1.msra.mxu0 %v3122
      %3140 = vmatprep.subr.mxu0 0.0
      %3141 = vmatpush1.msra.mxu0 %v3121
      %3142 = vmatprep.subr.mxu0 0.0
      %3143 = vmatpush1.msra.mxu0 %v3120
      %3144 = vmatprep.subr.mxu0 0.0
      %3145 = vmatpush1.msra.mxu0 %v3119
      %3146 = vmatprep.subr.mxu0 0.0
      %3147 = vmatpush1.msra.mxu0 %v3118
      %3148 = vmatprep.subr.mxu0 0.0
      %3149 = vmatpush1.msra.mxu0 %v3117
      %3150 = vmatprep.subr.mxu0 0.0
      %3151 = vmatpush1.msra.mxu0 %v3116
      %3152 = vmatprep.subr.mxu0 0.0
      %3153 = vmatpush1.msra.mxu0 %v3115
      %3154 = vmatprep.subr.mxu0 0.0
      %3155 = vmatpush1.msra.mxu0 %v3114
      %3156 = vmatprep.subr.mxu0 0.0
      %3157 = vmatpush1.msra.mxu0 %v3113
      %3158 = vmatprep.subr.mxu0 0.0
      %3159 = vmatpush1.msra.mxu0 %v3112
      %3160 = vmatprep.subr.mxu0 0.0
      %3161 = vmatpush2.msra.mxu0 0.0
      %3162 = vmatprep.subr.mxu0 0.0
      %3163 = vmatpush2.msra.mxu0 0.0
      %3164 = vmatprep.subr.mxu0 0.0
      %3165 = vmatpush2.msra.mxu0 0.0
      %3166 = vmatprep.subr.mxu0 0.0
      %3167 = vmatpush2.msra.mxu0 0.0
      %3168 = vmatprep.subr.mxu0 0.0
      %3169 = vmatpush2.msra.mxu0 0.0
      %3170 = vmatprep.subr.mxu0 0.0
      %3171 = vmatpush2.msra.mxu0 0.0
      %3172 = vmatprep.subr.mxu0 0.0
      %3173 = vmatpush2.msra.mxu0 0.0
      %3174 = vmatprep.subr.mxu0 0.0
      %3175 = vmatpush2.msra.mxu0 0.0
      %3176 = vmatprep.subr.mxu0 0.0
      %3177 = vmatpush2.msra.mxu0 0.0
      %3178 = vmatprep.subr.mxu0 0.0
      %3179 = vmatpush2.msra.mxu0 0.0
      %3180 = vmatprep.subr.mxu0 0.0
      %3181 = vmatpush2.msra.mxu0 0.0
      %3182 = vmatprep.subr.mxu0 0.0
      %3183 = vmatpush2.msra.mxu0 0.0
      %3184 = vmatprep.subr.mxu0 0.0
      %3185 = vmatpush2.msra.mxu0 0.0
      %3186 = vmatprep.subr.mxu0 0.0
      %3187 = vmatpush2.msra.mxu0 0.0
      %3188 = vmatprep.subr.mxu0 0.0
      %3189 = vmatpush2.msra.mxu0 0.0
      %3190 = vmatprep.subr.mxu0 0.0
      %3191 = vmatpush2.msra.mxu0 0.0
      %3192 = vmatprep.mubr.f32.mxu0 0.0
      %3193 = vmatmul.mubr.f32.gmra.mxu0 %v1034
      %v3194 = vpop.f32.mrf.mxu0
      %v3195 = vadd.f32 0.0, %v3194
      %v3196 = vpop.f32.mrf.mxu0
      %3197 = vmatprep.mubr.f32.mxu0 0.0
      %3198 = vmatmul.mubr.f32.gmra.mxu0 %v1036
      %v3199 = vpop.f32.mrf.mxu0
      %v3200 = vadd.f32 0.0, %v3199
      %v3201 = vpop.f32.mrf.mxu0
      %3202 = vmatprep.mubr.f32.mxu0 0.0
      %3203 = vmatmul.mubr.f32.gmra.mxu0 %v1039
      %v3204 = vpop.f32.mrf.mxu0
      %v3205 = vadd.f32 0.0, %v3204
      %v3206 = vpop.f32.mrf.mxu0
      %3207 = vmatprep.mubr.f32.mxu0 0.0
      %3208 = vmatmul.mubr.f32.gmra.mxu0 %v1041
      %v3209 = vpop.f32.mrf.mxu0
      %v3210 = vadd.f32 0.0, %v3209
      %v3211 = vpop.f32.mrf.mxu0
      %3212 = vmatprep.mubr.f32.mxu0 0.0
      %3213 = vmatmul.mubr.f32.gmra.mxu0 %v1044
      %v3214 = vpop.f32.mrf.mxu0
      %v3215 = vadd.f32 0.0, %v3214
      %v3216 = vpop.f32.mrf.mxu0
      %3217 = vmatprep.mubr.f32.mxu0 0.0
      %3218 = vmatmul.mubr.f32.gmra.mxu0 %v1046
      %v3219 = vpop.f32.mrf.mxu0
      %v3220 = vadd.f32 0.0, %v3219
      %v3221 = vpop.f32.mrf.mxu0
      %3222 = vmatprep.mubr.f32.mxu0 0.0
      %3223 = vmatmul.mubr.f32.gmra.mxu0 %v1049
      %v3224 = vpop.f32.mrf.mxu0
      %v3225 = vadd.f32 0.0, %v3224
      %v3226 = vpop.f32.mrf.mxu0
      %3227 = vmatprep.mubr.f32.mxu0 0.0
      %3228 = vmatmul.mubr.f32.gmra.mxu0 %v1051
      %v3229 = vpop.f32.mrf.mxu0
      %v3230 = vadd.f32 0.0, %v3229
      %v3231 = vpop.f32.mrf.mxu0
      %3232 = vmatprep.mubr.f32.mxu0 0.0
      %3233 = vmatmul.mubr.f32.gmra.mxu0 %v1054
      %v3234 = vpop.f32.mrf.mxu0
      %v3235 = vadd.f32 0.0, %v3234
      %v3236 = vpop.f32.mrf.mxu0
      %3237 = vmatprep.mubr.f32.mxu0 0.0
      %3238 = vmatmul.mubr.f32.gmra.mxu0 %v1056
      %v3239 = vpop.f32.mrf.mxu0
      %v3240 = vadd.f32 0.0, %v3239
      %v3241 = vpop.f32.mrf.mxu0
      %3242 = vmatprep.mubr.f32.mxu0 0.0
      %3243 = vmatmul.mubr.f32.gmra.mxu0 %v1059
      %v3244 = vpop.f32.mrf.mxu0
      %v3245 = vadd.f32 0.0, %v3244
      %v3246 = vpop.f32.mrf.mxu0
      %3247 = vmatprep.mubr.f32.mxu0 0.0
      %3248 = vmatmul.mubr.f32.gmra.mxu0 %v1061
      %v3249 = vpop.f32.mrf.mxu0
      %v3250 = vadd.f32 0.0, %v3249
      %v3251 = vpop.f32.mrf.mxu0
      %3252 = vmatprep.mubr.f32.mxu0 0.0
      %3253 = vmatmul.mubr.f32.gmra.mxu0 %v1064
      %v3254 = vpop.f32.mrf.mxu0
      %v3255 = vadd.f32 0.0, %v3254
      %v3256 = vpop.f32.mrf.mxu0
      %3257 = vmatprep.mubr.f32.mxu0 0.0
      %3258 = vmatmul.mubr.f32.gmra.mxu0 %v1066
      %v3259 = vpop.f32.mrf.mxu0
      %v3260 = vadd.f32 0.0, %v3259
      %v3261 = vpop.f32.mrf.mxu0
      %3262 = vmatprep.mubr.f32.mxu0 0.0
      %3263 = vmatmul.mubr.f32.gmra.mxu0 %v1069
      %v3264 = vpop.f32.mrf.mxu0
      %v3265 = vadd.f32 0.0, %v3264
      %v3266 = vpop.f32.mrf.mxu0
      %3267 = vmatprep.mubr.f32.mxu0 0.0
      %3268 = vmatmul.mubr.f32.gmra.mxu0 %v1071
      %v3269 = vpop.f32.mrf.mxu0
      %v3270 = vadd.f32 0.0, %v3269
      %v3271 = vpop.f32.mrf.mxu0
      %3272 = vmatprep.mubr.f32.mxu0 0.0
      %3273 = vmatmul.mubr.f32.gmra.mxu0 %v1074
      %v3274 = vpop.f32.mrf.mxu0
      %v3275 = vadd.f32 0.0, %v3274
      %v3276 = vpop.f32.mrf.mxu0
      %3277 = vmatprep.mubr.f32.mxu0 0.0
      %3278 = vmatmul.mubr.f32.gmra.mxu0 %v1076
      %v3279 = vpop.f32.mrf.mxu0
      %v3280 = vadd.f32 0.0, %v3279
      %v3281 = vpop.f32.mrf.mxu0
      %3282 = vmatprep.mubr.f32.mxu0 0.0
      %3283 = vmatmul.mubr.f32.gmra.mxu0 %v1079
      %v3284 = vpop.f32.mrf.mxu0
      %v3285 = vadd.f32 0.0, %v3284
      %v3286 = vpop.f32.mrf.mxu0
      %3287 = vmatprep.mubr.f32.mxu0 0.0
      %3288 = vmatmul.mubr.f32.gmra.mxu0 %v1081
      %v3289 = vpop.f32.mrf.mxu0
      %v3290 = vadd.f32 0.0, %v3289
      %v3291 = vpop.f32.mrf.mxu0
      %3292 = vmatprep.mubr.f32.mxu0 0.0
      %3293 = vmatmul.mubr.f32.gmra.mxu0 %v1084
      %v3294 = vpop.f32.mrf.mxu0
      %v3295 = vadd.f32 0.0, %v3294
      %v3296 = vpop.f32.mrf.mxu0
      %3297 = vmatprep.mubr.f32.mxu0 0.0
      %3298 = vmatmul.mubr.f32.gmra.mxu0 %v1086
      %v3299 = vpop.f32.mrf.mxu0
      %v3300 = vadd.f32 0.0, %v3299
      %v3301 = vpop.f32.mrf.mxu0
      %3302 = vmatprep.mubr.f32.mxu0 0.0
      %3303 = vmatmul.mubr.f32.gmra.mxu0 %v1089
      %v3304 = vpop.f32.mrf.mxu0
      %v3305 = vadd.f32 0.0, %v3304
      %v3306 = vpop.f32.mrf.mxu0
      %3307 = vmatprep.mubr.f32.mxu0 0.0
      %3308 = vmatmul.mubr.f32.gmra.mxu0 %v1091
      %v3309 = vpop.f32.mrf.mxu0
      %v3310 = vadd.f32 0.0, %v3309
      %v3311 = vpop.f32.mrf.mxu0
      %3312 = vmatprep.mubr.f32.mxu0 0.0
      %3313 = vmatmul.mubr.f32.gmra.mxu0 %v1094
      %v3314 = vpop.f32.mrf.mxu0
      %v3315 = vadd.f32 0.0, %v3314
      %v3316 = vpop.f32.mrf.mxu0
      %3317 = vmatprep.mubr.f32.mxu0 0.0
      %3318 = vmatmul.mubr.f32.gmra.mxu0 %v1096
      %v3319 = vpop.f32.mrf.mxu0
      %v3320 = vadd.f32 0.0, %v3319
      %v3321 = vpop.f32.mrf.mxu0
      %3322 = vmatprep.mubr.f32.mxu0 0.0
      %3323 = vmatmul.mubr.f32.gmra.mxu0 %v1099
      %v3324 = vpop.f32.mrf.mxu0
      %v3325 = vadd.f32 0.0, %v3324
      %v3326 = vpop.f32.mrf.mxu0
      %3327 = vmatprep.mubr.f32.mxu0 0.0
      %3328 = vmatmul.mubr.f32.gmra.mxu0 %v1101
      %v3329 = vpop.f32.mrf.mxu0
      %v3330 = vadd.f32 0.0, %v3329
      %v3331 = vpop.f32.mrf.mxu0
      %3332 = vmatprep.mubr.f32.mxu0 0.0
      %3333 = vmatmul.mubr.f32.gmra.mxu0 %v2267
      %v3334 = vpop.f32.mrf.mxu0
      %v3335 = vadd.f32 0.0, %v3334
      %v3336 = vpop.f32.mrf.mxu0
      %3337 = vmatprep.mubr.f32.mxu0 0.0
      %3338 = vmatmul.mubr.f32.gmra.mxu0 %v2269
      %v3339 = vpop.f32.mrf.mxu0
      %v3340 = vadd.f32 0.0, %v3339
      %v3341 = vpop.f32.mrf.mxu0
      %3342 = vmatprep.mubr.f32.mxu0 0.0
      %3343 = vmatmul.mubr.f32.gmra.mxu0 %v3106
      %v3344 = vpop.f32.mrf.mxu0
      %v3345 = vadd.f32 0.0, %v3344
      %v3346 = vpop.f32.mrf.mxu0
      %3347 = vmatprep.mubr.f32.mxu0 0.0
      %3348 = vmatmul.mubr.f32.gmra.mxu0 %v3108
      %v3349 = vpop.f32.mrf.mxu0
      %v3350 = vadd.f32 0.0, %v3349
      %v3351 = vpop.f32.mrf.mxu0
      %3352 = vdwg.mxu0
      %v3353 = vadd.f32 %v3069, %v3195
      %v3354 = vadd.f32 %v3070, %v3200
      %v3355 = vadd.f32 %v3071, %v3205
      %v3356 = vadd.f32 %v3072, %v3210
      %v3357 = vadd.f32 %v3073, %v3215
      %v3358 = vadd.f32 %v3074, %v3220
      %v3359 = vadd.f32 %v3075, %v3225
      %v3360 = vadd.f32 %v3076, %v3230
      %v3361 = vadd.f32 %v3077, %v3235
      %v3362 = vadd.f32 %v3078, %v3240
      %v3363 = vadd.f32 %v3079, %v3245
      %v3364 = vadd.f32 %v3080, %v3250
      %v3365 = vadd.f32 %v3081, %v3255
      %v3366 = vadd.f32 %v3082, %v3260
      %v3367 = vadd.f32 %v3083, %v3265
      %v3368 = vadd.f32 %v3084, %v3270
      %v3369 = vadd.f32 %v3085, %v3275
      %v3370 = vadd.f32 %v3086, %v3280
      %v3371 = vadd.f32 %v3087, %v3285
      %v3372 = vadd.f32 %v3088, %v3290
      %v3373 = vadd.f32 %v3089, %v3295
      %v3374 = vadd.f32 %v3090, %v3300
      %v3375 = vadd.f32 %v3091, %v3305
      %v3376 = vadd.f32 %v3092, %v3310
      %v3377 = vadd.f32 %v3093, %v3315
      %v3378 = vadd.f32 %v3094, %v3320
      %v3379 = vadd.f32 %v3095, %v3325
      %v3380 = vadd.f32 %v3096, %v3330
      %v3381 = vadd.f32 %v3097, %v3335
      %v3382 = vadd.f32 %v3098, %v3340
      %v3383 = vadd.f32 %v3099, %v3345
      %v3384 = vadd.f32 %v3100, %v3350
      %v3385 = vrot.slane %v954, 2
      %v3386 = vrot.slane %v955, 2
      %v3387 = vsel %vm1601, %v3385, %v3386
      %v3388 = vrot.slane %v956, 2
      %v3389 = vsel %vm1601, %v3386, %v3388
      %s3392 = scalar_lea.vmem %s328, 1024
      %v3393 = vld [vmem:[%s3392] sm:$0xff]
      %v3394 = vld [vmem:[%s3392 + $0x8] sm:$0xff]
      %v3395 = vld [vmem:[%s3392 + $0x10] sm:$0xff]
      %v3396 = vld [vmem:[%s3392 + $0x18] sm:$0xff]
      %v3397 = vld [vmem:[%s3392 + $0x20] sm:$0xff]
      %v3398 = vld [vmem:[%s3392 + $0x28] sm:$0xff]
      %v3399 = vld [vmem:[%s3392 + $0x30] sm:$0xff]
      %v3400 = vld [vmem:[%s3392 + $0x38] sm:$0xff]
      %v3401 = vld [vmem:[%s3392 + $0x40] sm:$0xff]
      %v3402 = vld [vmem:[%s3392 + $0x48] sm:$0xff]
      %v3403 = vld [vmem:[%s3392 + $0x50] sm:$0xff]
      %v3404 = vld [vmem:[%s3392 + $0x58] sm:$0xff]
      %v3405 = vld [vmem:[%s3392 + $0x60] sm:$0xff]
      %v3406 = vld [vmem:[%s3392 + $0x68] sm:$0xff]
      %v3407 = vld [vmem:[%s3392 + $0x70] sm:$0xff]
      %v3408 = vld [vmem:[%s3392 + $0x78] sm:$0xff]
      %3409 = vmatprep.subr.mxu0 0.0
      %3410 = vmatpush1.msra.mxu0 %v3408
      %3411 = vmatprep.subr.mxu0 0.0
      %3412 = vmatpush1.msra.mxu0 %v3407
      %3413 = vmatprep.subr.mxu0 0.0
      %3414 = vmatpush1.msra.mxu0 %v3406
      %3415 = vmatprep.subr.mxu0 0.0
      %3416 = vmatpush1.msra.mxu0 %v3405
      %3417 = vmatprep.subr.mxu0 0.0
      %3418 = vmatpush1.msra.mxu0 %v3404
      %3419 = vmatprep.subr.mxu0 0.0
      %3420 = vmatpush1.msra.mxu0 %v3403
      %3421 = vmatprep.subr.mxu0 0.0
      %3422 = vmatpush1.msra.mxu0 %v3402
      %3423 = vmatprep.subr.mxu0 0.0
      %3424 = vmatpush1.msra.mxu0 %v3401
      %3425 = vmatprep.subr.mxu0 0.0
      %3426 = vmatpush1.msra.mxu0 %v3400
      %3427 = vmatprep.subr.mxu0 0.0
      %3428 = vmatpush1.msra.mxu0 %v3399
      %3429 = vmatprep.subr.mxu0 0.0
      %3430 = vmatpush1.msra.mxu0 %v3398
      %3431 = vmatprep.subr.mxu0 0.0
      %3432 = vmatpush1.msra.mxu0 %v3397
      %3433 = vmatprep.subr.mxu0 0.0
      %3434 = vmatpush1.msra.mxu0 %v3396
      %3435 = vmatprep.subr.mxu0 0.0
      %3436 = vmatpush1.msra.mxu0 %v3395
      %3437 = vmatprep.subr.mxu0 0.0
      %3438 = vmatpush1.msra.mxu0 %v3394
      %3439 = vmatprep.subr.mxu0 0.0
      %3440 = vmatpush1.msra.mxu0 %v3393
      %3441 = vmatprep.subr.mxu0 0.0
      %3442 = vmatpush2.msra.mxu0 0.0
      %3443 = vmatprep.subr.mxu0 0.0
      %3444 = vmatpush2.msra.mxu0 0.0
      %3445 = vmatprep.subr.mxu0 0.0
      %3446 = vmatpush2.msra.mxu0 0.0
      %3447 = vmatprep.subr.mxu0 0.0
      %3448 = vmatpush2.msra.mxu0 0.0
      %3449 = vmatprep.subr.mxu0 0.0
      %3450 = vmatpush2.msra.mxu0 0.0
      %3451 = vmatprep.subr.mxu0 0.0
      %3452 = vmatpush2.msra.mxu0 0.0
      %3453 = vmatprep.subr.mxu0 0.0
      %3454 = vmatpush2.msra.mxu0 0.0
      %3455 = vmatprep.subr.mxu0 0.0
      %3456 = vmatpush2.msra.mxu0 0.0
      %3457 = vmatprep.subr.mxu0 0.0
      %3458 = vmatpush2.msra.mxu0 0.0
      %3459 = vmatprep.subr.mxu0 0.0
      %3460 = vmatpush2.msra.mxu0 0.0
      %3461 = vmatprep.subr.mxu0 0.0
      %3462 = vmatpush2.msra.mxu0 0.0
      %3463 = vmatprep.subr.mxu0 0.0
      %3464 = vmatpush2.msra.mxu0 0.0
      %3465 = vmatprep.subr.mxu0 0.0
      %3466 = vmatpush2.msra.mxu0 0.0
      %3467 = vmatprep.subr.mxu0 0.0
      %3468 = vmatpush2.msra.mxu0 0.0
      %3469 = vmatprep.subr.mxu0 0.0
      %3470 = vmatpush2.msra.mxu0 0.0
      %3471 = vmatprep.subr.mxu0 0.0
      %3472 = vmatpush2.msra.mxu0 0.0
      %3473 = vmatprep.mubr.f32.mxu0 0.0
      %3474 = vmatmul.mubr.f32.gmra.mxu0 %v1614
      %v3475 = vpop.f32.mrf.mxu0
      %v3476 = vadd.f32 0.0, %v3475
      %v3477 = vpop.f32.mrf.mxu0
      %3478 = vmatprep.mubr.f32.mxu0 0.0
      %3479 = vmatmul.mubr.f32.gmra.mxu0 %v1616
      %v3480 = vpop.f32.mrf.mxu0
      %v3481 = vadd.f32 0.0, %v3480
      %v3482 = vpop.f32.mrf.mxu0
      %3483 = vmatprep.mubr.f32.mxu0 0.0
      %3484 = vmatmul.mubr.f32.gmra.mxu0 %v1619
      %v3485 = vpop.f32.mrf.mxu0
      %v3486 = vadd.f32 0.0, %v3485
      %v3487 = vpop.f32.mrf.mxu0
      %3488 = vmatprep.mubr.f32.mxu0 0.0
      %3489 = vmatmul.mubr.f32.gmra.mxu0 %v1621
      %v3490 = vpop.f32.mrf.mxu0
      %v3491 = vadd.f32 0.0, %v3490
      %v3492 = vpop.f32.mrf.mxu0
      %3493 = vmatprep.mubr.f32.mxu0 0.0
      %3494 = vmatmul.mubr.f32.gmra.mxu0 %v1624
      %v3495 = vpop.f32.mrf.mxu0
      %v3496 = vadd.f32 0.0, %v3495
      %v3497 = vpop.f32.mrf.mxu0
      %3498 = vmatprep.mubr.f32.mxu0 0.0
      %3499 = vmatmul.mubr.f32.gmra.mxu0 %v1626
      %v3500 = vpop.f32.mrf.mxu0
      %v3501 = vadd.f32 0.0, %v3500
      %v3502 = vpop.f32.mrf.mxu0
      %3503 = vmatprep.mubr.f32.mxu0 0.0
      %3504 = vmatmul.mubr.f32.gmra.mxu0 %v1629
      %v3505 = vpop.f32.mrf.mxu0
      %v3506 = vadd.f32 0.0, %v3505
      %v3507 = vpop.f32.mrf.mxu0
      %3508 = vmatprep.mubr.f32.mxu0 0.0
      %3509 = vmatmul.mubr.f32.gmra.mxu0 %v1631
      %v3510 = vpop.f32.mrf.mxu0
      %v3511 = vadd.f32 0.0, %v3510
      %v3512 = vpop.f32.mrf.mxu0
      %3513 = vmatprep.mubr.f32.mxu0 0.0
      %3514 = vmatmul.mubr.f32.gmra.mxu0 %v1634
      %v3515 = vpop.f32.mrf.mxu0
      %v3516 = vadd.f32 0.0, %v3515
      %v3517 = vpop.f32.mrf.mxu0
      %3518 = vmatprep.mubr.f32.mxu0 0.0
      %3519 = vmatmul.mubr.f32.gmra.mxu0 %v1636
      %v3520 = vpop.f32.mrf.mxu0
      %v3521 = vadd.f32 0.0, %v3520
      %v3522 = vpop.f32.mrf.mxu0
      %3523 = vmatprep.mubr.f32.mxu0 0.0
      %3524 = vmatmul.mubr.f32.gmra.mxu0 %v1639
      %v3525 = vpop.f32.mrf.mxu0
      %v3526 = vadd.f32 0.0, %v3525
      %v3527 = vpop.f32.mrf.mxu0
      %3528 = vmatprep.mubr.f32.mxu0 0.0
      %3529 = vmatmul.mubr.f32.gmra.mxu0 %v1641
      %v3530 = vpop.f32.mrf.mxu0
      %v3531 = vadd.f32 0.0, %v3530
      %v3532 = vpop.f32.mrf.mxu0
      %3533 = vmatprep.mubr.f32.mxu0 0.0
      %3534 = vmatmul.mubr.f32.gmra.mxu0 %v1644
      %v3535 = vpop.f32.mrf.mxu0
      %v3536 = vadd.f32 0.0, %v3535
      %v3537 = vpop.f32.mrf.mxu0
      %3538 = vmatprep.mubr.f32.mxu0 0.0
      %3539 = vmatmul.mubr.f32.gmra.mxu0 %v1646
      %v3540 = vpop.f32.mrf.mxu0
      %v3541 = vadd.f32 0.0, %v3540
      %v3542 = vpop.f32.mrf.mxu0
      %3543 = vmatprep.mubr.f32.mxu0 0.0
      %3544 = vmatmul.mubr.f32.gmra.mxu0 %v1649
      %v3545 = vpop.f32.mrf.mxu0
      %v3546 = vadd.f32 0.0, %v3545
      %v3547 = vpop.f32.mrf.mxu0
      %3548 = vmatprep.mubr.f32.mxu0 0.0
      %3549 = vmatmul.mubr.f32.gmra.mxu0 %v1651
      %v3550 = vpop.f32.mrf.mxu0
      %v3551 = vadd.f32 0.0, %v3550
      %v3552 = vpop.f32.mrf.mxu0
      %3553 = vmatprep.mubr.f32.mxu0 0.0
      %3554 = vmatmul.mubr.f32.gmra.mxu0 %v1654
      %v3555 = vpop.f32.mrf.mxu0
      %v3556 = vadd.f32 0.0, %v3555
      %v3557 = vpop.f32.mrf.mxu0
      %3558 = vmatprep.mubr.f32.mxu0 0.0
      %3559 = vmatmul.mubr.f32.gmra.mxu0 %v1656
      %v3560 = vpop.f32.mrf.mxu0
      %v3561 = vadd.f32 0.0, %v3560
      %v3562 = vpop.f32.mrf.mxu0
      %3563 = vmatprep.mubr.f32.mxu0 0.0
      %3564 = vmatmul.mubr.f32.gmra.mxu0 %v1659
      %v3565 = vpop.f32.mrf.mxu0
      %v3566 = vadd.f32 0.0, %v3565
      %v3567 = vpop.f32.mrf.mxu0
      %3568 = vmatprep.mubr.f32.mxu0 0.0
      %3569 = vmatmul.mubr.f32.gmra.mxu0 %v1661
      %v3570 = vpop.f32.mrf.mxu0
      %v3571 = vadd.f32 0.0, %v3570
      %v3572 = vpop.f32.mrf.mxu0
      %3573 = vmatprep.mubr.f32.mxu0 0.0
      %3574 = vmatmul.mubr.f32.gmra.mxu0 %v1664
      %v3575 = vpop.f32.mrf.mxu0
      %v3576 = vadd.f32 0.0, %v3575
      %v3577 = vpop.f32.mrf.mxu0
      %3578 = vmatprep.mubr.f32.mxu0 0.0
      %3579 = vmatmul.mubr.f32.gmra.mxu0 %v1666
      %v3580 = vpop.f32.mrf.mxu0
      %v3581 = vadd.f32 0.0, %v3580
      %v3582 = vpop.f32.mrf.mxu0
      %3583 = vmatprep.mubr.f32.mxu0 0.0
      %3584 = vmatmul.mubr.f32.gmra.mxu0 %v1669
      %v3585 = vpop.f32.mrf.mxu0
      %v3586 = vadd.f32 0.0, %v3585
      %v3587 = vpop.f32.mrf.mxu0
      %3588 = vmatprep.mubr.f32.mxu0 0.0
      %3589 = vmatmul.mubr.f32.gmra.mxu0 %v1671
      %v3590 = vpop.f32.mrf.mxu0
      %v3591 = vadd.f32 0.0, %v3590
      %v3592 = vpop.f32.mrf.mxu0
      %3593 = vmatprep.mubr.f32.mxu0 0.0
      %3594 = vmatmul.mubr.f32.gmra.mxu0 %v1674
      %v3595 = vpop.f32.mrf.mxu0
      %v3596 = vadd.f32 0.0, %v3595
      %v3597 = vpop.f32.mrf.mxu0
      %3598 = vmatprep.mubr.f32.mxu0 0.0
      %3599 = vmatmul.mubr.f32.gmra.mxu0 %v1676
      %v3600 = vpop.f32.mrf.mxu0
      %v3601 = vadd.f32 0.0, %v3600
      %v3602 = vpop.f32.mrf.mxu0
      %3603 = vmatprep.mubr.f32.mxu0 0.0
      %3604 = vmatmul.mubr.f32.gmra.mxu0 %v1679
      %v3605 = vpop.f32.mrf.mxu0
      %v3606 = vadd.f32 0.0, %v3605
      %v3607 = vpop.f32.mrf.mxu0
      %3608 = vmatprep.mubr.f32.mxu0 0.0
      %3609 = vmatmul.mubr.f32.gmra.mxu0 %v1681
      %v3610 = vpop.f32.mrf.mxu0
      %v3611 = vadd.f32 0.0, %v3610
      %v3612 = vpop.f32.mrf.mxu0
      %3613 = vmatprep.mubr.f32.mxu0 0.0
      %3614 = vmatmul.mubr.f32.gmra.mxu0 %v2548
      %v3615 = vpop.f32.mrf.mxu0
      %v3616 = vadd.f32 0.0, %v3615
      %v3617 = vpop.f32.mrf.mxu0
      %3618 = vmatprep.mubr.f32.mxu0 0.0
      %3619 = vmatmul.mubr.f32.gmra.mxu0 %v2550
      %v3620 = vpop.f32.mrf.mxu0
      %v3621 = vadd.f32 0.0, %v3620
      %v3622 = vpop.f32.mrf.mxu0
      %3623 = vmatprep.mubr.f32.mxu0 0.0
      %3624 = vmatmul.mubr.f32.gmra.mxu0 %v3387
      %v3625 = vpop.f32.mrf.mxu0
      %v3626 = vadd.f32 0.0, %v3625
      %v3627 = vpop.f32.mrf.mxu0
      %3628 = vmatprep.mubr.f32.mxu0 0.0
      %3629 = vmatmul.mubr.f32.gmra.mxu0 %v3389
      %v3630 = vpop.f32.mrf.mxu0
      %v3631 = vadd.f32 0.0, %v3630
      %v3632 = vpop.f32.mrf.mxu0
      %3633 = vdwg.mxu0
      %v3634 = vadd.f32 %v3353, %v3476
      %v3635 = vadd.f32 %v3354, %v3481
      %v3636 = vadd.f32 %v3355, %v3486
      %v3637 = vadd.f32 %v3356, %v3491
      %v3638 = vadd.f32 %v3357, %v3496
      %v3639 = vadd.f32 %v3358, %v3501
      %v3640 = vadd.f32 %v3359, %v3506
      %v3641 = vadd.f32 %v3360, %v3511
      %v3642 = vadd.f32 %v3361, %v3516
      %v3643 = vadd.f32 %v3362, %v3521
      %v3644 = vadd.f32 %v3363, %v3526
      %v3645 = vadd.f32 %v3364, %v3531
      %v3646 = vadd.f32 %v3365, %v3536
      %v3647 = vadd.f32 %v3366, %v3541
      %v3648 = vadd.f32 %v3367, %v3546
      %v3649 = vadd.f32 %v3368, %v3551
      %v3650 = vadd.f32 %v3369, %v3556
      %v3651 = vadd.f32 %v3370, %v3561
      %v3652 = vadd.f32 %v3371, %v3566
      %v3653 = vadd.f32 %v3372, %v3571
      %v3654 = vadd.f32 %v3373, %v3576
      %v3655 = vadd.f32 %v3374, %v3581
      %v3656 = vadd.f32 %v3375, %v3586
      %v3657 = vadd.f32 %v3376, %v3591
      %v3658 = vadd.f32 %v3377, %v3596
      %v3659 = vadd.f32 %v3378, %v3601
      %v3660 = vadd.f32 %v3379, %v3606
      %v3661 = vadd.f32 %v3380, %v3611
      %v3662 = vadd.f32 %v3381, %v3616
      %v3663 = vadd.f32 %v3382, %v3621
      %v3664 = vadd.f32 %v3383, %v3626
      %v3665 = vadd.f32 %v3384, %v3631
      %3666 = vst [vmem:[%s336] sm:$0xff] %v3634
      %3667 = vst [vmem:[%s336 + $0x8] sm:$0xff] %v3635
      %3668 = vst [vmem:[%s336 + $0x10] sm:$0xff] %v3636
      %3669 = vst [vmem:[%s336 + $0x18] sm:$0xff] %v3637
      %3670 = vst [vmem:[%s336 + $0x20] sm:$0xff] %v3638
      %3671 = vst [vmem:[%s336 + $0x28] sm:$0xff] %v3639
      %3672 = vst [vmem:[%s336 + $0x30] sm:$0xff] %v3640
      %3673 = vst [vmem:[%s336 + $0x38] sm:$0xff] %v3641
      %3674 = vst [vmem:[%s336 + $0x40] sm:$0xff] %v3642
      %3675 = vst [vmem:[%s336 + $0x48] sm:$0xff] %v3643
      %3676 = vst [vmem:[%s336 + $0x50] sm:$0xff] %v3644
      %3677 = vst [vmem:[%s336 + $0x58] sm:$0xff] %v3645
      %3678 = vst [vmem:[%s336 + $0x60] sm:$0xff] %v3646
      %3679 = vst [vmem:[%s336 + $0x68] sm:$0xff] %v3647
      %3680 = vst [vmem:[%s336 + $0x70] sm:$0xff] %v3648
      %3681 = vst [vmem:[%s336 + $0x78] sm:$0xff] %v3649
      %3682 = vst [vmem:[%s336 + $0x80] sm:$0xff] %v3650
      %3683 = vst [vmem:[%s336 + $0x88] sm:$0xff] %v3651
      %3684 = vst [vmem:[%s336 + $0x90] sm:$0xff] %v3652
      %3685 = vst [vmem:[%s336 + $0x98] sm:$0xff] %v3653
      %3686 = vst [vmem:[%s336 + $0xa0] sm:$0xff] %v3654
      %3687 = vst [vmem:[%s336 + $0xa8] sm:$0xff] %v3655
      %3688 = vst [vmem:[%s336 + $0xb0] sm:$0xff] %v3656
      %3689 = vst [vmem:[%s336 + $0xb8] sm:$0xff] %v3657
      %3690 = vst [vmem:[%s336 + $0xc0] sm:$0xff] %v3658
      %3691 = vst [vmem:[%s336 + $0xc8] sm:$0xff] %v3659
      %3692 = vst [vmem:[%s336 + $0xd0] sm:$0xff] %v3660
      %3693 = vst [vmem:[%s336 + $0xd8] sm:$0xff] %v3661
      %3694 = vst [vmem:[%s336 + $0xe0] sm:$0xff] %v3662
      %3695 = vst [vmem:[%s336 + $0xe8] sm:$0xff] %v3663
      %3696 = vst [vmem:[%s336 + $0xf0] sm:$0xff] %v3664
      %3697 = vst [vmem:[%s336 + $0xf8] sm:$0xff] %v3665
      %v3698 = vadd.f32 %v3634, %v3635
      %v3699 = vadd.f32 %v3698, %v3636
      %v3700 = vadd.f32 %v3699, %v3637
      %v3701 = vadd.f32 %v3700, %v3638
      %v3702 = vadd.f32 %v3701, %v3639
      %v3703 = vadd.f32 %v3702, %v3640
      %v3704 = vadd.f32 %v3703, %v3641
      %v3705 = vadd.f32 %v3704, %v3642
      %v3706 = vadd.f32 %v3705, %v3643
      %v3707 = vadd.f32 %v3706, %v3644
      %v3708 = vadd.f32 %v3707, %v3645
      %v3709 = vadd.f32 %v3708, %v3646
      %v3710 = vadd.f32 %v3709, %v3647
      %v3711 = vadd.f32 %v3710, %v3648
      %v3712 = vadd.f32 %v3711, %v3649
      %v3713 = vadd.f32 %v3712, %v3650
      %v3714 = vadd.f32 %v3713, %v3651
      %v3715 = vadd.f32 %v3714, %v3652
      %v3716 = vadd.f32 %v3715, %v3653
      %v3717 = vadd.f32 %v3716, %v3654
      %v3718 = vadd.f32 %v3717, %v3655
      %v3719 = vadd.f32 %v3718, %v3656
      %v3720 = vadd.f32 %v3719, %v3657
      %v3721 = vadd.f32 %v3720, %v3658
      %v3722 = vadd.f32 %v3721, %v3659
      %v3723 = vadd.f32 %v3722, %v3660
      %v3724 = vadd.f32 %v3723, %v3661
      %v3725 = vadd.f32 %v3724, %v3662
      %v3726 = vadd.f32 %v3725, %v3663
      %v3727 = vadd.f32 %v3726, %v3664
      %v3728 = vadd.f32 %v3727, %v3665
      %v3729 = vrot.slane %v3728, 4
      %v3730 = vadd.f32 %v3728, %v3729
      %v3731 = vrot.slane %v3730, 2
      %v3732 = vadd.f32 %v3730, %v3731
      %v3733 = vrot.slane %v3732, 1
      %v3734 = vadd.f32 %v3732, %v3733
      %v3735 = vmul.f32 %v3634, %v3634
      %v3736 = vmul.f32 %v3635, %v3635
      %v3737 = vmul.f32 %v3636, %v3636
      %v3738 = vmul.f32 %v3637, %v3637
      %v3739 = vmul.f32 %v3638, %v3638
      %v3740 = vmul.f32 %v3639, %v3639
      %v3741 = vmul.f32 %v3640, %v3640
      %v3742 = vmul.f32 %v3641, %v3641
      %v3743 = vmul.f32 %v3642, %v3642
      %v3744 = vmul.f32 %v3643, %v3643
      %v3745 = vmul.f32 %v3644, %v3644
      %v3746 = vmul.f32 %v3645, %v3645
      %v3747 = vmul.f32 %v3646, %v3646
      %v3748 = vmul.f32 %v3647, %v3647
      %v3749 = vmul.f32 %v3648, %v3648
      %v3750 = vmul.f32 %v3649, %v3649
      %v3751 = vmul.f32 %v3650, %v3650
      %v3752 = vmul.f32 %v3651, %v3651
      %v3753 = vmul.f32 %v3652, %v3652
      %v3754 = vmul.f32 %v3653, %v3653
      %v3755 = vmul.f32 %v3654, %v3654
      %v3756 = vmul.f32 %v3655, %v3655
      %v3757 = vmul.f32 %v3656, %v3656
      %v3758 = vmul.f32 %v3657, %v3657
      %v3759 = vmul.f32 %v3658, %v3658
      %v3760 = vmul.f32 %v3659, %v3659
      %v3761 = vmul.f32 %v3660, %v3660
      %v3762 = vmul.f32 %v3661, %v3661
      %v3763 = vmul.f32 %v3662, %v3662
      %v3764 = vmul.f32 %v3663, %v3663
      %v3765 = vmul.f32 %v3664, %v3664
      %v3766 = vmul.f32 %v3665, %v3665
      %v3767 = vadd.f32 %v3735, %v3736
      %v3768 = vadd.f32 %v3767, %v3737
      %v3769 = vadd.f32 %v3768, %v3738
      %v3770 = vadd.f32 %v3769, %v3739
      %v3771 = vadd.f32 %v3770, %v3740
      %v3772 = vadd.f32 %v3771, %v3741
      %v3773 = vadd.f32 %v3772, %v3742
      %v3774 = vadd.f32 %v3773, %v3743
      %v3775 = vadd.f32 %v3774, %v3744
      %v3776 = vadd.f32 %v3775, %v3745
      %v3777 = vadd.f32 %v3776, %v3746
      %v3778 = vadd.f32 %v3777, %v3747
      %v3779 = vadd.f32 %v3778, %v3748
      %v3780 = vadd.f32 %v3779, %v3749
      %v3781 = vadd.f32 %v3780, %v3750
      %v3782 = vadd.f32 %v3781, %v3751
      %v3783 = vadd.f32 %v3782, %v3752
      %v3784 = vadd.f32 %v3783, %v3753
      %v3785 = vadd.f32 %v3784, %v3754
      %v3786 = vadd.f32 %v3785, %v3755
      %v3787 = vadd.f32 %v3786, %v3756
      %v3788 = vadd.f32 %v3787, %v3757
      %v3789 = vadd.f32 %v3788, %v3758
      %v3790 = vadd.f32 %v3789, %v3759
      %v3791 = vadd.f32 %v3790, %v3760
      %v3792 = vadd.f32 %v3791, %v3761
      %v3793 = vadd.f32 %v3792, %v3762
      %v3794 = vadd.f32 %v3793, %v3763
      %v3795 = vadd.f32 %v3794, %v3764
      %v3796 = vadd.f32 %v3795, %v3765
      %v3797 = vadd.f32 %v3796, %v3766
      %v3798 = vrot.slane %v3797, 4
      %v3799 = vadd.f32 %v3797, %v3798
      %v3800 = vrot.slane %v3799, 2
      %v3801 = vadd.f32 %v3799, %v3800
      %v3802 = vrot.slane %v3801, 1
      %v3803 = vadd.f32 %v3801, %v3802
      %3804 = vst [vmem:[%s342] sm:$0x1] %v3734
      %3805 = vst [vmem:[%s348] sm:$0x1] %v3803
      %p3806 = scmp.lt.s32.totalorder %s24, 1
      %s3807 = scalar_select %p3806, %s24, 1
      %p3808 = scmp.lt.s32.totalorder %s23, 0
      %s3809 = scalar_select %p3808, %s23, 0
      %s3810 = smul.addr %s3807, 32
      %s3811 = sadd.s32 %s3809, %s3810
      %s3812 = smul.addr %s3811, 8
      %s3813 = scalar_lea.vmem %s5, %s3812
      %p3814 = scmp.lt.s32.totalorder %s24, 1
      %s3815 = scalar_select %p3814, %s24, 1
      %p3816 = scmp.lt.s32.totalorder %s23, 0
      %s3817 = scalar_select %p3816, %s23, 0
      %s3818 = sadd.s32 %s3817, %s3815
      %s3819 = scalar_lea.vmem %s6, %s3818
      %p3820 = scmp.lt.s32.totalorder %s24, 1
      %s3821 = scalar_select %p3820, %s24, 1
      %p3822 = scmp.lt.s32.totalorder %s23, 0
      %s3823 = scalar_select %p3822, %s23, 0
      %s3824 = sadd.s32 %s3823, %s3821
      %s3825 = scalar_lea.vmem %s7, %s3824
      // Predicated region
      $region41: #{residual_forward.4} parent=39 // pred_check
        %p3826 = pneg %p166
      $region42: #{residual_forward.4} parent=39 // pred_check_branch
        %3828 = sbr.rel (%p3826) target = $region44
      $region43: #{residual_forward.4} parent=39 // pred_region
        _
      $region44: #{residual_forward.4} parent=39 // pred_fallthru
        _
      // Predicated region
      $region45: #{residual_forward.4} parent=39 // pred_check
        %p3829 = pneg %p194
      $region46: #{residual_forward.4} parent=39 // pred_check_branch
        %3831 = sbr.rel (%p3829) target = $region48
      $region47: #{residual_forward.4} parent=39 // pred_region
        _
      $region48: #{residual_forward.4} parent=39 // pred_fallthru
        _
      // Predicated region
      $region49: #{residual_forward.4} parent=39 // pred_check
        %p3832 = pneg %p222
      $region50: #{residual_forward.4} parent=39 // pred_check_branch
        %3834 = sbr.rel (%p3832) target = $region52
      $region51: #{residual_forward.4} parent=39 // pred_region
        _
      $region52: #{residual_forward.4} parent=39 // pred_fallthru
        _
    $region40: #{residual_forward.4} parent=5 // pred_fallthru
      _
    %p3835 = scmp.le.s32.totalorder 2, %s14
    // Predicated region
    $region53: #{residual_forward.4} parent=5 // pred_check
      %p3836 = pneg %p3835
    $region54: #{residual_forward.4} parent=5 // pred_check_branch
      %3838 = sbr.rel (%p3836) target = $region56
    $region55: #{residual_forward.4} parent=5 // pred_region
      %s3839 = ssub.s32 %s14, 2
      // Predicated region
      $region57: #{residual_forward.4} parent=55 // pred_check
        %p3840 = pneg %p172
      $region58: #{residual_forward.4} parent=55 // pred_check_branch
        %3842 = sbr.rel (%p3840) target = $region60
      $region59: #{residual_forward.4} parent=55 // pred_region
        %p3843 = scmp.lt.s32.totalorder %s26, 1
        %s3844 = scalar_select %p3843, %s26, 1
        %p3845 = scmp.lt.s32.totalorder %s25, 0
        %s3846 = scalar_select %p3845, %s25, 0
        %s3847 = smul.addr %s3844, 32
        %s3848 = sadd.s32 %s3846, %s3847
        %s3849 = smul.addr %s3848, 8
        %s3850 = scalar_lea.vmem %s5, %s3849
      $region60: #{residual_forward.4} parent=55 // pred_fallthru
        _
      // Predicated region
      $region61: #{residual_forward.4} parent=55 // pred_check
        %p3851 = pneg %p200
      $region62: #{residual_forward.4} parent=55 // pred_check_branch
        %3853 = sbr.rel (%p3851) target = $region64
      $region63: #{residual_forward.4} parent=55 // pred_region
        %p3854 = scmp.lt.s32.totalorder %s26, 1
        %s3855 = scalar_select %p3854, %s26, 1
        %p3856 = scmp.lt.s32.totalorder %s25, 0
        %s3857 = scalar_select %p3856, %s25, 0
        %s3858 = sadd.s32 %s3857, %s3855
        %s3859 = scalar_lea.vmem %s6, %s3858
      $region64: #{residual_forward.4} parent=55 // pred_fallthru
        _
      // Predicated region
      $region65: #{residual_forward.4} parent=55 // pred_check
        %p3860 = pneg %p228
      $region66: #{residual_forward.4} parent=55 // pred_check_branch
        %3862 = sbr.rel (%p3860) target = $region68
      $region67: #{residual_forward.4} parent=55 // pred_region
        %p3863 = scmp.lt.s32.totalorder %s26, 1
        %s3864 = scalar_select %p3863, %s26, 1
        %p3865 = scmp.lt.s32.totalorder %s25, 0
        %s3866 = scalar_select %p3865, %s25, 0
        %s3867 = sadd.s32 %s3866, %s3864
        %s3868 = scalar_lea.vmem %s7, %s3867
      $region68: #{residual_forward.4} parent=55 // pred_fallthru
        _
    $region56: #{residual_forward.4} parent=5 // pred_fallthru
      _
  $region6: #{residual_forward.4} parent=0 // loop_footer
    %s18 = sadd.s32 1, %s14
  $region7: #{residual_forward.4} parent=0 // loop_footer_branch
    %13 = sbr.rel target = $region3
  $region8: #{residual_forward.4} parent=0 // loop_exit
    _

</llo_original>
